<compile_context>
chip_gen: v5e
topology: v5e:2x2
jax: 0.10.0
libtpu: 0.0.40
codegen_flags: <defaults>
</compile_context>

<pallas_src>
import functools

import jax
import jax.numpy as jnp
from jax.experimental import pallas as pl
from jax.experimental.pallas import tpu as pltpu


# ----------------------------------------------------------------------------
# Kernel core
# ----------------------------------------------------------------------------
def _encoder_layer_core(x, x_t, mask, wqkv_t_ref, bqkv_t_ref, g1_ref, be1_ref,
                        w1_ref, b1_ref, w2_ref, b2_ref, g2_ref, be2_ref,
                        out_ref, attn_ref, *, num_heads, d_head, eps,
                        mxu_dtype, exact_softmax):
    """x: (T, D) f32 residual input; x_t: (D, T) mxu_dtype; mask: (T, T) bool
    (True == masked key position)."""
    seq_len, d_model = x.shape

    # --- fused QKV projection, computed transposed: (3D, T) ------------------
    # 1/sqrt(d_head) is already folded into the Q rows of wqkv_t / bqkv_t.
    qkv_t = jnp.dot(wqkv_t_ref[...], x_t,
                    preferred_element_type=jnp.float32)        # (3D, T) f32
    qkv_t = qkv_t + bqkv_t_ref[...]                            # (3D, 1) broadcast

    def head_rows(proj, h):                                    # static sublane slice
        start = proj * d_model + h * d_head
        return qkv_t[start:start + d_head, :]                  # (d_head, T)

    # Q needs (H, T, d_head) for the canonical NN scores matmul; K/V stay as
    # (H, d_head, T) sublane views (no transposes).
    q = jnp.stack([head_rows(0, h).T for h in range(num_heads)],
                  axis=0).astype(mxu_dtype)                    # (H, T, dh)
    k_t = jnp.stack([head_rows(1, h) for h in range(num_heads)],
                    axis=0).astype(mxu_dtype)                  # (H, dh, T)
    v_t = jnp.stack([head_rows(2, h) for h in range(num_heads)],
                    axis=0).astype(mxu_dtype)                  # (H, dh, T)

    # --- scaled dot-product attention (all heads batched on the MXU) ---------
    scores = jnp.einsum('hqd,hdk->hqk', q, k_t,
                        preferred_element_type=jnp.float32)    # (H, T, T) f32
    scores = jnp.where(mask[None, :, :], jnp.float32(-1e9), scores)
    scores = scores - jnp.max(scores, axis=-1, keepdims=True)
    p = jnp.exp(scores)
    denom = jnp.sum(p, axis=-1, keepdims=True)
    if exact_softmax:                       # static: exact division (f32 path)
        p = p / denom
    else:                                   # EUP approx reciprocal (bf16 path)
        p = p * pl.reciprocal(denom, approx=True)
    if attn_ref is not None:
        attn_ref[...] = p[:, None].astype(attn_ref.dtype)

    # context computed transposed: ctx_t[h, d, q] = sum_k v_t[h, d, k] * p[h, q, k]
    ctx_t = jnp.einsum('hdk,hqk->hdq', v_t, p.astype(mxu_dtype),
                       preferred_element_type=jnp.float32)     # (H, dh, T)
    ctx = jnp.concatenate([ctx_t[h] for h in range(num_heads)], axis=0).T  # (T, D)

    # --- AddNorm 1 (LayerNorm, eps=1e-5, biased variance, f32 stats) ---------
    h1 = ctx + x
    mu1 = jnp.mean(h1, axis=-1, keepdims=True)
    var1 = jnp.mean(jnp.square(h1 - mu1), axis=-1, keepdims=True)
    h1n = (h1 - mu1) * jax.lax.rsqrt(var1 + eps) * g1_ref[...] + be1_ref[...]

    # --- PositionWiseFeedForwardNet ('ff'): Linear -> Dropout(id) -> ReLU
    #     -> Linear -> Dropout(id) ---------------------------------------------
    f = jnp.dot(h1n.astype(mxu_dtype), w1_ref[...],
                preferred_element_type=jnp.float32) + b1_ref[...]
    f = jnp.maximum(f, jnp.float32(0.0))
    f = jnp.dot(f.astype(mxu_dtype), w2_ref[...],
                preferred_element_type=jnp.float32) + b2_ref[...]

    # --- AddNorm 2 -------------------------------------------------------------
    h2 = f + h1n
    mu2 = jnp.mean(h2, axis=-1, keepdims=True)
    var2 = jnp.mean(jnp.square(h2 - mu2), axis=-1, keepdims=True)
    out_ref[0] = ((h2 - mu2) * jax.lax.rsqrt(var2 + eps) * g2_ref[...]
                  + be2_ref[...]).astype(out_ref.dtype)


def _encoder_layer_kernel_mask(x_ref, xt_ref, mask_ref, *refs, num_heads,
                               d_head, eps, mxu_dtype, exact_softmax, write_attn):
    # General path: the (1, T, T) int8 mask tile is streamed from HBM.
    w_refs = refs[:10]
    out_ref = refs[10]
    attn_ref = refs[11] if write_attn else None
    _encoder_layer_core(x_ref[0], xt_ref[0], mask_ref[0] != 0, *w_refs,
                        out_ref=out_ref, attn_ref=attn_ref,
                        num_heads=num_heads, d_head=d_head, eps=eps,
                        mxu_dtype=mxu_dtype, exact_softmax=exact_softmax)


def _encoder_layer_kernel_lens(lens_ref, x_ref, xt_ref, *refs, seq_len,
                               num_heads, d_head, eps, mxu_dtype, exact_softmax,
                               write_attn):
    # Fast path: key lengths live in SMEM (scalar prefetch); build the padding
    # mask in-kernel from an iota -> no (B, T, T) mask DMA at all.
    w_refs = refs[:10]
    out_ref = refs[10]
    attn_ref = refs[11] if write_attn else None
    key_pos = jax.lax.broadcasted_iota(jnp.int32, (seq_len, seq_len), 1)
    mask = key_pos >= lens_ref[pl.program_id(0)]
    _encoder_layer_core(x_ref[0], xt_ref[0], mask, *w_refs,
                        out_ref=out_ref, attn_ref=attn_ref,
                        num_heads=num_heads, d_head=d_head, eps=eps,
                        mxu_dtype=mxu_dtype, exact_softmax=exact_softmax)


# ----------------------------------------------------------------------------
# Wrapper
# ----------------------------------------------------------------------------
def _vmem_limit_bytes():
    """Generation-aware scoped-VMEM limit: physical capacity minus ~8 MiB of
    headroom, capped at 112 MiB (=> ~56 MiB on v7x's 64 MiB parts, 112 MiB on
    128 MiB v5e/v6e parts)."""
    cap = 128 * 1024 * 1024
    try:
        cap = int(getattr(pltpu.get_tpu_info(), "vmem_capacity_bytes", cap)) or cap
    except Exception:
        pass
    return int(min(cap - 8 * 1024 * 1024, 112 * 1024 * 1024))


def speech_transformer_encoder_layer(x, self_attn_mask, params, *, num_heads,
                                     key_lens=None, attn_dtype=jnp.float32,
                                     mxu_dtype=jnp.bfloat16, return_attn=True):
    """Fused SpeechTransformerEncoderLayer forward.

    x:              (B, T, D) float32
    self_attn_mask: (B, T, T), nonzero == masked key position (may be None when
                    key_lens is given)
    key_lens:       optional (B,) int32 valid key lengths (padding mask); when
                    given, the mask is generated in-kernel (no mask DMA).
    attn_dtype:     dtype of the returned attention weights (f32 matches the
                    PyTorch module; bf16 halves the dominant HBM writeback).
    return_attn:    False skips the attention-weights output entirely.

    Returns (output (B, T, D) f32, attn (num_heads * B, T, T) attn_dtype) with
    head-major attn flattening (index = h * B + b) like the PyTorch module, or
    just the output when return_attn=False.
    """
    B, T, D = x.shape
    assert D % num_heads == 0
    d_head = D // num_heads
    d_ff = params["w1"].shape[1]
    exact_softmax = jnp.dtype(mxu_dtype) == jnp.dtype(jnp.float32)

    # Pad T up to a multiple of 128: lane-dense attention stores and aligned
    # (T, T) score tiles.  Padded keys are masked; padded query rows are sliced
    # off on the way out.
    t_pad = ((T + 127) // 128) * 128
    pad = t_pad - T
    x_p = jnp.pad(x, ((0, 0), (0, pad), (0, 0))) if pad else x
    # Hoisted transpose: (B, D, T_pad) in the MXU dtype -> no in-kernel x transpose.
    x_t = x_p.astype(mxu_dtype).transpose(0, 2, 1)

    # Fold the three projections into one transposed (3D, D) weight and fold the
    # 1/sqrt(d_head) attention scale into the Q rows/bias.
    scale = 1.0 / float(d_head) ** 0.5
    wqkv_t = jnp.concatenate([params["wq"] * scale, params["wk"], params["wv"]],
                             axis=1).T.astype(mxu_dtype)               # (3D, D)
    bqkv_t = jnp.concatenate([params["bq"] * scale, params["bk"], params["bv"]],
                             axis=1).T.astype(jnp.float32)             # (3D, 1)
    w1 = params["w1"].astype(mxu_dtype)
    w2 = params["w2"].astype(mxu_dtype)

    def rep(shape):   # grid-invariant weight: constant index map, single buffer
        return pl.BlockSpec(shape, lambda *_: (0,) * len(shape),
                            pipeline_mode=pl.Buffered(1))

    x_spec = pl.BlockSpec((1, t_pad, D), lambda b, *_: (b, 0, 0))
    xt_spec = pl.BlockSpec((1, D, t_pad), lambda b, *_: (b, 0, 0))
    weight_specs = [
        rep((3 * D, D)), rep((3 * D, 1)),     # Wqkv^T, bqkv^T
        rep((1, D)), rep((1, D)),             # ln1 gamma, beta
        rep((D, d_ff)), rep((1, d_ff)),       # ff W1, b1
        rep((d_ff, D)), rep((1, D)),          # ff W2, b2
        rep((1, D)), rep((1, D)),             # ln2 gamma, beta
    ]
    weight_args = (wqkv_t, bqkv_t, params["g1"], params["be1"],
                   w1, params["b1"], w2, params["b2"],
                   params["g2"], params["be2"])

    out_spec_x = pl.BlockSpec((1, t_pad, D), lambda b, *_: (b, 0, 0))
    out_shape_x = jax.ShapeDtypeStruct((B, t_pad, D), jnp.float32)
    if return_attn:
        out_specs = [out_spec_x,
                     pl.BlockSpec((num_heads, 1, t_pad, t_pad),
                                  lambda b, *_: (0, b, 0, 0))]
        out_shapes = [out_shape_x,
                      jax.ShapeDtypeStruct((num_heads, B, t_pad, t_pad), attn_dtype)]
    else:
        out_specs = out_spec_x
        out_shapes = out_shape_x

    compiler_params = pltpu.CompilerParams(
        dimension_semantics=("parallel",),       # batch sharded across TCs (v7x)
        vmem_limit_bytes=_vmem_limit_bytes())

    static = dict(num_heads=num_heads, d_head=d_head, eps=1e-5,
                  mxu_dtype=mxu_dtype, exact_softmax=exact_softmax,
                  write_attn=return_attn)

    if key_lens is not None:
        kernel = functools.partial(_encoder_layer_kernel_lens, seq_len=t_pad, **static)
        grid_spec = pltpu.PrefetchScalarGridSpec(
            num_scalar_prefetch=1, grid=(B,),
            in_specs=[x_spec, xt_spec] + weight_specs, out_specs=out_specs)
        args = (key_lens.astype(jnp.int32), x_p, x_t) + weight_args
    else:
        kernel = functools.partial(_encoder_layer_kernel_mask, **static)
        mask_i8 = (self_attn_mask != 0).astype(jnp.int8)
        if pad:
            mask_i8 = jnp.pad(mask_i8, ((0, 0), (0, pad), (0, pad)),
                              constant_values=1)                 # padded keys masked
        mask_spec = pl.BlockSpec((1, t_pad, t_pad), lambda b, *_: (b, 0, 0))
        grid_spec = pltpu.PrefetchScalarGridSpec(
            num_scalar_prefetch=0, grid=(B,),
            in_specs=[x_spec, xt_spec, mask_spec] + weight_specs, out_specs=out_specs)
        args = (x_p, x_t, mask_i8) + weight_args

    res = pl.pallas_call(kernel, grid_spec=grid_spec, out_shape=out_shapes,
                         compiler_params=compiler_params)(*args)

    if return_attn:
        out, attn = res
        out = out[:, :T]
        # PyTorch ordering: (H, B, T, T) -> (H*B, T, T), index = h*B + b
        attn = attn[:, :, :T, :T].reshape(num_heads * B, T, T)
        return out, attn
    return res[:, :T]


# ----------------------------------------------------------------------------
# Params + pure-JAX reference (f32) for validation
# ----------------------------------------------------------------------------
def init_params(key, d_model, d_ff):
    ks = jax.random.split(key, 8)
    s_m = 1.0 / jnp.sqrt(jnp.float32(d_model))
    s_f = 1.0 / jnp.sqrt(jnp.float32(d_ff))
    return {
        "wq": jax.random.normal(ks[0], (d_model, d_model), jnp.float32) * s_m,
        "bq": jnp.zeros((1, d_model), jnp.float32),
        "wk": jax.random.normal(ks[1], (d_model, d_model), jnp.float32) * s_m,
        "bk": jnp.zeros((1, d_model), jnp.float32),
        "wv": jax.random.normal(ks[2], (d_model, d_model), jnp.float32) * s_m,
        "bv": jnp.zeros((1, d_model), jnp.float32),
        "g1": jnp.ones((1, d_model), jnp.float32),
        "be1": jnp.zeros((1, d_model), jnp.float32),
        "w1": jax.random.normal(ks[3], (d_model, d_ff), jnp.float32) * s_m,
        "b1": jax.random.normal(ks[4], (1, d_ff), jnp.float32) * 0.01,
        "w2": jax.random.normal(ks[5], (d_ff, d_model), jnp.float32) * s_f,
        "b2": jax.random.normal(ks[6], (1, d_model), jnp.float32) * 0.01,
        "g2": jnp.ones((1, d_model), jnp.float32),
        "be2": jnp.zeros((1, d_model), jnp.float32),
    }


def _reference_forward(x, mask, params, *, num_heads):
    B, T, D = x.shape
    dh = D // num_heads
    q = x @ params["wq"] + params["bq"]
    k = x @ params["wk"] + params["bk"]
    v = x @ params["wv"] + params["bv"]
    q = q.reshape(B, T, num_heads, dh).transpose(0, 2, 1, 3)
    k = k.reshape(B, T, num_heads, dh).transpose(0, 2, 1, 3)
    v = v.reshape(B, T, num_heads, dh).transpose(0, 2, 1, 3)
    scores = jnp.einsum('bhtd,bhsd->bhts', q, k) / jnp.sqrt(jnp.float32(dh))
    scores = jnp.where(mask[:, None] != 0, jnp.float32(-1e9), scores)
    p = jax.nn.softmax(scores, axis=-1)
    ctx = jnp.einsum('bhts,bhsd->bhtd', p, v)
    ctx = ctx.transpose(0, 2, 1, 3).reshape(B, T, D)

    def ln(h, g, b):
        mu = h.mean(-1, keepdims=True)
        var = jnp.square(h - mu).mean(-1, keepdims=True)
        return (h - mu) * jax.lax.rsqrt(var + 1e-5) * g + b

    h1 = ln(ctx + x, params["g1"], params["be1"])
    f = jnp.maximum(h1 @ params["w1"] + params["b1"], 0.0)
    f = f @ params["w2"] + params["b2"]
    out = ln(f + h1, params["g2"], params["be2"])
    attn = p.transpose(1, 0, 2, 3).reshape(num_heads * B, T, T)
    return out, attn


# ----------------------------------------------------------------------------
# Demo
# ----------------------------------------------------------------------------
if __name__ == "__main__":
    B, T, D, H, D_FF = 2, 8, 32, 4, 128   # small demo shapes; D % H == 0

    root = jax.random.PRNGKey(0)
    k_x, k_p = jax.random.split(root)
    x = jax.random.normal(k_x, (B, T, D), jnp.float32)

    # padding-style mask: batch 0 full length, batch 1 has last 2 keys masked
    key_lens = jnp.array([T, T - 2], dtype=jnp.int32)
    pad_row = (jnp.arange(T)[None, :] >= key_lens[:, None])            # (B, T)
    self_attn_mask = jnp.broadcast_to(pad_row[:, None, :], (B, T, T)).astype(jnp.float32)

    params = init_params(k_p, D, D_FF)

    fn = jax.jit(functools.partial(speech_transformer_encoder_layer, num_heads=H))
    fn_f32 = jax.jit(functools.partial(speech_transformer_encoder_layer,
                                       num_heads=H, mxu_dtype=jnp.float32))
    fn_fast = jax.jit(functools.partial(speech_transformer_encoder_layer,
                                        num_heads=H, return_attn=False))

    out_bf, attn_bf = fn(x, self_attn_mask, params)               # mask path, bf16 MXU
    out_ln, attn_ln = fn(x, None, params, key_lens=key_lens)      # key-length fast path
    out_na = fn_fast(x, None, params, key_lens=key_lens)          # no attn writeback
    out_32, attn_32 = fn_f32(x, self_attn_mask, params)           # f32 MXU, exact softmax
    jax.block_until_ready((out_bf, attn_bf, out_ln, attn_ln, out_na, out_32, attn_32))

    ref_out, ref_attn = _reference_forward(x, self_attn_mask, params, num_heads=H)

    assert out_bf.shape == (B, T, D) and attn_bf.shape == (H * B, T, T)
    # mask path, key-length path and no-attn path compute the same thing
    assert jnp.allclose(out_bf, out_ln, atol=1e-4, rtol=1e-4)
    assert jnp.allclose(attn_bf, attn_ln, atol=1e-4, rtol=1e-4)
    assert jnp.allclose(out_bf, out_na, atol=1e-4, rtol=1e-4)
    # f32-MXU path (exact softmax division) matches the pure-JAX reference
    assert jnp.allclose(out_32, ref_out, atol=2e-2, rtol=2e-2)
    assert jnp.allclose(attn_32, ref_attn, atol=2e-2, rtol=2e-2)
    # default bf16-MXU path is a close approximation of the reference
    assert jnp.allclose(out_bf, ref_out, atol=1e-1, rtol=1e-1)
    print("KERNEL_OK")
</pallas_src>

<mosaic_0001>
module attributes {stable_mosaic.version = 11 : i64} {
  func.func @_encoder_layer_kernel_mask(%arg0: i32, %arg1: memref<1x128x32xf32, #tpu.memory_space<vmem>>, %arg2: memref<1x32x128xbf16, #tpu.memory_space<vmem>>, %arg3: memref<1x128x128xi8, #tpu.memory_space<vmem>>, %arg4: memref<96x32xbf16, #tpu.memory_space<vmem>>, %arg5: memref<96x1xf32, #tpu.memory_space<vmem>>, %arg6: memref<1x32xf32, #tpu.memory_space<vmem>>, %arg7: memref<1x32xf32, #tpu.memory_space<vmem>>, %arg8: memref<32x128xbf16, #tpu.memory_space<vmem>>, %arg9: memref<1x128xf32, #tpu.memory_space<vmem>>, %arg10: memref<128x32xbf16, #tpu.memory_space<vmem>>, %arg11: memref<1x32xf32, #tpu.memory_space<vmem>>, %arg12: memref<1x32xf32, #tpu.memory_space<vmem>>, %arg13: memref<1x32xf32, #tpu.memory_space<vmem>>, %arg14: memref<1x128x32xf32, #tpu.memory_space<vmem>>, %arg15: memref<4x1x128x128xf32, #tpu.memory_space<vmem>>) attributes {dimension_semantics = [#tpu.dimension_semantics<parallel>], iteration_bounds = array<i64: 2>, scalar_prefetch = 0 : i64, scratch_operands = 0 : i64, tpu.core_type = #tpu.core_type<tc>, window_params = [{transform_indices = @transform_0, window_bounds = array<i64: 1, 128, 32>}, {transform_indices = @transform_1, window_bounds = array<i64: 1, 32, 128>}, {transform_indices = @transform_2, window_bounds = array<i64: 1, 128, 128>}, {pipeline_mode = #tpu.pipeline_mode<synchronous>, transform_indices = @transform_3, window_bounds = array<i64: 96, 32>}, {pipeline_mode = #tpu.pipeline_mode<synchronous>, transform_indices = @transform_4, window_bounds = array<i64: 96, 1>}, {pipeline_mode = #tpu.pipeline_mode<synchronous>, transform_indices = @transform_5, window_bounds = array<i64: 1, 32>}, {pipeline_mode = #tpu.pipeline_mode<synchronous>, transform_indices = @transform_6, window_bounds = array<i64: 1, 32>}, {pipeline_mode = #tpu.pipeline_mode<synchronous>, transform_indices = @transform_7, window_bounds = array<i64: 32, 128>}, {pipeline_mode = #tpu.pipeline_mode<synchronous>, transform_indices = @transform_8, window_bounds = array<i64: 1, 128>}, {pipeline_mode = #tpu.pipeline_mode<synchronous>, transform_indices = @transform_9, window_bounds = array<i64: 128, 32>}, {pipeline_mode = #tpu.pipeline_mode<synchronous>, transform_indices = @transform_10, window_bounds = array<i64: 1, 32>}, {pipeline_mode = #tpu.pipeline_mode<synchronous>, transform_indices = @transform_11, window_bounds = array<i64: 1, 32>}, {pipeline_mode = #tpu.pipeline_mode<synchronous>, transform_indices = @transform_12, window_bounds = array<i64: 1, 32>}, {transform_indices = @transform_13, window_bounds = array<i64: 1, 128, 32>}, {transform_indices = @transform_14, window_bounds = array<i64: 4, 1, 128, 128>}]} {
    %c0 = arith.constant 0 : index
    %c0_0 = arith.constant 0 : index
    %c0_1 = arith.constant 0 : index
    %0 = vector.load %arg1[%c0, %c0_0, %c0_1] : memref<1x128x32xf32, #tpu.memory_space<vmem>>, vector<1x128x32xf32>
    %1 = vector.shape_cast %0 : vector<1x128x32xf32> to vector<128x32xf32>
    %c0_2 = arith.constant 0 : index
    %c0_3 = arith.constant 0 : index
    %c0_4 = arith.constant 0 : index
    %2 = vector.load %arg2[%c0_2, %c0_3, %c0_4] : memref<1x32x128xbf16, #tpu.memory_space<vmem>>, vector<1x32x128xbf16>
    %3 = vector.shape_cast %2 : vector<1x32x128xbf16> to vector<32x128xbf16>
    %c0_5 = arith.constant 0 : index
    %c0_6 = arith.constant 0 : index
    %c0_7 = arith.constant 0 : index
    %4 = vector.load %arg3[%c0_5, %c0_6, %c0_7] : memref<1x128x128xi8, #tpu.memory_space<vmem>>, vector<1x128x128xi8>
    %5 = vector.shape_cast %4 : vector<1x128x128xi8> to vector<128x128xi8>
    %c0_i8 = arith.constant 0 : i8
    %6 = vector.broadcast %c0_i8 : i8 to vector<128x128xi8>
    %7 = arith.cmpi ne, %5, %6 : vector<128x128xi8>
    %c0_8 = arith.constant 0 : index
    %c0_9 = arith.constant 0 : index
    %8 = vector.load %arg4[%c0_8, %c0_9] : memref<96x32xbf16, #tpu.memory_space<vmem>>, vector<96x32xbf16>
    %cst = arith.constant dense<0.000000e+00> : vector<96x128xf32>
    %9 = tpu.matmul %8, %3, %cst {dimension_numbers = #tpu.dot_dimension_numbers<[1], [0], [0], [1], [0, 0, 1, 1], [], []>} : vector<96x32xbf16>, vector<32x128xbf16>, vector<96x128xf32> -> vector<96x128xf32>
    %c0_10 = arith.constant 0 : index
    %c0_11 = arith.constant 0 : index
    %10 = vector.load %arg5[%c0_10, %c0_11] : memref<96x1xf32, #tpu.memory_space<vmem>>, vector<96x1xf32>
    %11 = vector.broadcast %10 : vector<96x1xf32> to vector<96x128xf32>
    %12 = arith.addf %9, %11 : vector<96x128xf32>
    %13 = vector.extract_strided_slice %12 {offsets = [0, 0], sizes = [8, 128], strides = [1, 1]} : vector<96x128xf32> to vector<8x128xf32>
    %14 = tpu.transpose %13, [1, 0] : vector<8x128xf32> -> vector<128x8xf32>
    %15 = vector.extract_strided_slice %12 {offsets = [8, 0], sizes = [8, 128], strides = [1, 1]} : vector<96x128xf32> to vector<8x128xf32>
    %16 = tpu.transpose %15, [1, 0] : vector<8x128xf32> -> vector<128x8xf32>
    %17 = vector.extract_strided_slice %12 {offsets = [16, 0], sizes = [8, 128], strides = [1, 1]} : vector<96x128xf32> to vector<8x128xf32>
    %18 = tpu.transpose %17, [1, 0] : vector<8x128xf32> -> vector<128x8xf32>
    %19 = vector.extract_strided_slice %12 {offsets = [24, 0], sizes = [8, 128], strides = [1, 1]} : vector<96x128xf32> to vector<8x128xf32>
    %20 = tpu.transpose %19, [1, 0] : vector<8x128xf32> -> vector<128x8xf32>
    %21 = vector.shape_cast %14 : vector<128x8xf32> to vector<1x128x8xf32>
    %22 = vector.shape_cast %16 : vector<128x8xf32> to vector<1x128x8xf32>
    %23 = vector.shape_cast %18 : vector<128x8xf32> to vector<1x128x8xf32>
    %24 = vector.shape_cast %20 : vector<128x8xf32> to vector<1x128x8xf32>
    %25 = tpu.concatenate %21, %22, %23, %24 in 0 : vector<1x128x8xf32>, vector<1x128x8xf32>, vector<1x128x8xf32>, vector<1x128x8xf32> -> vector<4x128x8xf32>
    %26 = arith.truncf %25 : vector<4x128x8xf32> to vector<4x128x8xbf16>
    %27 = vector.extract_strided_slice %12 {offsets = [32, 0], sizes = [8, 128], strides = [1, 1]} : vector<96x128xf32> to vector<8x128xf32>
    %28 = vector.extract_strided_slice %12 {offsets = [40, 0], sizes = [8, 128], strides = [1, 1]} : vector<96x128xf32> to vector<8x128xf32>
    %29 = vector.extract_strided_slice %12 {offsets = [48, 0], sizes = [8, 128], strides = [1, 1]} : vector<96x128xf32> to vector<8x128xf32>
    %30 = vector.extract_strided_slice %12 {offsets = [56, 0], sizes = [8, 128], strides = [1, 1]} : vector<96x128xf32> to vector<8x128xf32>
    %31 = vector.shape_cast %27 : vector<8x128xf32> to vector<1x8x128xf32>
    %32 = vector.shape_cast %28 : vector<8x128xf32> to vector<1x8x128xf32>
    %33 = vector.shape_cast %29 : vector<8x128xf32> to vector<1x8x128xf32>
    %34 = vector.shape_cast %30 : vector<8x128xf32> to vector<1x8x128xf32>
    %35 = tpu.concatenate %31, %32, %33, %34 in 0 : vector<1x8x128xf32>, vector<1x8x128xf32>, vector<1x8x128xf32>, vector<1x8x128xf32> -> vector<4x8x128xf32>
    %36 = arith.truncf %35 : vector<4x8x128xf32> to vector<4x8x128xbf16>
    %37 = vector.extract_strided_slice %12 {offsets = [64, 0], sizes = [8, 128], strides = [1, 1]} : vector<96x128xf32> to vector<8x128xf32>
    %38 = vector.extract_strided_slice %12 {offsets = [72, 0], sizes = [8, 128], strides = [1, 1]} : vector<96x128xf32> to vector<8x128xf32>
    %39 = vector.extract_strided_slice %12 {offsets = [80, 0], sizes = [8, 128], strides = [1, 1]} : vector<96x128xf32> to vector<8x128xf32>
    %40 = vector.extract_strided_slice %12 {offsets = [88, 0], sizes = [8, 128], strides = [1, 1]} : vector<96x128xf32> to vector<8x128xf32>
    %41 = vector.shape_cast %37 : vector<8x128xf32> to vector<1x8x128xf32>
    %42 = vector.shape_cast %38 : vector<8x128xf32> to vector<1x8x128xf32>
    %43 = vector.shape_cast %39 : vector<8x128xf32> to vector<1x8x128xf32>
    %44 = vector.shape_cast %40 : vector<8x128xf32> to vector<1x8x128xf32>
    %45 = tpu.concatenate %41, %42, %43, %44 in 0 : vector<1x8x128xf32>, vector<1x8x128xf32>, vector<1x8x128xf32>, vector<1x8x128xf32> -> vector<4x8x128xf32>
    %46 = arith.truncf %45 : vector<4x8x128xf32> to vector<4x8x128xbf16>
    "tpu.trace_start"() <{level = 10 : i32, message = "hqd,hdk->hqk"}> : () -> ()
    %cst_12 = arith.constant dense<0.000000e+00> : vector<4x128x128xf32>
    %47 = tpu.matmul %26, %36, %cst_12 {dimension_numbers = #tpu.dot_dimension_numbers<[2], [1], [1], [2], [0, 0, 0, 1, 1, 2], [0], [0]>} : vector<4x128x8xbf16>, vector<4x8x128xbf16>, vector<4x128x128xf32> -> vector<4x128x128xf32>
    "tpu.trace_stop"() : () -> ()
    %48 = vector.shape_cast %7 : vector<128x128xi1> to vector<1x128x128xi1>
    %cst_13 = arith.constant -1.000000e+09 : f32
    %49 = vector.shape_cast %48 : vector<1x128x128xi1> to vector<1x128x128xi1>
    %50 = vector.broadcast %49 : vector<1x128x128xi1> to vector<4x128x128xi1>
    %51 = vector.broadcast %cst_13 : f32 to vector<4x128x128xf32>
    %52 = arith.select %50, %51, %47 : vector<4x128x128xi1>, vector<4x128x128xf32>
    %cst_14 = arith.constant dense<0xFF800000> : vector<4x128xf32>
    %53 = vector.multi_reduction <maximumf>, %52, %cst_14 [2] : vector<4x128x128xf32> to vector<4x128xf32>
    %54 = vector.shape_cast %53 : vector<4x128xf32> to vector<4x128x1xf32>
    %55 = vector.broadcast %54 : vector<4x128x1xf32> to vector<4x128x128xf32>
    %56 = arith.subf %52, %55 : vector<4x128x128xf32>
    %57 = math.exp %56 : vector<4x128x128xf32>
    %cst_15 = arith.constant dense<0.000000e+00> : vector<4x128xf32>
    %58 = vector.multi_reduction <add>, %57, %cst_15 [2] : vector<4x128x128xf32> to vector<4x128xf32>
    %59 = vector.shape_cast %58 : vector<4x128xf32> to vector<4x128x1xf32>
    %60 = tpu.reciprocal %59 {approx = true} : vector<4x128x1xf32> -> vector<4x128x1xf32>
    %61 = vector.broadcast %60 : vector<4x128x1xf32> to vector<4x128x128xf32>
    %62 = arith.mulf %57, %61 : vector<4x128x128xf32>
    %63 = vector.shape_cast %62 : vector<4x128x128xf32> to vector<4x1x128x128xf32>
    %c0_16 = arith.constant 0 : index
    %c0_17 = arith.constant 0 : index
    %c0_18 = arith.constant 0 : index
    %c0_19 = arith.constant 0 : index
    %64 = vector.load %arg15[%c0_16, %c0_17, %c0_18, %c0_19] : memref<4x1x128x128xf32, #tpu.memory_space<vmem>>, vector<4x1x128x128xf32>
    tpu.vector_store %arg15[%c0_16, %c0_17, %c0_18, %c0_19], %63 {strides = array<i32>} : memref<4x1x128x128xf32, #tpu.memory_space<vmem>>, vector<4x1x128x128xf32>,
    %65 = arith.truncf %62 : vector<4x128x128xf32> to vector<4x128x128xbf16>
    "tpu.trace_start"() <{level = 10 : i32, message = "hdk,hqk->hdq"}> : () -> ()
    %cst_20 = arith.constant dense<0.000000e+00> : vector<4x8x128xf32>
    %66 = tpu.matmul %46, %65, %cst_20 {dimension_numbers = #tpu.dot_dimension_numbers<[2], [2], [1], [1], [0, 0, 0, 1, 1, 1], [0], [0]>} : vector<4x8x128xbf16>, vector<4x128x128xbf16>, vector<4x8x128xf32> -> vector<4x8x128xf32>
    "tpu.trace_stop"() : () -> ()
    %67 = vector.extract_strided_slice %66 {offsets = [0, 0, 0], sizes = [1, 8, 128], strides = [1, 1, 1]} : vector<4x8x128xf32> to vector<1x8x128xf32>
    %68 = vector.shape_cast %67 : vector<1x8x128xf32> to vector<8x128xf32>
    %69 = vector.extract_strided_slice %66 {offsets = [1, 0, 0], sizes = [1, 8, 128], strides = [1, 1, 1]} : vector<4x8x128xf32> to vector<1x8x128xf32>
    %70 = vector.shape_cast %69 : vector<1x8x128xf32> to vector<8x128xf32>
    %71 = vector.extract_strided_slice %66 {offsets = [2, 0, 0], sizes = [1, 8, 128], strides = [1, 1, 1]} : vector<4x8x128xf32> to vector<1x8x128xf32>
    %72 = vector.shape_cast %71 : vector<1x8x128xf32> to vector<8x128xf32>
    %73 = vector.extract_strided_slice %66 {offsets = [3, 0, 0], sizes = [1, 8, 128], strides = [1, 1, 1]} : vector<4x8x128xf32> to vector<1x8x128xf32>
    %74 = vector.shape_cast %73 : vector<1x8x128xf32> to vector<8x128xf32>
    %75 = tpu.concatenate %68, %70, %72, %74 in 0 : vector<8x128xf32>, vector<8x128xf32>, vector<8x128xf32>, vector<8x128xf32> -> vector<32x128xf32>
    %76 = tpu.transpose %75, [1, 0] : vector<32x128xf32> -> vector<128x32xf32>
    %77 = arith.addf %76, %1 : vector<128x32xf32>
    %cst_21 = arith.constant dense<0.000000e+00> : vector<128xf32>
    %78 = vector.multi_reduction <add>, %77, %cst_21 [1] : vector<128x32xf32> to vector<128xf32>
    %79 = vector.shape_cast %78 : vector<128xf32> to vector<128x1xf32>
    %cst_22 = arith.constant 3.200000e+01 : f32
    %80 = vector.broadcast %cst_22 : f32 to vector<128x1xf32>
    %81 = arith.divf %79, %80 : vector<128x1xf32>
    %82 = vector.broadcast %81 : vector<128x1xf32> to vector<128x32xf32>
    %83 = arith.subf %77, %82 : vector<128x32xf32>
    %84 = arith.mulf %83, %83 : vector<128x32xf32>
    %cst_23 = arith.constant dense<0.000000e+00> : vector<128xf32>
    %85 = vector.multi_reduction <add>, %84, %cst_23 [1] : vector<128x32xf32> to vector<128xf32>
    %86 = vector.shape_cast %85 : vector<128xf32> to vector<128x1xf32>
    %cst_24 = arith.constant 3.200000e+01 : f32
    %87 = vector.broadcast %cst_24 : f32 to vector<128x1xf32>
    %88 = arith.divf %86, %87 : vector<128x1xf32>
    %89 = vector.broadcast %81 : vector<128x1xf32> to vector<128x32xf32>
    %90 = arith.subf %77, %89 : vector<128x32xf32>
    %cst_25 = arith.constant 9.99999974E-6 : f32
    %91 = vector.broadcast %cst_25 : f32 to vector<128x1xf32>
    %92 = arith.addf %88, %91 : vector<128x1xf32>
    %93 = math.rsqrt %92 : vector<128x1xf32>
    %94 = vector.broadcast %93 : vector<128x1xf32> to vector<128x32xf32>
    %95 = arith.mulf %90, %94 : vector<128x32xf32>
    %c0_26 = arith.constant 0 : index
    %c0_27 = arith.constant 0 : index
    %96 = vector.load %arg6[%c0_26, %c0_27] : memref<1x32xf32, #tpu.memory_space<vmem>>, vector<1x32xf32>
    %97 = vector.broadcast %96 : vector<1x32xf32> to vector<128x32xf32>
    %98 = arith.mulf %95, %97 : vector<128x32xf32>
    %c0_28 = arith.constant 0 : index
    %c0_29 = arith.constant 0 : index
    %99 = vector.load %arg7[%c0_28, %c0_29] : memref<1x32xf32, #tpu.memory_space<vmem>>, vector<1x32xf32>
    %100 = vector.broadcast %99 : vector<1x32xf32> to vector<128x32xf32>
    %101 = arith.addf %98, %100 : vector<128x32xf32>
    %102 = arith.truncf %101 : vector<128x32xf32> to vector<128x32xbf16>
    %c0_30 = arith.constant 0 : index
    %c0_31 = arith.constant 0 : index
    %103 = vector.load %arg8[%c0_30, %c0_31] : memref<32x128xbf16, #tpu.memory_space<vmem>>, vector<32x128xbf16>
    %cst_32 = arith.constant dense<0.000000e+00> : vector<128x128xf32>
    %104 = tpu.matmul %102, %103, %cst_32 {dimension_numbers = #tpu.dot_dimension_numbers<[1], [0], [0], [1], [0, 0, 1, 1], [], []>} : vector<128x32xbf16>, vector<32x128xbf16>, vector<128x128xf32> -> vector<128x128xf32>
    %c0_33 = arith.constant 0 : index
    %c0_34 = arith.constant 0 : index
    %105 = vector.load %arg9[%c0_33, %c0_34] : memref<1x128xf32, #tpu.memory_space<vmem>>, vector<1x128xf32>
    %106 = vector.broadcast %105 : vector<1x128xf32> to vector<128x128xf32>
    %107 = arith.addf %104, %106 : vector<128x128xf32>
    %cst_35 = arith.constant 0.000000e+00 : f32
    %108 = vector.broadcast %cst_35 : f32 to vector<128x128xf32>
    %109 = arith.maximumf %107, %108 : vector<128x128xf32>
    %110 = arith.truncf %109 : vector<128x128xf32> to vector<128x128xbf16>
    %c0_36 = arith.constant 0 : index
    %c0_37 = arith.constant 0 : index
    %111 = vector.load %arg10[%c0_36, %c0_37] : memref<128x32xbf16, #tpu.memory_space<vmem>>, vector<128x32xbf16>
    %cst_38 = arith.constant dense<0.000000e+00> : vector<128x32xf32>
    %112 = tpu.matmul %110, %111, %cst_38 {dimension_numbers = #tpu.dot_dimension_numbers<[1], [0], [0], [1], [0, 0, 1, 1], [], []>} : vector<128x128xbf16>, vector<128x32xbf16>, vector<128x32xf32> -> vector<128x32xf32>
    %c0_39 = arith.constant 0 : index
    %c0_40 = arith.constant 0 : index
    %113 = vector.load %arg11[%c0_39, %c0_40] : memref<1x32xf32, #tpu.memory_space<vmem>>, vector<1x32xf32>
    %114 = vector.broadcast %113 : vector<1x32xf32> to vector<128x32xf32>
    %115 = arith.addf %112, %114 : vector<128x32xf32>
    %116 = arith.addf %115, %101 : vector<128x32xf32>
    %cst_41 = arith.constant dense<0.000000e+00> : vector<128xf32>
    %117 = vector.multi_reduction <add>, %116, %cst_41 [1] : vector<128x32xf32> to vector<128xf32>
    %118 = vector.shape_cast %117 : vector<128xf32> to vector<128x1xf32>
    %cst_42 = arith.constant 3.200000e+01 : f32
    %119 = vector.broadcast %cst_42 : f32 to vector<128x1xf32>
    %120 = arith.divf %118, %119 : vector<128x1xf32>
    %121 = vector.broadcast %120 : vector<128x1xf32> to vector<128x32xf32>
    %122 = arith.subf %116, %121 : vector<128x32xf32>
    %123 = arith.mulf %122, %122 : vector<128x32xf32>
    %cst_43 = arith.constant dense<0.000000e+00> : vector<128xf32>
    %124 = vector.multi_reduction <add>, %123, %cst_43 [1] : vector<128x32xf32> to vector<128xf32>
    %125 = vector.shape_cast %124 : vector<128xf32> to vector<128x1xf32>
    %cst_44 = arith.constant 3.200000e+01 : f32
    %126 = vector.broadcast %cst_44 : f32 to vector<128x1xf32>
    %127 = arith.divf %125, %126 : vector<128x1xf32>
    %128 = vector.broadcast %120 : vector<128x1xf32> to vector<128x32xf32>
    %129 = arith.subf %116, %128 : vector<128x32xf32>
    %cst_45 = arith.constant 9.99999974E-6 : f32
    %130 = vector.broadcast %cst_45 : f32 to vector<128x1xf32>
    %131 = arith.addf %127, %130 : vector<128x1xf32>
    %132 = math.rsqrt %131 : vector<128x1xf32>
    %133 = vector.broadcast %132 : vector<128x1xf32> to vector<128x32xf32>
    %134 = arith.mulf %129, %133 : vector<128x32xf32>
    %c0_46 = arith.constant 0 : index
    %c0_47 = arith.constant 0 : index
    %135 = vector.load %arg12[%c0_46, %c0_47] : memref<1x32xf32, #tpu.memory_space<vmem>>, vector<1x32xf32>
    %136 = vector.broadcast %135 : vector<1x32xf32> to vector<128x32xf32>
    %137 = arith.mulf %134, %136 : vector<128x32xf32>
    %c0_48 = arith.constant 0 : index
    %c0_49 = arith.constant 0 : index
    %138 = vector.load %arg13[%c0_48, %c0_49] : memref<1x32xf32, #tpu.memory_space<vmem>>, vector<1x32xf32>
    %139 = vector.broadcast %138 : vector<1x32xf32> to vector<128x32xf32>
    %140 = arith.addf %137, %139 : vector<128x32xf32>
    %c0_50 = arith.constant 0 : index
    %c0_51 = arith.constant 0 : index
    %c0_52 = arith.constant 0 : index
    %141 = vector.load %arg14[%c0_50, %c0_51, %c0_52] : memref<1x128x32xf32, #tpu.memory_space<vmem>>, vector<1x128x32xf32>
    %142 = vector.shape_cast %141 : vector<1x128x32xf32> to vector<128x32xf32>
    %143 = vector.shape_cast %140 : vector<128x32xf32> to vector<1x128x32xf32>
    tpu.vector_store %arg14[%c0_50, %c0_51, %c0_52], %143 {strides = array<i32>} : memref<1x128x32xf32, #tpu.memory_space<vmem>>, vector<1x128x32xf32>,
    return
  }
  func.func @transform_0(%arg0: i32) -> (i32, i32, i32) {
    %c0_i32 = arith.constant 0 : i32
    %c0_i32_0 = arith.constant 0 : i32
    %c0_i32_1 = arith.constant 0 : i32
    return %arg0, %c0_i32, %c0_i32_0 : i32, i32, i32
  }
  func.func @transform_1(%arg0: i32) -> (i32, i32, i32) {
    %c0_i32 = arith.constant 0 : i32
    %c0_i32_0 = arith.constant 0 : i32
    %c0_i32_1 = arith.constant 0 : i32
    return %arg0, %c0_i32, %c0_i32_0 : i32, i32, i32
  }
  func.func @transform_2(%arg0: i32) -> (i32, i32, i32) {
    %c0_i32 = arith.constant 0 : i32
    %c0_i32_0 = arith.constant 0 : i32
    %c0_i32_1 = arith.constant 0 : i32
    return %arg0, %c0_i32, %c0_i32_0 : i32, i32, i32
  }
  func.func @transform_3(%arg0: i32) -> (i32, i32) {
    %c0_i32 = arith.constant 0 : i32
    %c0_i32_0 = arith.constant 0 : i32
    %c0_i32_1 = arith.constant 0 : i32
    return %c0_i32, %c0_i32_0 : i32, i32
  }
  func.func @transform_4(%arg0: i32) -> (i32, i32) {
    %c0_i32 = arith.constant 0 : i32
    %c0_i32_0 = arith.constant 0 : i32
    %c0_i32_1 = arith.constant 0 : i32
    return %c0_i32, %c0_i32_0 : i32, i32
  }
  func.func @transform_5(%arg0: i32) -> (i32, i32) {
    %c0_i32 = arith.constant 0 : i32
    %c0_i32_0 = arith.constant 0 : i32
    %c0_i32_1 = arith.constant 0 : i32
    return %c0_i32, %c0_i32_0 : i32, i32
  }
  func.func @transform_6(%arg0: i32) -> (i32, i32) {
    %c0_i32 = arith.constant 0 : i32
    %c0_i32_0 = arith.constant 0 : i32
    %c0_i32_1 = arith.constant 0 : i32
    return %c0_i32, %c0_i32_0 : i32, i32
  }
  func.func @transform_7(%arg0: i32) -> (i32, i32) {
    %c0_i32 = arith.constant 0 : i32
    %c0_i32_0 = arith.constant 0 : i32
    %c0_i32_1 = arith.constant 0 : i32
    return %c0_i32, %c0_i32_0 : i32, i32
  }
  func.func @transform_8(%arg0: i32) -> (i32, i32) {
    %c0_i32 = arith.constant 0 : i32
    %c0_i32_0 = arith.constant 0 : i32
    %c0_i32_1 = arith.constant 0 : i32
    return %c0_i32, %c0_i32_0 : i32, i32
  }
  func.func @transform_9(%arg0: i32) -> (i32, i32) {
    %c0_i32 = arith.constant 0 : i32
    %c0_i32_0 = arith.constant 0 : i32
    %c0_i32_1 = arith.constant 0 : i32
    return %c0_i32, %c0_i32_0 : i32, i32
  }
  func.func @transform_10(%arg0: i32) -> (i32, i32) {
    %c0_i32 = arith.constant 0 : i32
    %c0_i32_0 = arith.constant 0 : i32
    %c0_i32_1 = arith.constant 0 : i32
    return %c0_i32, %c0_i32_0 : i32, i32
  }
  func.func @transform_11(%arg0: i32) -> (i32, i32) {
    %c0_i32 = arith.constant 0 : i32
    %c0_i32_0 = arith.constant 0 : i32
    %c0_i32_1 = arith.constant 0 : i32
    return %c0_i32, %c0_i32_0 : i32, i32
  }
  func.func @transform_12(%arg0: i32) -> (i32, i32) {
    %c0_i32 = arith.constant 0 : i32
    %c0_i32_0 = arith.constant 0 : i32
    %c0_i32_1 = arith.constant 0 : i32
    return %c0_i32, %c0_i32_0 : i32, i32
  }
  func.func @transform_13(%arg0: i32) -> (i32, i32, i32) {
    %c0_i32 = arith.constant 0 : i32
    %c0_i32_0 = arith.constant 0 : i32
    %c0_i32_1 = arith.constant 0 : i32
    return %arg0, %c0_i32, %c0_i32_0 : i32, i32, i32
  }
  func.func @transform_14(%arg0: i32) -> (i32, i32, i32, i32) {
    %c0_i32 = arith.constant 0 : i32
    %c0_i32_0 = arith.constant 0 : i32
    %c0_i32_1 = arith.constant 0 : i32
    %c0_i32_2 = arith.constant 0 : i32
    return %c0_i32, %arg0, %c0_i32_0, %c0_i32_1 : i32, i32, i32, i32
  }
}

</mosaic_0001>

<llo_original>
// kernel: speech_transformer_encoder_layer.1
$region0: #{speech_transformer_encoder_layer.1}
  #allocation0 [shape = 'u32[]', space=smem, size = 0x4, offset = 0x4, fixed_abs, tag = 'smem constant byte address 0x4 - core index']
  #allocation1 [shape = 'u32[72,128]{1,0:T(1,128)}', space=vmem, size = 0x9000, scoped, tag = 'internal scratch']
  %s0 = inlined_call_operand.vmem [shape: f32[2,128,32], index: 0, kind: input, shape index: {}]
  %s1 = inlined_call_operand.vmem [shape: bf16[2,32,128], index: 1, kind: input, shape index: {}]
  %s2 = inlined_call_operand.vmem [shape: s8[2,128,128], index: 2, kind: input, shape index: {}]
  %s3 = inlined_call_operand.vmem [shape: bf16[96,32], index: 3, kind: input, shape index: {}]
  %s4 = inlined_call_operand.vmem [shape: f32[96,1], index: 4, kind: input, shape index: {}]
  %s5 = inlined_call_operand.vmem [shape: f32[1,32], index: 5, kind: input, shape index: {}]
  %s6 = inlined_call_operand.vmem [shape: f32[1,32], index: 6, kind: input, shape index: {}]
  %s7 = inlined_call_operand.vmem [shape: bf16[32,128], index: 7, kind: input, shape index: {}]
  %s8 = inlined_call_operand.vmem [shape: f32[1,128], index: 8, kind: input, shape index: {}]
  %s9 = inlined_call_operand.vmem [shape: bf16[128,32], index: 9, kind: input, shape index: {}]
  %s10 = inlined_call_operand.vmem [shape: f32[1,32], index: 10, kind: input, shape index: {}]
  %s11 = inlined_call_operand.vmem [shape: f32[1,32], index: 11, kind: input, shape index: {}]
  %s12 = inlined_call_operand.vmem [shape: f32[1,32], index: 12, kind: input, shape index: {}]
  %s13 = inlined_call_operand.vmem [shape: f32[2,128,32], index: 13, kind: output, shape index: {0}]
  %s14 = inlined_call_operand.vmem [shape: f32[4,2,128,128], index: 14, kind: output, shape index: {1}]
  %15 = xla_tuple %s13, %s14
  %s16 = sld [smem:[#allocation0]]
  $region127: #{speech_transformer_encoder_layer.1} parent=0
    _
  %s18 = ssub.s32 1, %s16
  %s19 = scalar_select 0, %s18, %s16
  $region1: #{speech_transformer_encoder_layer.1} parent=0
    #allocation2 [shape = 'u8[524288]{0}', space=vmem, size = 0x80000, scoped, tag = 'output window, operand 1']
    loop: start=0, step=1, limit=4
    $region2: #{speech_transformer_encoder_layer.1} parent=1 // loop_pre_header
      _
    $region3: #{speech_transformer_encoder_layer.1} parent=1 // loop_header
      %s21 = sphi 0, %s25
      %p22 = scmp.ge.s32.totalorder %s21, 4
      %s31 = sphi 0, %s33
      %s34 = sphi 0, %s31
      %s35 = sphi 0, %s34
      %s51 = sphi 0, %s35
      %s57 = sphi 0, %s59
      %s60 = sphi 0, %s57
      %s61 = sphi 0, %s60
      %s77 = sphi 0, %s61
      %s83 = sphi 0, %s85
      %s86 = sphi 0, %s83
      %s87 = sphi 0, %s86
      %s103 = sphi 0, %s87
      %s107 = sphi 0, %s107
      %s109 = sphi 0, %s107
      %s110 = sphi 0, %s109
      %s124 = sphi 0, %s110
      %s128 = sphi 0, %s128
      %s130 = sphi 0, %s128
      %s131 = sphi 0, %s130
      %s145 = sphi 0, %s131
      %s149 = sphi 0, %s149
      %s151 = sphi 0, %s149
      %s152 = sphi 0, %s151
      %s166 = sphi 0, %s152
      %s170 = sphi 0, %s170
      %s172 = sphi 0, %s170
      %s173 = sphi 0, %s172
      %s187 = sphi 0, %s173
      %s191 = sphi 0, %s191
      %s193 = sphi 0, %s191
      %s194 = sphi 0, %s193
      %s208 = sphi 0, %s194
      %s212 = sphi 0, %s212
      %s214 = sphi 0, %s212
      %s215 = sphi 0, %s214
      %s229 = sphi 0, %s215
      %s233 = sphi 0, %s233
      %s235 = sphi 0, %s233
      %s236 = sphi 0, %s235
      %s250 = sphi 0, %s236
      %s254 = sphi 0, %s254
      %s256 = sphi 0, %s254
      %s257 = sphi 0, %s256
      %s271 = sphi 0, %s257
      %s275 = sphi 0, %s275
      %s277 = sphi 0, %s275
      %s278 = sphi 0, %s277
      %s292 = sphi 0, %s278
      %s296 = sphi 0, %s296
      %s298 = sphi 0, %s296
      %s299 = sphi 0, %s298
      %s313 = sphi 0, %s299
      %s319 = sphi 0, %s321
      %s322 = sphi 0, %s319
      %s323 = sphi 0, %s322
      %s339 = sphi 0, %s323
      %s345 = sphi 0, %s347
      %s348 = sphi 0, %s345
      %s349 = sphi 0, %s348
      %s365 = sphi 0, %s349
    $region4: #{speech_transformer_encoder_layer.1} parent=1 // loop_header_branch
      %24 = sbr.rel (%p22) target = $region8
    $region5: #{speech_transformer_encoder_layer.1} parent=1 // loop_body
      %s26 = ssub.s32 %s21, 1
      %s27 = ssub.s32 %s21, 2
      %s28 = sadd.s32 %s21, 1
      %s29 = ssub.s32 %s21, %s28
      %p30 = scmp.eq.s32.totalorder %s29, 0
      %s32 = sadd.s32 %s31, 1
      %s33 = scalar_select %p30, %s31, %s32
      %p36 = pneg %p30
      %p37 = scmp.eq.s32.totalorder %s21, 1
      %p38 = por %p36, %p37
      %p39 = scmp.ne.s32.totalorder %s31, %s34
      %p40 = scmp.eq.s32.totalorder %s21, 0
      %p41 = por %p39, %p40
      %p42 = scmp.ne.s32.totalorder %s31, %s34
      %p43 = scmp.eq.s32.totalorder %s26, 1
      %p44 = por %p42, %p43
      %p45 = scmp.ne.s32.totalorder %s34, %s35
      %p46 = scmp.eq.s32.totalorder %s26, 0
      %p47 = por %p45, %p46
      %p48 = scmp.ne.s32.totalorder %s34, %s35
      %p49 = scmp.eq.s32.totalorder %s27, 1
      %p50 = por %p48, %p49
      %p52 = scmp.ne.s32.totalorder %s35, %s51
      %p53 = scmp.eq.s32.totalorder %s27, 0
      %p54 = por %p52, %p53
      %s55 = ssub.s32 %s21, %s28
      %p56 = scmp.eq.s32.totalorder %s55, 0
      %s58 = sadd.s32 %s57, 1
      %s59 = scalar_select %p56, %s57, %s58
      %p62 = pneg %p56
      %p63 = scmp.eq.s32.totalorder %s21, 1
      %p64 = por %p62, %p63
      %p65 = scmp.ne.s32.totalorder %s57, %s60
      %p66 = scmp.eq.s32.totalorder %s21, 0
      %p67 = por %p65, %p66
      %p68 = scmp.ne.s32.totalorder %s57, %s60
      %p69 = scmp.eq.s32.totalorder %s26, 1
      %p70 = por %p68, %p69
      %p71 = scmp.ne.s32.totalorder %s60, %s61
      %p72 = scmp.eq.s32.totalorder %s26, 0
      %p73 = por %p71, %p72
      %p74 = scmp.ne.s32.totalorder %s60, %s61
      %p75 = scmp.eq.s32.totalorder %s27, 1
      %p76 = por %p74, %p75
      %p78 = scmp.ne.s32.totalorder %s61, %s77
      %p79 = scmp.eq.s32.totalorder %s27, 0
      %p80 = por %p78, %p79
      %s81 = ssub.s32 %s21, %s28
      %p82 = scmp.eq.s32.totalorder %s81, 0
      %s84 = sadd.s32 %s83, 1
      %s85 = scalar_select %p82, %s83, %s84
      %p88 = pneg %p82
      %p89 = scmp.eq.s32.totalorder %s21, 1
      %p90 = por %p88, %p89
      %p91 = scmp.ne.s32.totalorder %s83, %s86
      %p92 = scmp.eq.s32.totalorder %s21, 0
      %p93 = por %p91, %p92
      %p94 = scmp.ne.s32.totalorder %s83, %s86
      %p95 = scmp.eq.s32.totalorder %s26, 1
      %p96 = por %p94, %p95
      %p97 = scmp.ne.s32.totalorder %s86, %s87
      %p98 = scmp.eq.s32.totalorder %s26, 0
      %p99 = por %p97, %p98
      %p100 = scmp.ne.s32.totalorder %s86, %s87
      %p101 = scmp.eq.s32.totalorder %s27, 1
      %p102 = por %p100, %p101
      %p104 = scmp.ne.s32.totalorder %s87, %s103
      %p105 = scmp.eq.s32.totalorder %s27, 0
      %p106 = por %p104, %p105
      %s108 = sadd.s32 %s107, 1
      %p111 = scmp.eq.s32.totalorder %s21, 1
      %p112 = scmp.ne.s32.totalorder %s107, %s109
      %p113 = scmp.eq.s32.totalorder %s21, 0
      %p114 = por %p112, %p113
      %p115 = scmp.ne.s32.totalorder %s107, %s109
      %p116 = scmp.eq.s32.totalorder %s26, 1
      %p117 = por %p115, %p116
      %p118 = scmp.ne.s32.totalorder %s109, %s110
      %p119 = scmp.eq.s32.totalorder %s26, 0
      %p120 = por %p118, %p119
      %p121 = scmp.ne.s32.totalorder %s109, %s110
      %p122 = scmp.eq.s32.totalorder %s27, 1
      %p123 = por %p121, %p122
      %p125 = scmp.ne.s32.totalorder %s110, %s124
      %p126 = scmp.eq.s32.totalorder %s27, 0
      %p127 = por %p125, %p126
      %s129 = sadd.s32 %s128, 1
      %p132 = scmp.eq.s32.totalorder %s21, 1
      %p133 = scmp.ne.s32.totalorder %s128, %s130
      %p134 = scmp.eq.s32.totalorder %s21, 0
      %p135 = por %p133, %p134
      %p136 = scmp.ne.s32.totalorder %s128, %s130
      %p137 = scmp.eq.s32.totalorder %s26, 1
      %p138 = por %p136, %p137
      %p139 = scmp.ne.s32.totalorder %s130, %s131
      %p140 = scmp.eq.s32.totalorder %s26, 0
      %p141 = por %p139, %p140
      %p142 = scmp.ne.s32.totalorder %s130, %s131
      %p143 = scmp.eq.s32.totalorder %s27, 1
      %p144 = por %p142, %p143
      %p146 = scmp.ne.s32.totalorder %s131, %s145
      %p147 = scmp.eq.s32.totalorder %s27, 0
      %p148 = por %p146, %p147
      %s150 = sadd.s32 %s149, 1
      %p153 = scmp.eq.s32.totalorder %s21, 1
      %p154 = scmp.ne.s32.totalorder %s149, %s151
      %p155 = scmp.eq.s32.totalorder %s21, 0
      %p156 = por %p154, %p155
      %p157 = scmp.ne.s32.totalorder %s149, %s151
      %p158 = scmp.eq.s32.totalorder %s26, 1
      %p159 = por %p157, %p158
      %p160 = scmp.ne.s32.totalorder %s151, %s152
      %p161 = scmp.eq.s32.totalorder %s26, 0
      %p162 = por %p160, %p161
      %p163 = scmp.ne.s32.totalorder %s151, %s152
      %p164 = scmp.eq.s32.totalorder %s27, 1
      %p165 = por %p163, %p164
      %p167 = scmp.ne.s32.totalorder %s152, %s166
      %p168 = scmp.eq.s32.totalorder %s27, 0
      %p169 = por %p167, %p168
      %s171 = sadd.s32 %s170, 1
      %p174 = scmp.eq.s32.totalorder %s21, 1
      %p175 = scmp.ne.s32.totalorder %s170, %s172
      %p176 = scmp.eq.s32.totalorder %s21, 0
      %p177 = por %p175, %p176
      %p178 = scmp.ne.s32.totalorder %s170, %s172
      %p179 = scmp.eq.s32.totalorder %s26, 1
      %p180 = por %p178, %p179
      %p181 = scmp.ne.s32.totalorder %s172, %s173
      %p182 = scmp.eq.s32.totalorder %s26, 0
      %p183 = por %p181, %p182
      %p184 = scmp.ne.s32.totalorder %s172, %s173
      %p185 = scmp.eq.s32.totalorder %s27, 1
      %p186 = por %p184, %p185
      %p188 = scmp.ne.s32.totalorder %s173, %s187
      %p189 = scmp.eq.s32.totalorder %s27, 0
      %p190 = por %p188, %p189
      %s192 = sadd.s32 %s191, 1
      %p195 = scmp.eq.s32.totalorder %s21, 1
      %p196 = scmp.ne.s32.totalorder %s191, %s193
      %p197 = scmp.eq.s32.totalorder %s21, 0
      %p198 = por %p196, %p197
      %p199 = scmp.ne.s32.totalorder %s191, %s193
      %p200 = scmp.eq.s32.totalorder %s26, 1
      %p201 = por %p199, %p200
      %p202 = scmp.ne.s32.totalorder %s193, %s194
      %p203 = scmp.eq.s32.totalorder %s26, 0
      %p204 = por %p202, %p203
      %p205 = scmp.ne.s32.totalorder %s193, %s194
      %p206 = scmp.eq.s32.totalorder %s27, 1
      %p207 = por %p205, %p206
      %p209 = scmp.ne.s32.totalorder %s194, %s208
      %p210 = scmp.eq.s32.totalorder %s27, 0
      %p211 = por %p209, %p210
      %s213 = sadd.s32 %s212, 1
      %p216 = scmp.eq.s32.totalorder %s21, 1
      %p217 = scmp.ne.s32.totalorder %s212, %s214
      %p218 = scmp.eq.s32.totalorder %s21, 0
      %p219 = por %p217, %p218
      %p220 = scmp.ne.s32.totalorder %s212, %s214
      %p221 = scmp.eq.s32.totalorder %s26, 1
      %p222 = por %p220, %p221
      %p223 = scmp.ne.s32.totalorder %s214, %s215
      %p224 = scmp.eq.s32.totalorder %s26, 0
      %p225 = por %p223, %p224
      %p226 = scmp.ne.s32.totalorder %s214, %s215
      %p227 = scmp.eq.s32.totalorder %s27, 1
      %p228 = por %p226, %p227
      %p230 = scmp.ne.s32.totalorder %s215, %s229
      %p231 = scmp.eq.s32.totalorder %s27, 0
      %p232 = por %p230, %p231
      %s234 = sadd.s32 %s233, 1
      %p237 = scmp.eq.s32.totalorder %s21, 1
      %p238 = scmp.ne.s32.totalorder %s233, %s235
      %p239 = scmp.eq.s32.totalorder %s21, 0
      %p240 = por %p238, %p239
      %p241 = scmp.ne.s32.totalorder %s233, %s235
      %p242 = scmp.eq.s32.totalorder %s26, 1
      %p243 = por %p241, %p242
      %p244 = scmp.ne.s32.totalorder %s235, %s236
      %p245 = scmp.eq.s32.totalorder %s26, 0
      %p246 = por %p244, %p245
      %p247 = scmp.ne.s32.totalorder %s235, %s236
      %p248 = scmp.eq.s32.totalorder %s27, 1
      %p249 = por %p247, %p248
      %p251 = scmp.ne.s32.totalorder %s236, %s250
      %p252 = scmp.eq.s32.totalorder %s27, 0
      %p253 = por %p251, %p252
      %s255 = sadd.s32 %s254, 1
      %p258 = scmp.eq.s32.totalorder %s21, 1
      %p259 = scmp.ne.s32.totalorder %s254, %s256
      %p260 = scmp.eq.s32.totalorder %s21, 0
      %p261 = por %p259, %p260
      %p262 = scmp.ne.s32.totalorder %s254, %s256
      %p263 = scmp.eq.s32.totalorder %s26, 1
      %p264 = por %p262, %p263
      %p265 = scmp.ne.s32.totalorder %s256, %s257
      %p266 = scmp.eq.s32.totalorder %s26, 0
      %p267 = por %p265, %p266
      %p268 = scmp.ne.s32.totalorder %s256, %s257
      %p269 = scmp.eq.s32.totalorder %s27, 1
      %p270 = por %p268, %p269
      %p272 = scmp.ne.s32.totalorder %s257, %s271
      %p273 = scmp.eq.s32.totalorder %s27, 0
      %p274 = por %p272, %p273
      %s276 = sadd.s32 %s275, 1
      %p279 = scmp.eq.s32.totalorder %s21, 1
      %p280 = scmp.ne.s32.totalorder %s275, %s277
      %p281 = scmp.eq.s32.totalorder %s21, 0
      %p282 = por %p280, %p281
      %p283 = scmp.ne.s32.totalorder %s275, %s277
      %p284 = scmp.eq.s32.totalorder %s26, 1
      %p285 = por %p283, %p284
      %p286 = scmp.ne.s32.totalorder %s277, %s278
      %p287 = scmp.eq.s32.totalorder %s26, 0
      %p288 = por %p286, %p287
      %p289 = scmp.ne.s32.totalorder %s277, %s278
      %p290 = scmp.eq.s32.totalorder %s27, 1
      %p291 = por %p289, %p290
      %p293 = scmp.ne.s32.totalorder %s278, %s292
      %p294 = scmp.eq.s32.totalorder %s27, 0
      %p295 = por %p293, %p294
      %s297 = sadd.s32 %s296, 1
      %p300 = scmp.eq.s32.totalorder %s21, 1
      %p301 = scmp.ne.s32.totalorder %s296, %s298
      %p302 = scmp.eq.s32.totalorder %s21, 0
      %p303 = por %p301, %p302
      %p304 = scmp.ne.s32.totalorder %s296, %s298
      %p305 = scmp.eq.s32.totalorder %s26, 1
      %p306 = por %p304, %p305
      %p307 = scmp.ne.s32.totalorder %s298, %s299
      %p308 = scmp.eq.s32.totalorder %s26, 0
      %p309 = por %p307, %p308
      %p310 = scmp.ne.s32.totalorder %s298, %s299
      %p311 = scmp.eq.s32.totalorder %s27, 1
      %p312 = por %p310, %p311
      %p314 = scmp.ne.s32.totalorder %s299, %s313
      %p315 = scmp.eq.s32.totalorder %s27, 0
      %p316 = por %p314, %p315
      %s317 = ssub.s32 %s21, %s28
      %p318 = scmp.eq.s32.totalorder %s317, 0
      %s320 = sadd.s32 %s319, 1
      %s321 = scalar_select %p318, %s319, %s320
      %p324 = pneg %p318
      %p325 = scmp.eq.s32.totalorder %s21, 1
      %p326 = por %p324, %p325
      %p327 = scmp.ne.s32.totalorder %s319, %s322
      %p328 = scmp.eq.s32.totalorder %s21, 0
      %p329 = por %p327, %p328
      %p330 = scmp.ne.s32.totalorder %s319, %s322
      %p331 = scmp.eq.s32.totalorder %s26, 1
      %p332 = por %p330, %p331
      %p333 = scmp.ne.s32.totalorder %s322, %s323
      %p334 = scmp.eq.s32.totalorder %s26, 0
      %p335 = por %p333, %p334
      %p336 = scmp.ne.s32.totalorder %s322, %s323
      %p337 = scmp.eq.s32.totalorder %s27, 1
      %p338 = por %p336, %p337
      %p340 = scmp.ne.s32.totalorder %s323, %s339
      %p341 = scmp.eq.s32.totalorder %s27, 0
      %p342 = por %p340, %p341
      %s343 = ssub.s32 %s21, %s28
      %p344 = scmp.eq.s32.totalorder %s343, 0
      %s346 = sadd.s32 %s345, 1
      %s347 = scalar_select %p344, %s345, %s346
      %p350 = pneg %p344
      %p351 = scmp.eq.s32.totalorder %s21, 1
      %p352 = por %p350, %p351
      %p353 = scmp.ne.s32.totalorder %s345, %s348
      %p354 = scmp.eq.s32.totalorder %s21, 0
      %p355 = por %p353, %p354
      %p356 = scmp.ne.s32.totalorder %s345, %s348
      %p357 = scmp.eq.s32.totalorder %s26, 1
      %p358 = por %p356, %p357
      %p359 = scmp.ne.s32.totalorder %s348, %s349
      %p360 = scmp.eq.s32.totalorder %s26, 0
      %p361 = por %p359, %p360
      %p362 = scmp.ne.s32.totalorder %s348, %s349
      %p363 = scmp.eq.s32.totalorder %s27, 1
      %p364 = por %p362, %p363
      %p366 = scmp.ne.s32.totalorder %s349, %s365
      %p367 = scmp.eq.s32.totalorder %s27, 0
      %p368 = por %p366, %p367
      %p369 = scmp.le.s32.totalorder 1, %s21
      %p370 = scmp.lt.s32.totalorder %s21, 3
      %p371 = pnand %p369, %p370
      %p372 = pneg %p371
      // Predicated region
      $region9: #{speech_transformer_encoder_layer.1} parent=5 // pred_check
        _
      $region10: #{speech_transformer_encoder_layer.1} parent=5 // pred_check_branch
        %374 = sbr.rel (%p371) target = $region12
      $region11: #{speech_transformer_encoder_layer.1} parent=5 // pred_region
        %s375 = ssub.s32 %s21, 1
        // Predicated region
        $region13: #{speech_transformer_encoder_layer.1} parent=11 // pred_check
          %p376 = pneg %p120
        $region14: #{speech_transformer_encoder_layer.1} parent=11 // pred_check_branch
          %378 = sbr.rel (%p376) target = $region16
        $region15: #{speech_transformer_encoder_layer.1} parent=11 // pred_region
          _
        $region16: #{speech_transformer_encoder_layer.1} parent=11 // pred_fallthru
          _
        // Predicated region
        $region17: #{speech_transformer_encoder_layer.1} parent=11 // pred_check
          %p379 = pneg %p141
        $region18: #{speech_transformer_encoder_layer.1} parent=11 // pred_check_branch
          %381 = sbr.rel (%p379) target = $region20
        $region19: #{speech_transformer_encoder_layer.1} parent=11 // pred_region
          _
        $region20: #{speech_transformer_encoder_layer.1} parent=11 // pred_fallthru
          _
        // Predicated region
        $region21: #{speech_transformer_encoder_layer.1} parent=11 // pred_check
          %p382 = pneg %p162
        $region22: #{speech_transformer_encoder_layer.1} parent=11 // pred_check_branch
          %384 = sbr.rel (%p382) target = $region24
        $region23: #{speech_transformer_encoder_layer.1} parent=11 // pred_region
          _
        $region24: #{speech_transformer_encoder_layer.1} parent=11 // pred_fallthru
          _
        // Predicated region
        $region25: #{speech_transformer_encoder_layer.1} parent=11 // pred_check
          %p385 = pneg %p183
        $region26: #{speech_transformer_encoder_layer.1} parent=11 // pred_check_branch
          %387 = sbr.rel (%p385) target = $region28
        $region27: #{speech_transformer_encoder_layer.1} parent=11 // pred_region
          _
        $region28: #{speech_transformer_encoder_layer.1} parent=11 // pred_fallthru
          _
        // Predicated region
        $region29: #{speech_transformer_encoder_layer.1} parent=11 // pred_check
          %p388 = pneg %p204
        $region30: #{speech_transformer_encoder_layer.1} parent=11 // pred_check_branch
          %390 = sbr.rel (%p388) target = $region32
        $region31: #{speech_transformer_encoder_layer.1} parent=11 // pred_region
          _
        $region32: #{speech_transformer_encoder_layer.1} parent=11 // pred_fallthru
          _
        // Predicated region
        $region33: #{speech_transformer_encoder_layer.1} parent=11 // pred_check
          %p391 = pneg %p225
        $region34: #{speech_transformer_encoder_layer.1} parent=11 // pred_check_branch
          %393 = sbr.rel (%p391) target = $region36
        $region35: #{speech_transformer_encoder_layer.1} parent=11 // pred_region
          _
        $region36: #{speech_transformer_encoder_layer.1} parent=11 // pred_fallthru
          _
        // Predicated region
        $region37: #{speech_transformer_encoder_layer.1} parent=11 // pred_check
          %p394 = pneg %p246
        $region38: #{speech_transformer_encoder_layer.1} parent=11 // pred_check_branch
          %396 = sbr.rel (%p394) target = $region40
        $region39: #{speech_transformer_encoder_layer.1} parent=11 // pred_region
          _
        $region40: #{speech_transformer_encoder_layer.1} parent=11 // pred_fallthru
          _
        // Predicated region
        $region41: #{speech_transformer_encoder_layer.1} parent=11 // pred_check
          %p397 = pneg %p267
        $region42: #{speech_transformer_encoder_layer.1} parent=11 // pred_check_branch
          %399 = sbr.rel (%p397) target = $region44
        $region43: #{speech_transformer_encoder_layer.1} parent=11 // pred_region
          _
        $region44: #{speech_transformer_encoder_layer.1} parent=11 // pred_fallthru
          _
        // Predicated region
        $region45: #{speech_transformer_encoder_layer.1} parent=11 // pred_check
          %p400 = pneg %p288
        $region46: #{speech_transformer_encoder_layer.1} parent=11 // pred_check_branch
          %402 = sbr.rel (%p400) target = $region48
        $region47: #{speech_transformer_encoder_layer.1} parent=11 // pred_region
          _
        $region48: #{speech_transformer_encoder_layer.1} parent=11 // pred_fallthru
          _
        // Predicated region
        $region49: #{speech_transformer_encoder_layer.1} parent=11 // pred_check
          %p403 = pneg %p309
        $region50: #{speech_transformer_encoder_layer.1} parent=11 // pred_check_branch
          %405 = sbr.rel (%p403) target = $region52
        $region51: #{speech_transformer_encoder_layer.1} parent=11 // pred_region
          _
        $region52: #{speech_transformer_encoder_layer.1} parent=11 // pred_fallthru
          _
      $region12: #{speech_transformer_encoder_layer.1} parent=5 // pred_fallthru
        _
      %p406 = scmp.lt.s32.totalorder %s21, 2
      // Predicated region
      $region53: #{speech_transformer_encoder_layer.1} parent=5 // pred_check
        %p407 = pneg %p406
      $region54: #{speech_transformer_encoder_layer.1} parent=5 // pred_check_branch
        %409 = sbr.rel (%p407) target = $region56
      $region55: #{speech_transformer_encoder_layer.1} parent=5 // pred_region
        // Predicated region
        $region57: #{speech_transformer_encoder_layer.1} parent=55 // pred_check
          %p410 = pneg %p41
        $region58: #{speech_transformer_encoder_layer.1} parent=55 // pred_check_branch
          %412 = sbr.rel (%p410) target = $region60
        $region59: #{speech_transformer_encoder_layer.1} parent=55 // pred_region
          %p413 = scmp.lt.s32.totalorder %s21, 1
          %s414 = scalar_select %p413, %s21, 1
          %s415 = smul.addr %s414, 16
          %s416 = smul.addr %s415, 8
          %s417 = scalar_lea.vmem %s0, %s416
        $region60: #{speech_transformer_encoder_layer.1} parent=55 // pred_fallthru
          _
        // Predicated region
        $region61: #{speech_transformer_encoder_layer.1} parent=55 // pred_check
          %p418 = pneg %p67
        $region62: #{speech_transformer_encoder_layer.1} parent=55 // pred_check_branch
          %420 = sbr.rel (%p418) target = $region64
        $region63: #{speech_transformer_encoder_layer.1} parent=55 // pred_region
          %p421 = scmp.lt.s32.totalorder %s21, 1
          %s422 = scalar_select %p421, %s21, 1
          %s423 = smul.addr %s422, 4
          %s424 = smul.addr %s423, 4
          %s425 = scalar_lea.vmem %s1, %s424
        $region64: #{speech_transformer_encoder_layer.1} parent=55 // pred_fallthru
          _
        // Predicated region
        $region65: #{speech_transformer_encoder_layer.1} parent=55 // pred_check
          %p426 = pneg %p93
        $region66: #{speech_transformer_encoder_layer.1} parent=55 // pred_check_branch
          %428 = sbr.rel (%p426) target = $region68
        $region67: #{speech_transformer_encoder_layer.1} parent=55 // pred_region
          %p429 = scmp.lt.s32.totalorder %s21, 1
          %s430 = scalar_select %p429, %s21, 1
          %s431 = smul.addr %s430, 4
          %s432 = smul.addr %s431, 8
          %s433 = scalar_lea.vmem %s2, %s432
        $region68: #{speech_transformer_encoder_layer.1} parent=55 // pred_fallthru
          _
      $region56: #{speech_transformer_encoder_layer.1} parent=5 // pred_fallthru
        _
      %p434 = scmp.le.s32.totalorder 1, %s21
      %p435 = scmp.lt.s32.totalorder %s21, 3
      %p436 = pnand %p434, %p435
      %p437 = pneg %p436
      // Predicated region
      $region69: #{speech_transformer_encoder_layer.1} parent=5 // pred_check
        _
      $region70: #{speech_transformer_encoder_layer.1} parent=5 // pred_check_branch
        %439 = sbr.rel (%p436) target = $region72
      $region71: #{speech_transformer_encoder_layer.1} parent=5 // pred_region
        %s440 = ssub.s32 %s21, 1
        %p441 = scmp.lt.s32.totalorder %s26, 1
        %s442 = scalar_select %p441, %s26, 1
        %s443 = smul.addr %s442, 16
        %s444 = smul.addr %s443, 8
        %s445 = scalar_lea.vmem %s0, %s444
        %p446 = pneg %p47
        %p447 = pneg %p44
        %p448 = scmp.lt.s32.totalorder %s26, 1
        %s449 = scalar_select %p448, %s26, 1
        %s450 = smul.addr %s449, 4
        %s451 = smul.addr %s450, 4
        %s452 = scalar_lea.vmem %s1, %s451
        %p453 = pneg %p73
        %p454 = pneg %p70
        %p455 = scmp.lt.s32.totalorder %s26, 1
        %s456 = scalar_select %p455, %s26, 1
        %s457 = smul.addr %s456, 4
        %s458 = smul.addr %s457, 8
        %s459 = scalar_lea.vmem %s2, %s458
        %p460 = pneg %p99
        %p461 = pneg %p96
        %p462 = pneg %p120
        %p463 = pneg %p117
        %p464 = pneg %p141
        %p465 = pneg %p138
        %p466 = pneg %p162
        %p467 = pneg %p159
        %p468 = pneg %p183
        %p469 = pneg %p180
        %p470 = pneg %p204
        %p471 = pneg %p201
        %p472 = pneg %p225
        %p473 = pneg %p222
        %p474 = pneg %p246
        %p475 = pneg %p243
        %p476 = pneg %p267
        %p477 = pneg %p264
        %p478 = pneg %p288
        %p479 = pneg %p285
        %p480 = pneg %p309
        %p481 = pneg %p306
        %p482 = pneg %p335
        %p483 = pneg %p332
        %p484 = scmp.lt.s32.totalorder %s26, 1
        %s485 = scalar_select %p484, %s26, 1
        %s486 = smul.addr %s485, 16
        %s487 = smul.addr %s486, 8
        %s488 = scalar_lea.vmem %s13, %s487
        %p489 = pneg %p361
        %p490 = pneg %p358
        %s491 = sand.u32 %s348, 1
        %s492 = sand.u32 %s348, 1
        %s493 = smul.addr %s492, 512
        %s494 = scalar_lea.vmem [#allocation2], %s493
        %p495 = scmp.lt.s32.totalorder %s26, 1
        %s496 = scalar_select %p495, %s26, 1
        %s497 = smul.addr %s496, 16
        %s498 = smul.addr %s497, 8
        %s499 = scalar_lea.vmem %s0, %s498
        %p500 = scmp.lt.s32.totalorder %s26, 1
        %s501 = scalar_select %p500, %s26, 1
        %s502 = smul.addr %s501, 4
        %s503 = smul.addr %s502, 4
        %s504 = scalar_lea.vmem %s1, %s503
        %p505 = scmp.lt.s32.totalorder %s26, 1
        %s506 = scalar_select %p505, %s26, 1
        %s507 = smul.addr %s506, 4
        %s508 = smul.addr %s507, 8
        %s509 = scalar_lea.vmem %s2, %s508
        %p510 = scmp.lt.s32.totalorder %s26, 1
        %s511 = scalar_select %p510, %s26, 1
        %s512 = smul.addr %s511, 16
        %s513 = smul.addr %s512, 8
        %s514 = scalar_lea.vmem %s13, %s513
        %v518 = vld [vmem:[%s499] sm:$0xff]
        %v519 = vld [vmem:[%s499 + $0x8] sm:$0xff]
        %v520 = vld [vmem:[%s499 + $0x10] sm:$0xff]
        %v521 = vld [vmem:[%s499 + $0x18] sm:$0xff]
        %v522 = vld [vmem:[%s499 + $0x20] sm:$0xff]
        %v523 = vld [vmem:[%s499 + $0x28] sm:$0xff]
        %v524 = vld [vmem:[%s499 + $0x30] sm:$0xff]
        %v525 = vld [vmem:[%s499 + $0x38] sm:$0xff]
        %v526 = vld [vmem:[%s499 + $0x40] sm:$0xff]
        %v527 = vld [vmem:[%s499 + $0x48] sm:$0xff]
        %v528 = vld [vmem:[%s499 + $0x50] sm:$0xff]
        %v529 = vld [vmem:[%s499 + $0x58] sm:$0xff]
        %v530 = vld [vmem:[%s499 + $0x60] sm:$0xff]
        %v531 = vld [vmem:[%s499 + $0x68] sm:$0xff]
        %v532 = vld [vmem:[%s499 + $0x70] sm:$0xff]
        %v533 = vld [vmem:[%s499 + $0x78] sm:$0xff]
        %v534 = vld [vmem:[%s504] sm:$0xf]
        %v535 = vld [vmem:[%s504 + $0x4] sm:$0xf]
        %v536 = vld [vmem:[%s504 + $0x8] sm:$0xf]
        %v537 = vld [vmem:[%s504 + $0xc] sm:$0xf]
        %v538 = vld [vmem:[%s509] sm:$0xff]
        %v539 = vld [vmem:[%s509 + $0x8] sm:$0xff]
        %v540 = vld [vmem:[%s509 + $0x10] sm:$0xff]
        %v541 = vld [vmem:[%s509 + $0x18] sm:$0xff]
        %vm542 = vnez %v538
        %vm543 = vnez %v539
        %vm544 = vnez %v540
        %vm545 = vnez %v541
        %v546 = vld [vmem:[%s3] sm:$0xf]
        %v547 = vld [vmem:[%s3 + $0x4] sm:$0xf]
        %v548 = vld [vmem:[%s3 + $0x8] sm:$0xf]
        %v549 = vld [vmem:[%s3 + $0xc] sm:$0xf]
        %v550 = vld [vmem:[%s3 + $0x10] sm:$0xf]
        %v551 = vld [vmem:[%s3 + $0x14] sm:$0xf]
        %v552 = vld [vmem:[%s3 + $0x18] sm:$0xf]
        %v553 = vld [vmem:[%s3 + $0x1c] sm:$0xf]
        %v554 = vld [vmem:[%s3 + $0x20] sm:$0xf]
        %v555 = vld [vmem:[%s3 + $0x24] sm:$0xf]
        %v556 = vld [vmem:[%s3 + $0x28] sm:$0xf]
        %v557 = vld [vmem:[%s3 + $0x2c] sm:$0xf]
        %v558 = vld [vmem:[%s4] sm:$0xff]
        %v559 = vld [vmem:[%s4 + $0x8] sm:$0xff]
        %v560 = vld [vmem:[%s4 + $0x10] sm:$0xff]
        %v561 = vld [vmem:[%s4 + $0x18] sm:$0xff]
        %v562 = vld [vmem:[%s4 + $0x20] sm:$0xff]
        %v563 = vld [vmem:[%s4 + $0x28] sm:$0xff]
        %v564 = vld [vmem:[%s4 + $0x30] sm:$0xff]
        %v565 = vld [vmem:[%s4 + $0x38] sm:$0xff]
        %v566 = vld [vmem:[%s4 + $0x40] sm:$0xff]
        %v567 = vld [vmem:[%s4 + $0x48] sm:$0xff]
        %v568 = vld [vmem:[%s4 + $0x50] sm:$0xff]
        %v569 = vld [vmem:[%s4 + $0x58] sm:$0xff]
        %571 = vset.pattern.permute.xlu0 0
        %572 = vperm.xlu0 %571, %v558
        %v573 = vpop.permute.xlu0 %572
        %576 = vset.pattern.permute.xlu0 0
        %577 = vperm.xlu0 %576, %v559
        %v578 = vpop.permute.xlu0 %577
        %581 = vset.pattern.permute.xlu0 0
        %582 = vperm.xlu0 %581, %v560
        %v583 = vpop.permute.xlu0 %582
        %586 = vset.pattern.permute.xlu0 0
        %587 = vperm.xlu0 %586, %v561
        %v588 = vpop.permute.xlu0 %587
        %591 = vset.pattern.permute.xlu0 0
        %592 = vperm.xlu0 %591, %v562
        %v593 = vpop.permute.xlu0 %592
        %596 = vset.pattern.permute.xlu0 0
        %597 = vperm.xlu0 %596, %v563
        %v598 = vpop.permute.xlu0 %597
        %601 = vset.pattern.permute.xlu0 0
        %602 = vperm.xlu0 %601, %v564
        %v603 = vpop.permute.xlu0 %602
        %606 = vset.pattern.permute.xlu0 0
        %607 = vperm.xlu0 %606, %v565
        %v608 = vpop.permute.xlu0 %607
        %611 = vset.pattern.permute.xlu0 0
        %612 = vperm.xlu0 %611, %v566
        %v613 = vpop.permute.xlu0 %612
        %616 = vset.pattern.permute.xlu0 0
        %617 = vperm.xlu0 %616, %v567
        %v618 = vpop.permute.xlu0 %617
        %621 = vset.pattern.permute.xlu0 0
        %622 = vperm.xlu0 %621, %v568
        %v623 = vpop.permute.xlu0 %622
        %626 = vset.pattern.permute.xlu0 0
        %627 = vperm.xlu0 %626, %v569
        %v628 = vpop.permute.xlu0 %627
        %v642 = vunpack.c.l.b16 %v546
        %v643 = vunpack.c.l.b16 %v547
        %v644 = vunpack.c.l.b16 %v548
        %v645 = vunpack.c.l.b16 %v549
        %v646 = vunpack.c.l.b16 %v550
        %v647 = vunpack.c.l.b16 %v551
        %v648 = vunpack.c.l.b16 %v552
        %v649 = vunpack.c.l.b16 %v553
        %v650 = vunpack.c.l.b16 %v554
        %v651 = vunpack.c.l.b16 %v555
        %v652 = vunpack.c.l.b16 %v556
        %v653 = vunpack.c.l.b16 %v557
        %v654 = vpack.c.b16 %v643, %v642
        %v655 = vpack.c.b16 %v645, %v644
        %v656 = vpack.c.b16 %v647, %v646
        %v657 = vpack.c.b16 %v649, %v648
        %v658 = vpack.c.b16 %v651, %v650
        %v659 = vpack.c.b16 %v653, %v652
        %v664 = vunpack.c.l.b16 %v534
        %v665 = vunpack.c.l.b16 %v535
        %v666 = vunpack.c.l.b16 %v536
        %v667 = vunpack.c.l.b16 %v537
        %v668 = vpack.c.b16 %v665, %v664
        %v669 = vpack.c.b16 %v667, %v666
        %vm672 = vcmask 261120
        %v674 = vsel %vm672, %v654, 0
        %v677 = vsel %vm672, %v655, 0
        %v680 = vsel %vm672, %v656, 0
        %v683 = vsel %vm672, %v657, 0
        %v686 = vsel %vm672, %v658, 0
        %v689 = vsel %vm672, %v659, 0
        %691 = vmatpush.bf16.msra.mxu0 0
        %692 = vmatpush.bf16.msra.mxu0 0
        %693 = vmatpush.bf16.msra.mxu0 0
        %694 = vmatpush.bf16.msra.mxu0 0
        %695 = vmatpush.bf16.msra.mxu0 0
        %696 = vmatpush.bf16.msra.mxu0 0
        %697 = vmatpush.bf16.msra.mxu0 %v669
        %698 = vmatpush.bf16.msra.mxu0 %v668
        %699 = vmatmul.bf16.gmra.mxu0 %v674
        %v700 = vpop.f32.mrf.mxu0
        %v701 = vadd.f32 %v573, %v700
        %v702 = vpop.f32.mrf.mxu0
        %v703 = vadd.f32 %v578, %v702
        %704 = vmatmul.bf16.gmra.mxu0 %v677
        %v705 = vpop.f32.mrf.mxu0
        %v706 = vadd.f32 %v583, %v705
        %v707 = vpop.f32.mrf.mxu0
        %v708 = vadd.f32 %v588, %v707
        %709 = vmatmul.bf16.gmra.mxu0 %v680
        %v710 = vpop.f32.mrf.mxu0
        %v711 = vadd.f32 %v593, %v710
        %v712 = vpop.f32.mrf.mxu0
        %v713 = vadd.f32 %v598, %v712
        %714 = vmatmul.bf16.gmra.mxu0 %v683
        %v715 = vpop.f32.mrf.mxu0
        %v716 = vadd.f32 %v603, %v715
        %v717 = vpop.f32.mrf.mxu0
        %v718 = vadd.f32 %v608, %v717
        %719 = vmatmul.bf16.gmra.mxu0 %v686
        %v720 = vpop.f32.mrf.mxu0
        %v721 = vadd.f32 %v613, %v720
        %v722 = vpop.f32.mrf.mxu0
        %v723 = vadd.f32 %v618, %v722
        %724 = vmatmul.bf16.gmra.mxu0 %v689
        %v725 = vpop.f32.mrf.mxu0
        %v726 = vadd.f32 %v623, %v725
        %v727 = vpop.f32.mrf.mxu0
        %v728 = vadd.f32 %v628, %v727
        %729 = vdwg.mxu0
        %730 = vxpose.xlu0.b32.start [1/16] %v701, 128
        %731 = vxpose.xlu0.b32.cont [2/16] 0.0, 128
        %732 = vxpose.xlu0.b32.cont [3/16] 0.0, 128
        %733 = vxpose.xlu0.b32.cont [4/16] 0.0, 128
        %734 = vxpose.xlu0.b32.cont [5/16] 0.0, 128
        %735 = vxpose.xlu0.b32.cont [6/16] 0.0, 128
        %736 = vxpose.xlu0.b32.cont [7/16] 0.0, 128
        %737 = vxpose.xlu0.b32.cont [8/16] 0.0, 128
        %738 = vxpose.xlu0.b32.cont [9/16] 0.0, 128
        %739 = vxpose.xlu0.b32.cont [10/16] 0.0, 128
        %740 = vxpose.xlu0.b32.cont [11/16] 0.0, 128
        %741 = vxpose.xlu0.b32.cont [12/16] 0.0, 128
        %742 = vxpose.xlu0.b32.cont [13/16] 0.0, 128
        %743 = vxpose.xlu0.b32.cont [14/16] 0.0, 128
        %744 = vxpose.xlu0.b32.cont [15/16] 0.0, 128
        %745 = vxpose.xlu0.b32.end [16/16] 0.0, 128
        %v746 = vpop.trf.xlu0
        %v747 = vpop.trf.xlu0
        %v748 = vpop.trf.xlu0
        %v749 = vpop.trf.xlu0
        %v750 = vpop.trf.xlu0
        %v751 = vpop.trf.xlu0
        %v752 = vpop.trf.xlu0
        %v753 = vpop.trf.xlu0
        %v754 = vpop.trf.xlu0
        %v755 = vpop.trf.xlu0
        %v756 = vpop.trf.xlu0
        %v757 = vpop.trf.xlu0
        %v758 = vpop.trf.xlu0
        %v759 = vpop.trf.xlu0
        %v760 = vpop.trf.xlu0
        %v761 = vpop.trf.xlu0
        %762 = vxpose.xlu0.b32.start [1/16] %v703, 128
        %763 = vxpose.xlu0.b32.cont [2/16] 0.0, 128
        %764 = vxpose.xlu0.b32.cont [3/16] 0.0, 128
        %765 = vxpose.xlu0.b32.cont [4/16] 0.0, 128
        %766 = vxpose.xlu0.b32.cont [5/16] 0.0, 128
        %767 = vxpose.xlu0.b32.cont [6/16] 0.0, 128
        %768 = vxpose.xlu0.b32.cont [7/16] 0.0, 128
        %769 = vxpose.xlu0.b32.cont [8/16] 0.0, 128
        %770 = vxpose.xlu0.b32.cont [9/16] 0.0, 128
        %771 = vxpose.xlu0.b32.cont [10/16] 0.0, 128
        %772 = vxpose.xlu0.b32.cont [11/16] 0.0, 128
        %773 = vxpose.xlu0.b32.cont [12/16] 0.0, 128
        %774 = vxpose.xlu0.b32.cont [13/16] 0.0, 128
        %775 = vxpose.xlu0.b32.cont [14/16] 0.0, 128
        %776 = vxpose.xlu0.b32.cont [15/16] 0.0, 128
        %777 = vxpose.xlu0.b32.end [16/16] 0.0, 128
        %v778 = vpop.trf.xlu0
        %v779 = vpop.trf.xlu0
        %v780 = vpop.trf.xlu0
        %v781 = vpop.trf.xlu0
        %v782 = vpop.trf.xlu0
        %v783 = vpop.trf.xlu0
        %v784 = vpop.trf.xlu0
        %v785 = vpop.trf.xlu0
        %v786 = vpop.trf.xlu0
        %v787 = vpop.trf.xlu0
        %v788 = vpop.trf.xlu0
        %v789 = vpop.trf.xlu0
        %v790 = vpop.trf.xlu0
        %v791 = vpop.trf.xlu0
        %v792 = vpop.trf.xlu0
        %v793 = vpop.trf.xlu0
        %794 = vxpose.xlu0.b32.start [1/16] %v706, 128
        %795 = vxpose.xlu0.b32.cont [2/16] 0.0, 128
        %796 = vxpose.xlu0.b32.cont [3/16] 0.0, 128
        %797 = vxpose.xlu0.b32.cont [4/16] 0.0, 128
        %798 = vxpose.xlu0.b32.cont [5/16] 0.0, 128
        %799 = vxpose.xlu0.b32.cont [6/16] 0.0, 128
        %800 = vxpose.xlu0.b32.cont [7/16] 0.0, 128
        %801 = vxpose.xlu0.b32.cont [8/16] 0.0, 128
        %802 = vxpose.xlu0.b32.cont [9/16] 0.0, 128
        %803 = vxpose.xlu0.b32.cont [10/16] 0.0, 128
        %804 = vxpose.xlu0.b32.cont [11/16] 0.0, 128
        %805 = vxpose.xlu0.b32.cont [12/16] 0.0, 128
        %806 = vxpose.xlu0.b32.cont [13/16] 0.0, 128
        %807 = vxpose.xlu0.b32.cont [14/16] 0.0, 128
        %808 = vxpose.xlu0.b32.cont [15/16] 0.0, 128
        %809 = vxpose.xlu0.b32.end [16/16] 0.0, 128
        %v810 = vpop.trf.xlu0
        %v811 = vpop.trf.xlu0
        %v812 = vpop.trf.xlu0
        %v813 = vpop.trf.xlu0
        %v814 = vpop.trf.xlu0
        %v815 = vpop.trf.xlu0
        %v816 = vpop.trf.xlu0
        %v817 = vpop.trf.xlu0
        %v818 = vpop.trf.xlu0
        %v819 = vpop.trf.xlu0
        %v820 = vpop.trf.xlu0
        %v821 = vpop.trf.xlu0
        %v822 = vpop.trf.xlu0
        %v823 = vpop.trf.xlu0
        %v824 = vpop.trf.xlu0
        %v825 = vpop.trf.xlu0
        %826 = vxpose.xlu0.b32.start [1/16] %v708, 128
        %827 = vxpose.xlu0.b32.cont [2/16] 0.0, 128
        %828 = vxpose.xlu0.b32.cont [3/16] 0.0, 128
        %829 = vxpose.xlu0.b32.cont [4/16] 0.0, 128
        %830 = vxpose.xlu0.b32.cont [5/16] 0.0, 128
        %831 = vxpose.xlu0.b32.cont [6/16] 0.0, 128
        %832 = vxpose.xlu0.b32.cont [7/16] 0.0, 128
        %833 = vxpose.xlu0.b32.cont [8/16] 0.0, 128
        %834 = vxpose.xlu0.b32.cont [9/16] 0.0, 128
        %835 = vxpose.xlu0.b32.cont [10/16] 0.0, 128
        %836 = vxpose.xlu0.b32.cont [11/16] 0.0, 128
        %837 = vxpose.xlu0.b32.cont [12/16] 0.0, 128
        %838 = vxpose.xlu0.b32.cont [13/16] 0.0, 128
        %839 = vxpose.xlu0.b32.cont [14/16] 0.0, 128
        %840 = vxpose.xlu0.b32.cont [15/16] 0.0, 128
        %841 = vxpose.xlu0.b32.end [16/16] 0.0, 128
        %v842 = vpop.trf.xlu0
        %v843 = vpop.trf.xlu0
        %v844 = vpop.trf.xlu0
        %v845 = vpop.trf.xlu0
        %v846 = vpop.trf.xlu0
        %v847 = vpop.trf.xlu0
        %v848 = vpop.trf.xlu0
        %v849 = vpop.trf.xlu0
        %v850 = vpop.trf.xlu0
        %v851 = vpop.trf.xlu0
        %v852 = vpop.trf.xlu0
        %v853 = vpop.trf.xlu0
        %v854 = vpop.trf.xlu0
        %v855 = vpop.trf.xlu0
        %v856 = vpop.trf.xlu0
        %v857 = vpop.trf.xlu0
        %v858 = vpack.c.bf16 %v746, %v746
        %v859 = vpack.c.bf16 %v747, %v747
        %v860 = vpack.c.bf16 %v748, %v748
        %v861 = vpack.c.bf16 %v749, %v749
        %v862 = vpack.c.bf16 %v750, %v750
        %v863 = vpack.c.bf16 %v751, %v751
        %v864 = vpack.c.bf16 %v752, %v752
        %v865 = vpack.c.bf16 %v753, %v753
        %v866 = vpack.c.bf16 %v754, %v754
        %v867 = vpack.c.bf16 %v755, %v755
        %v868 = vpack.c.bf16 %v756, %v756
        %v869 = vpack.c.bf16 %v757, %v757
        %v870 = vpack.c.bf16 %v758, %v758
        %v871 = vpack.c.bf16 %v759, %v759
        %v872 = vpack.c.bf16 %v760, %v760
        %v873 = vpack.c.bf16 %v761, %v761
        %v874 = vpack.c.bf16 %v778, %v778
        %v875 = vpack.c.bf16 %v779, %v779
        %v876 = vpack.c.bf16 %v780, %v780
        %v877 = vpack.c.bf16 %v781, %v781
        %v878 = vpack.c.bf16 %v782, %v782
        %v879 = vpack.c.bf16 %v783, %v783
        %v880 = vpack.c.bf16 %v784, %v784
        %v881 = vpack.c.bf16 %v785, %v785
        %v882 = vpack.c.bf16 %v786, %v786
        %v883 = vpack.c.bf16 %v787, %v787
        %v884 = vpack.c.bf16 %v788, %v788
        %v885 = vpack.c.bf16 %v789, %v789
        %v886 = vpack.c.bf16 %v790, %v790
        %v887 = vpack.c.bf16 %v791, %v791
        %v888 = vpack.c.bf16 %v792, %v792
        %v889 = vpack.c.bf16 %v793, %v793
        %v890 = vpack.c.bf16 %v810, %v810
        %v891 = vpack.c.bf16 %v811, %v811
        %v892 = vpack.c.bf16 %v812, %v812
        %v893 = vpack.c.bf16 %v813, %v813
        %v894 = vpack.c.bf16 %v814, %v814
        %v895 = vpack.c.bf16 %v815, %v815
        %v896 = vpack.c.bf16 %v816, %v816
        %v897 = vpack.c.bf16 %v817, %v817
        %v898 = vpack.c.bf16 %v818, %v818
        %v899 = vpack.c.bf16 %v819, %v819
        %v900 = vpack.c.bf16 %v820, %v820
        %v901 = vpack.c.bf16 %v821, %v821
        %v902 = vpack.c.bf16 %v822, %v822
        %v903 = vpack.c.bf16 %v823, %v823
        %v904 = vpack.c.bf16 %v824, %v824
        %v905 = vpack.c.bf16 %v825, %v825
        %v906 = vpack.c.bf16 %v842, %v842
        %v907 = vpack.c.bf16 %v843, %v843
        %v908 = vpack.c.bf16 %v844, %v844
        %v909 = vpack.c.bf16 %v845, %v845
        %v910 = vpack.c.bf16 %v846, %v846
        %v911 = vpack.c.bf16 %v847, %v847
        %v912 = vpack.c.bf16 %v848, %v848
        %v913 = vpack.c.bf16 %v849, %v849
        %v914 = vpack.c.bf16 %v850, %v850
        %v915 = vpack.c.bf16 %v851, %v851
        %v916 = vpack.c.bf16 %v852, %v852
        %v917 = vpack.c.bf16 %v853, %v853
        %v918 = vpack.c.bf16 %v854, %v854
        %v919 = vpack.c.bf16 %v855, %v855
        %v920 = vpack.c.bf16 %v856, %v856
        %v921 = vpack.c.bf16 %v857, %v857
        %v922 = vpack.c.bf16 %v711, %v711
        %v923 = vpack.c.bf16 %v713, %v713
        %v924 = vpack.c.bf16 %v716, %v716
        %v925 = vpack.c.bf16 %v718, %v718
        %v926 = vpack.c.bf16 %v721, %v721
        %v927 = vpack.c.bf16 %v723, %v723
        %v928 = vpack.c.bf16 %v726, %v726
        %v929 = vpack.c.bf16 %v728, %v728
        %v946 = vunpack.c.l.b16 %v858
        %v947 = vunpack.c.l.b16 %v859
        %v948 = vunpack.c.l.b16 %v860
        %v949 = vunpack.c.l.b16 %v861
        %v950 = vunpack.c.l.b16 %v862
        %v951 = vunpack.c.l.b16 %v863
        %v952 = vunpack.c.l.b16 %v864
        %v953 = vunpack.c.l.b16 %v865
        %v954 = vunpack.c.l.b16 %v866
        %v955 = vunpack.c.l.b16 %v867
        %v956 = vunpack.c.l.b16 %v868
        %v957 = vunpack.c.l.b16 %v869
        %v958 = vunpack.c.l.b16 %v870
        %v959 = vunpack.c.l.b16 %v871
        %v960 = vunpack.c.l.b16 %v872
        %v961 = vunpack.c.l.b16 %v873
        %v962 = vpack.c.b16 %v947, %v946
        %v963 = vpack.c.b16 %v949, %v948
        %v964 = vpack.c.b16 %v951, %v950
        %v965 = vpack.c.b16 %v953, %v952
        %v966 = vpack.c.b16 %v955, %v954
        %v967 = vpack.c.b16 %v957, %v956
        %v968 = vpack.c.b16 %v959, %v958
        %v969 = vpack.c.b16 %v961, %v960
        %vm970 = vcmask 64512
        %v972 = vsel %vm970, %v962, 0
        %v975 = vsel %vm970, %v963, 0
        %v978 = vsel %vm970, %v964, 0
        %v981 = vsel %vm970, %v965, 0
        %v984 = vsel %vm970, %v966, 0
        %v987 = vsel %vm970, %v967, 0
        %v990 = vsel %vm970, %v968, 0
        %v993 = vsel %vm970, %v969, 0
        %vm995 = vcmask 1043456
        %v997 = vsel %vm995, %v922, 0
        %999 = vmatpush.bf16.msra.mxu0 0
        %1000 = vmatpush.bf16.msra.mxu0 0
        %1001 = vmatpush.bf16.msra.mxu0 0
        %1002 = vmatpush.bf16.msra.mxu0 0
        %1003 = vmatpush.bf16.msra.mxu0 0
        %1004 = vmatpush.bf16.msra.mxu0 0
        %1005 = vmatpush.bf16.msra.mxu0 0
        %1006 = vmatpush.bf16.msra.mxu0 %v997
        %1007 = vmatmul.bf16.gmra.mxu0 %v972
        %v1008 = vpop.f32.mrf.mxu0
        %v1009 = vadd.f32 0.0, %v1008
        %v1010 = vpop.f32.mrf.mxu0
        %v1011 = vadd.f32 0.0, %v1010
        %1012 = vmatmul.bf16.gmra.mxu0 %v975
        %v1013 = vpop.f32.mrf.mxu0
        %v1014 = vadd.f32 0.0, %v1013
        %v1015 = vpop.f32.mrf.mxu0
        %v1016 = vadd.f32 0.0, %v1015
        %1017 = vmatmul.bf16.gmra.mxu0 %v978
        %v1018 = vpop.f32.mrf.mxu0
        %v1019 = vadd.f32 0.0, %v1018
        %v1020 = vpop.f32.mrf.mxu0
        %v1021 = vadd.f32 0.0, %v1020
        %1022 = vmatmul.bf16.gmra.mxu0 %v981
        %v1023 = vpop.f32.mrf.mxu0
        %v1024 = vadd.f32 0.0, %v1023
        %v1025 = vpop.f32.mrf.mxu0
        %v1026 = vadd.f32 0.0, %v1025
        %1027 = vmatmul.bf16.gmra.mxu0 %v984
        %v1028 = vpop.f32.mrf.mxu0
        %v1029 = vadd.f32 0.0, %v1028
        %v1030 = vpop.f32.mrf.mxu0
        %v1031 = vadd.f32 0.0, %v1030
        %1032 = vmatmul.bf16.gmra.mxu0 %v987
        %v1033 = vpop.f32.mrf.mxu0
        %v1034 = vadd.f32 0.0, %v1033
        %v1035 = vpop.f32.mrf.mxu0
        %v1036 = vadd.f32 0.0, %v1035
        %1037 = vmatmul.bf16.gmra.mxu0 %v990
        %v1038 = vpop.f32.mrf.mxu0
        %v1039 = vadd.f32 0.0, %v1038
        %v1040 = vpop.f32.mrf.mxu0
        %v1041 = vadd.f32 0.0, %v1040
        %1042 = vmatmul.bf16.gmra.mxu0 %v993
        %v1043 = vpop.f32.mrf.mxu0
        %v1044 = vadd.f32 0.0, %v1043
        %v1045 = vpop.f32.mrf.mxu0
        %v1046 = vadd.f32 0.0, %v1045
        %1047 = vdwg.mxu0
        %v1064 = vunpack.c.l.b16 %v874
        %v1065 = vunpack.c.l.b16 %v875
        %v1066 = vunpack.c.l.b16 %v876
        %v1067 = vunpack.c.l.b16 %v877
        %v1068 = vunpack.c.l.b16 %v878
        %v1069 = vunpack.c.l.b16 %v879
        %v1070 = vunpack.c.l.b16 %v880
        %v1071 = vunpack.c.l.b16 %v881
        %v1072 = vunpack.c.l.b16 %v882
        %v1073 = vunpack.c.l.b16 %v883
        %v1074 = vunpack.c.l.b16 %v884
        %v1075 = vunpack.c.l.b16 %v885
        %v1076 = vunpack.c.l.b16 %v886
        %v1077 = vunpack.c.l.b16 %v887
        %v1078 = vunpack.c.l.b16 %v888
        %v1079 = vunpack.c.l.b16 %v889
        %v1080 = vpack.c.b16 %v1065, %v1064
        %v1081 = vpack.c.b16 %v1067, %v1066
        %v1082 = vpack.c.b16 %v1069, %v1068
        %v1083 = vpack.c.b16 %v1071, %v1070
        %v1084 = vpack.c.b16 %v1073, %v1072
        %v1085 = vpack.c.b16 %v1075, %v1074
        %v1086 = vpack.c.b16 %v1077, %v1076
        %v1087 = vpack.c.b16 %v1079, %v1078
        %v1089 = vsel %vm970, %v1080, 0
        %v1092 = vsel %vm970, %v1081, 0
        %v1095 = vsel %vm970, %v1082, 0
        %v1098 = vsel %vm970, %v1083, 0
        %v1101 = vsel %vm970, %v1084, 0
        %v1104 = vsel %vm970, %v1085, 0
        %v1107 = vsel %vm970, %v1086, 0
        %v1110 = vsel %vm970, %v1087, 0
        %v1113 = vsel %vm995, %v923, 0
        %1115 = vmatpush.bf16.msra.mxu0 0
        %1116 = vmatpush.bf16.msra.mxu0 0
        %1117 = vmatpush.bf16.msra.mxu0 0
        %1118 = vmatpush.bf16.msra.mxu0 0
        %1119 = vmatpush.bf16.msra.mxu0 0
        %1120 = vmatpush.bf16.msra.mxu0 0
        %1121 = vmatpush.bf16.msra.mxu0 0
        %1122 = vmatpush.bf16.msra.mxu0 %v1113
        %1123 = vmatmul.bf16.gmra.mxu0 %v1089
        %v1124 = vpop.f32.mrf.mxu0
        %v1125 = vadd.f32 0.0, %v1124
        %v1126 = vpop.f32.mrf.mxu0
        %v1127 = vadd.f32 0.0, %v1126
        %1128 = vmatmul.bf16.gmra.mxu0 %v1092
        %v1129 = vpop.f32.mrf.mxu0
        %v1130 = vadd.f32 0.0, %v1129
        %v1131 = vpop.f32.mrf.mxu0
        %v1132 = vadd.f32 0.0, %v1131
        %1133 = vmatmul.bf16.gmra.mxu0 %v1095
        %v1134 = vpop.f32.mrf.mxu0
        %v1135 = vadd.f32 0.0, %v1134
        %v1136 = vpop.f32.mrf.mxu0
        %v1137 = vadd.f32 0.0, %v1136
        %1138 = vmatmul.bf16.gmra.mxu0 %v1098
        %v1139 = vpop.f32.mrf.mxu0
        %v1140 = vadd.f32 0.0, %v1139
        %v1141 = vpop.f32.mrf.mxu0
        %v1142 = vadd.f32 0.0, %v1141
        %1143 = vmatmul.bf16.gmra.mxu0 %v1101
        %v1144 = vpop.f32.mrf.mxu0
        %v1145 = vadd.f32 0.0, %v1144
        %v1146 = vpop.f32.mrf.mxu0
        %v1147 = vadd.f32 0.0, %v1146
        %1148 = vmatmul.bf16.gmra.mxu0 %v1104
        %v1149 = vpop.f32.mrf.mxu0
        %v1150 = vadd.f32 0.0, %v1149
        %v1151 = vpop.f32.mrf.mxu0
        %v1152 = vadd.f32 0.0, %v1151
        %1153 = vmatmul.bf16.gmra.mxu0 %v1107
        %v1154 = vpop.f32.mrf.mxu0
        %v1155 = vadd.f32 0.0, %v1154
        %v1156 = vpop.f32.mrf.mxu0
        %v1157 = vadd.f32 0.0, %v1156
        %1158 = vmatmul.bf16.gmra.mxu0 %v1110
        %v1159 = vpop.f32.mrf.mxu0
        %v1160 = vadd.f32 0.0, %v1159
        %v1161 = vpop.f32.mrf.mxu0
        %v1162 = vadd.f32 0.0, %v1161
        %1163 = vdwg.mxu0
        %v1180 = vunpack.c.l.b16 %v890
        %v1181 = vunpack.c.l.b16 %v891
        %v1182 = vunpack.c.l.b16 %v892
        %v1183 = vunpack.c.l.b16 %v893
        %v1184 = vunpack.c.l.b16 %v894
        %v1185 = vunpack.c.l.b16 %v895
        %v1186 = vunpack.c.l.b16 %v896
        %v1187 = vunpack.c.l.b16 %v897
        %v1188 = vunpack.c.l.b16 %v898
        %v1189 = vunpack.c.l.b16 %v899
        %v1190 = vunpack.c.l.b16 %v900
        %v1191 = vunpack.c.l.b16 %v901
        %v1192 = vunpack.c.l.b16 %v902
        %v1193 = vunpack.c.l.b16 %v903
        %v1194 = vunpack.c.l.b16 %v904
        %v1195 = vunpack.c.l.b16 %v905
        %v1196 = vpack.c.b16 %v1181, %v1180
        %v1197 = vpack.c.b16 %v1183, %v1182
        %v1198 = vpack.c.b16 %v1185, %v1184
        %v1199 = vpack.c.b16 %v1187, %v1186
        %v1200 = vpack.c.b16 %v1189, %v1188
        %v1201 = vpack.c.b16 %v1191, %v1190
        %v1202 = vpack.c.b16 %v1193, %v1192
        %v1203 = vpack.c.b16 %v1195, %v1194
        %v1205 = vsel %vm970, %v1196, 0
        %v1208 = vsel %vm970, %v1197, 0
        %v1211 = vsel %vm970, %v1198, 0
        %v1214 = vsel %vm970, %v1199, 0
        %v1217 = vsel %vm970, %v1200, 0
        %v1220 = vsel %vm970, %v1201, 0
        %v1223 = vsel %vm970, %v1202, 0
        %v1226 = vsel %vm970, %v1203, 0
        %v1229 = vsel %vm995, %v924, 0
        %1231 = vmatpush.bf16.msra.mxu0 0
        %1232 = vmatpush.bf16.msra.mxu0 0
        %1233 = vmatpush.bf16.msra.mxu0 0
        %1234 = vmatpush.bf16.msra.mxu0 0
        %1235 = vmatpush.bf16.msra.mxu0 0
        %1236 = vmatpush.bf16.msra.mxu0 0
        %1237 = vmatpush.bf16.msra.mxu0 0
        %1238 = vmatpush.bf16.msra.mxu0 %v1229
        %1239 = vmatmul.bf16.gmra.mxu0 %v1205
        %v1240 = vpop.f32.mrf.mxu0
        %v1241 = vadd.f32 0.0, %v1240
        %v1242 = vpop.f32.mrf.mxu0
        %v1243 = vadd.f32 0.0, %v1242
        %1244 = vmatmul.bf16.gmra.mxu0 %v1208
        %v1245 = vpop.f32.mrf.mxu0
        %v1246 = vadd.f32 0.0, %v1245
        %v1247 = vpop.f32.mrf.mxu0
        %v1248 = vadd.f32 0.0, %v1247
        %1249 = vmatmul.bf16.gmra.mxu0 %v1211
        %v1250 = vpop.f32.mrf.mxu0
        %v1251 = vadd.f32 0.0, %v1250
        %v1252 = vpop.f32.mrf.mxu0
        %v1253 = vadd.f32 0.0, %v1252
        %1254 = vmatmul.bf16.gmra.mxu0 %v1214
        %v1255 = vpop.f32.mrf.mxu0
        %v1256 = vadd.f32 0.0, %v1255
        %v1257 = vpop.f32.mrf.mxu0
        %v1258 = vadd.f32 0.0, %v1257
        %1259 = vmatmul.bf16.gmra.mxu0 %v1217
        %v1260 = vpop.f32.mrf.mxu0
        %v1261 = vadd.f32 0.0, %v1260
        %v1262 = vpop.f32.mrf.mxu0
        %v1263 = vadd.f32 0.0, %v1262
        %1264 = vmatmul.bf16.gmra.mxu0 %v1220
        %v1265 = vpop.f32.mrf.mxu0
        %v1266 = vadd.f32 0.0, %v1265
        %v1267 = vpop.f32.mrf.mxu0
        %v1268 = vadd.f32 0.0, %v1267
        %1269 = vmatmul.bf16.gmra.mxu0 %v1223
        %v1270 = vpop.f32.mrf.mxu0
        %v1271 = vadd.f32 0.0, %v1270
        %v1272 = vpop.f32.mrf.mxu0
        %v1273 = vadd.f32 0.0, %v1272
        %1274 = vmatmul.bf16.gmra.mxu0 %v1226
        %v1275 = vpop.f32.mrf.mxu0
        %v1276 = vadd.f32 0.0, %v1275
        %v1277 = vpop.f32.mrf.mxu0
        %v1278 = vadd.f32 0.0, %v1277
        %1279 = vdwg.mxu0
        %v1296 = vunpack.c.l.b16 %v906
        %v1297 = vunpack.c.l.b16 %v907
        %v1298 = vunpack.c.l.b16 %v908
        %v1299 = vunpack.c.l.b16 %v909
        %v1300 = vunpack.c.l.b16 %v910
        %v1301 = vunpack.c.l.b16 %v911
        %v1302 = vunpack.c.l.b16 %v912
        %v1303 = vunpack.c.l.b16 %v913
        %v1304 = vunpack.c.l.b16 %v914
        %v1305 = vunpack.c.l.b16 %v915
        %v1306 = vunpack.c.l.b16 %v916
        %v1307 = vunpack.c.l.b16 %v917
        %v1308 = vunpack.c.l.b16 %v918
        %v1309 = vunpack.c.l.b16 %v919
        %v1310 = vunpack.c.l.b16 %v920
        %v1311 = vunpack.c.l.b16 %v921
        %v1312 = vpack.c.b16 %v1297, %v1296
        %v1313 = vpack.c.b16 %v1299, %v1298
        %v1314 = vpack.c.b16 %v1301, %v1300
        %v1315 = vpack.c.b16 %v1303, %v1302
        %v1316 = vpack.c.b16 %v1305, %v1304
        %v1317 = vpack.c.b16 %v1307, %v1306
        %v1318 = vpack.c.b16 %v1309, %v1308
        %v1319 = vpack.c.b16 %v1311, %v1310
        %v1321 = vsel %vm970, %v1312, 0
        %v1324 = vsel %vm970, %v1313, 0
        %v1327 = vsel %vm970, %v1314, 0
        %v1330 = vsel %vm970, %v1315, 0
        %v1333 = vsel %vm970, %v1316, 0
        %v1336 = vsel %vm970, %v1317, 0
        %v1339 = vsel %vm970, %v1318, 0
        %v1342 = vsel %vm970, %v1319, 0
        %v1345 = vsel %vm995, %v925, 0
        %1347 = vmatpush.bf16.msra.mxu0 0
        %1348 = vmatpush.bf16.msra.mxu0 0
        %1349 = vmatpush.bf16.msra.mxu0 0
        %1350 = vmatpush.bf16.msra.mxu0 0
        %1351 = vmatpush.bf16.msra.mxu0 0
        %1352 = vmatpush.bf16.msra.mxu0 0
        %1353 = vmatpush.bf16.msra.mxu0 0
        %1354 = vmatpush.bf16.msra.mxu0 %v1345
        %1355 = vmatmul.bf16.gmra.mxu0 %v1321
        %v1356 = vpop.f32.mrf.mxu0
        %v1357 = vadd.f32 0.0, %v1356
        %v1358 = vpop.f32.mrf.mxu0
        %v1359 = vadd.f32 0.0, %v1358
        %1360 = vmatmul.bf16.gmra.mxu0 %v1324
        %v1361 = vpop.f32.mrf.mxu0
        %v1362 = vadd.f32 0.0, %v1361
        %v1363 = vpop.f32.mrf.mxu0
        %v1364 = vadd.f32 0.0, %v1363
        %1365 = vmatmul.bf16.gmra.mxu0 %v1327
        %v1366 = vpop.f32.mrf.mxu0
        %v1367 = vadd.f32 0.0, %v1366
        %v1368 = vpop.f32.mrf.mxu0
        %v1369 = vadd.f32 0.0, %v1368
        %1370 = vmatmul.bf16.gmra.mxu0 %v1330
        %v1371 = vpop.f32.mrf.mxu0
        %v1372 = vadd.f32 0.0, %v1371
        %v1373 = vpop.f32.mrf.mxu0
        %v1374 = vadd.f32 0.0, %v1373
        %1375 = vmatmul.bf16.gmra.mxu0 %v1333
        %v1376 = vpop.f32.mrf.mxu0
        %v1377 = vadd.f32 0.0, %v1376
        %v1378 = vpop.f32.mrf.mxu0
        %v1379 = vadd.f32 0.0, %v1378
        %1380 = vmatmul.bf16.gmra.mxu0 %v1336
        %v1381 = vpop.f32.mrf.mxu0
        %v1382 = vadd.f32 0.0, %v1381
        %v1383 = vpop.f32.mrf.mxu0
        %v1384 = vadd.f32 0.0, %v1383
        %1385 = vmatmul.bf16.gmra.mxu0 %v1339
        %v1386 = vpop.f32.mrf.mxu0
        %v1387 = vadd.f32 0.0, %v1386
        %v1388 = vpop.f32.mrf.mxu0
        %v1389 = vadd.f32 0.0, %v1388
        %1390 = vmatmul.bf16.gmra.mxu0 %v1342
        %v1391 = vpop.f32.mrf.mxu0
        %v1392 = vadd.f32 0.0, %v1391
        %v1393 = vpop.f32.mrf.mxu0
        %v1394 = vadd.f32 0.0, %v1393
        %1395 = vdwg.mxu0
        %v1396 = vsel %vm542, 16843009, 0
        %v1397 = vsel %vm543, 16843009, 0
        %v1398 = vsel %vm544, 16843009, 0
        %v1399 = vsel %vm545, 16843009, 0
        %v1400 = vunpack.c.0.s8 %v1396
        %v1401 = vunpack.c.1.s8 %v1396
        %v1402 = vunpack.c.2.s8 %v1396
        %v1403 = vunpack.c.3.s8 %v1396
        %v1404 = vunpack.c.0.s8 %v1397
        %v1405 = vunpack.c.1.s8 %v1397
        %v1406 = vunpack.c.2.s8 %v1397
        %v1407 = vunpack.c.3.s8 %v1397
        %v1408 = vunpack.c.0.s8 %v1398
        %v1409 = vunpack.c.1.s8 %v1398
        %v1410 = vunpack.c.2.s8 %v1398
        %v1411 = vunpack.c.3.s8 %v1398
        %v1412 = vunpack.c.0.s8 %v1399
        %v1413 = vunpack.c.1.s8 %v1399
        %v1414 = vunpack.c.2.s8 %v1399
        %v1415 = vunpack.c.3.s8 %v1399
        %v1416 = vpack.c.b16 %v1400, %v1400
        %v1417 = vpack.c.b8 %v1416, %v1416
        %v1418 = vpack.c.b16 %v1401, %v1401
        %v1419 = vpack.c.b8 %v1418, %v1418
        %v1420 = vpack.c.b16 %v1402, %v1402
        %v1421 = vpack.c.b8 %v1420, %v1420
        %v1422 = vpack.c.b16 %v1403, %v1403
        %v1423 = vpack.c.b8 %v1422, %v1422
        %v1424 = vpack.c.b16 %v1404, %v1404
        %v1425 = vpack.c.b8 %v1424, %v1424
        %v1426 = vpack.c.b16 %v1405, %v1405
        %v1427 = vpack.c.b8 %v1426, %v1426
        %v1428 = vpack.c.b16 %v1406, %v1406
        %v1429 = vpack.c.b8 %v1428, %v1428
        %v1430 = vpack.c.b16 %v1407, %v1407
        %v1431 = vpack.c.b8 %v1430, %v1430
        %v1432 = vpack.c.b16 %v1408, %v1408
        %v1433 = vpack.c.b8 %v1432, %v1432
        %v1434 = vpack.c.b16 %v1409, %v1409
        %v1435 = vpack.c.b8 %v1434, %v1434
        %v1436 = vpack.c.b16 %v1410, %v1410
        %v1437 = vpack.c.b8 %v1436, %v1436
        %v1438 = vpack.c.b16 %v1411, %v1411
        %v1439 = vpack.c.b8 %v1438, %v1438
        %v1440 = vpack.c.b16 %v1412, %v1412
        %v1441 = vpack.c.b8 %v1440, %v1440
        %v1442 = vpack.c.b16 %v1413, %v1413
        %v1443 = vpack.c.b8 %v1442, %v1442
        %v1444 = vpack.c.b16 %v1414, %v1414
        %v1445 = vpack.c.b8 %v1444, %v1444
        %v1446 = vpack.c.b16 %v1415, %v1415
        %v1447 = vpack.c.b8 %v1446, %v1446
        %vm1448 = vnez %v1417
        %vm1449 = vnez %v1419
        %vm1450 = vnez %v1421
        %vm1451 = vnez %v1423
        %vm1452 = vnez %v1425
        %vm1453 = vnez %v1427
        %vm1454 = vnez %v1429
        %vm1455 = vnez %v1431
        %vm1456 = vnez %v1433
        %vm1457 = vnez %v1435
        %vm1458 = vnez %v1437
        %vm1459 = vnez %v1439
        %vm1460 = vnez %v1441
        %vm1461 = vnez %v1443
        %vm1462 = vnez %v1445
        %vm1463 = vnez %v1447
        %v1464 = vsel %vm1448, 16843009, 0
        %v1465 = vsel %vm1449, 16843009, 0
        %v1466 = vsel %vm1450, 16843009, 0
        %v1467 = vsel %vm1451, 16843009, 0
        %v1468 = vsel %vm1452, 16843009, 0
        %v1469 = vsel %vm1453, 16843009, 0
        %v1470 = vsel %vm1454, 16843009, 0
        %v1471 = vsel %vm1455, 16843009, 0
        %v1472 = vsel %vm1456, 16843009, 0
        %v1473 = vsel %vm1457, 16843009, 0
        %v1474 = vsel %vm1458, 16843009, 0
        %v1475 = vsel %vm1459, 16843009, 0
        %v1476 = vsel %vm1460, 16843009, 0
        %v1477 = vsel %vm1461, 16843009, 0
        %v1478 = vsel %vm1462, 16843009, 0
        %v1479 = vsel %vm1463, 16843009, 0
        %v1480 = vunpack.c.0.s8 %v1464
        %v1481 = vunpack.c.0.s8 %v1465
        %v1482 = vunpack.c.0.s8 %v1466
        %v1483 = vunpack.c.0.s8 %v1467
        %v1484 = vunpack.c.0.s8 %v1468
        %v1485 = vunpack.c.0.s8 %v1469
        %v1486 = vunpack.c.0.s8 %v1470
        %v1487 = vunpack.c.0.s8 %v1471
        %v1488 = vunpack.c.0.s8 %v1472
        %v1489 = vunpack.c.0.s8 %v1473
        %v1490 = vunpack.c.0.s8 %v1474
        %v1491 = vunpack.c.0.s8 %v1475
        %v1492 = vunpack.c.0.s8 %v1476
        %v1493 = vunpack.c.0.s8 %v1477
        %v1494 = vunpack.c.0.s8 %v1478
        %v1495 = vunpack.c.0.s8 %v1479
        %vm1496 = vcmp.ne.s32.totalorder %v1480, 0
        %vm1497 = vcmp.ne.s32.totalorder %v1481, 0
        %vm1498 = vcmp.ne.s32.totalorder %v1482, 0
        %vm1499 = vcmp.ne.s32.totalorder %v1483, 0
        %vm1500 = vcmp.ne.s32.totalorder %v1484, 0
        %vm1501 = vcmp.ne.s32.totalorder %v1485, 0
        %vm1502 = vcmp.ne.s32.totalorder %v1486, 0
        %vm1503 = vcmp.ne.s32.totalorder %v1487, 0
        %vm1504 = vcmp.ne.s32.totalorder %v1488, 0
        %vm1505 = vcmp.ne.s32.totalorder %v1489, 0
        %vm1506 = vcmp.ne.s32.totalorder %v1490, 0
        %vm1507 = vcmp.ne.s32.totalorder %v1491, 0
        %vm1508 = vcmp.ne.s32.totalorder %v1492, 0
        %vm1509 = vcmp.ne.s32.totalorder %v1493, 0
        %vm1510 = vcmp.ne.s32.totalorder %v1494, 0
        %vm1511 = vcmp.ne.s32.totalorder %v1495, 0
        %v1512 = vsel %vm1496, 1, 0
        %v1513 = vsel %vm1497, 1, 0
        %v1514 = vsel %vm1498, 1, 0
        %v1515 = vsel %vm1499, 1, 0
        %v1516 = vsel %vm1500, 1, 0
        %v1517 = vsel %vm1501, 1, 0
        %v1518 = vsel %vm1502, 1, 0
        %v1519 = vsel %vm1503, 1, 0
        %v1520 = vsel %vm1504, 1, 0
        %v1521 = vsel %vm1505, 1, 0
        %v1522 = vsel %vm1506, 1, 0
        %v1523 = vsel %vm1507, 1, 0
        %v1524 = vsel %vm1508, 1, 0
        %v1525 = vsel %vm1509, 1, 0
        %v1526 = vsel %vm1510, 1, 0
        %v1527 = vsel %vm1511, 1, 0
        %vm1528 = vcmp.eq.s32.totalorder %v1512, 1
        %vm1529 = vcmp.eq.s32.totalorder %v1513, 1
        %vm1530 = vcmp.eq.s32.totalorder %v1514, 1
        %vm1531 = vcmp.eq.s32.totalorder %v1515, 1
        %vm1532 = vcmp.eq.s32.totalorder %v1516, 1
        %vm1533 = vcmp.eq.s32.totalorder %v1517, 1
        %vm1534 = vcmp.eq.s32.totalorder %v1518, 1
        %vm1535 = vcmp.eq.s32.totalorder %v1519, 1
        %vm1536 = vcmp.eq.s32.totalorder %v1520, 1
        %vm1537 = vcmp.eq.s32.totalorder %v1521, 1
        %vm1538 = vcmp.eq.s32.totalorder %v1522, 1
        %vm1539 = vcmp.eq.s32.totalorder %v1523, 1
        %vm1540 = vcmp.eq.s32.totalorder %v1524, 1
        %vm1541 = vcmp.eq.s32.totalorder %v1525, 1
        %vm1542 = vcmp.eq.s32.totalorder %v1526, 1
        %vm1543 = vcmp.eq.s32.totalorder %v1527, 1
        %v1544 = vsel %vm1528, -1e+09, %v1009
        %v1545 = vsel %vm1529, -1e+09, %v1011
        %v1546 = vsel %vm1530, -1e+09, %v1014
        %v1547 = vsel %vm1531, -1e+09, %v1016
        %v1548 = vsel %vm1532, -1e+09, %v1019
        %v1549 = vsel %vm1533, -1e+09, %v1021
        %v1550 = vsel %vm1534, -1e+09, %v1024
        %v1551 = vsel %vm1535, -1e+09, %v1026
        %v1552 = vsel %vm1536, -1e+09, %v1029
        %v1553 = vsel %vm1537, -1e+09, %v1031
        %v1554 = vsel %vm1538, -1e+09, %v1034
        %v1555 = vsel %vm1539, -1e+09, %v1036
        %v1556 = vsel %vm1540, -1e+09, %v1039
        %v1557 = vsel %vm1541, -1e+09, %v1041
        %v1558 = vsel %vm1542, -1e+09, %v1044
        %v1559 = vsel %vm1543, -1e+09, %v1046
        %v1560 = vsel %vm1528, -1e+09, %v1125
        %v1561 = vsel %vm1529, -1e+09, %v1127
        %v1562 = vsel %vm1530, -1e+09, %v1130
        %v1563 = vsel %vm1531, -1e+09, %v1132
        %v1564 = vsel %vm1532, -1e+09, %v1135
        %v1565 = vsel %vm1533, -1e+09, %v1137
        %v1566 = vsel %vm1534, -1e+09, %v1140
        %v1567 = vsel %vm1535, -1e+09, %v1142
        %v1568 = vsel %vm1536, -1e+09, %v1145
        %v1569 = vsel %vm1537, -1e+09, %v1147
        %v1570 = vsel %vm1538, -1e+09, %v1150
        %v1571 = vsel %vm1539, -1e+09, %v1152
        %v1572 = vsel %vm1540, -1e+09, %v1155
        %v1573 = vsel %vm1541, -1e+09, %v1157
        %v1574 = vsel %vm1542, -1e+09, %v1160
        %v1575 = vsel %vm1543, -1e+09, %v1162
        %v1576 = vsel %vm1528, -1e+09, %v1241
        %v1577 = vsel %vm1529, -1e+09, %v1243
        %v1578 = vsel %vm1530, -1e+09, %v1246
        %v1579 = vsel %vm1531, -1e+09, %v1248
        %v1580 = vsel %vm1532, -1e+09, %v1251
        %v1581 = vsel %vm1533, -1e+09, %v1253
        %v1582 = vsel %vm1534, -1e+09, %v1256
        %v1583 = vsel %vm1535, -1e+09, %v1258
        %v1584 = vsel %vm1536, -1e+09, %v1261
        %v1585 = vsel %vm1537, -1e+09, %v1263
        %v1586 = vsel %vm1538, -1e+09, %v1266
        %v1587 = vsel %vm1539, -1e+09, %v1268
        %v1588 = vsel %vm1540, -1e+09, %v1271
        %v1589 = vsel %vm1541, -1e+09, %v1273
        %v1590 = vsel %vm1542, -1e+09, %v1276
        %v1591 = vsel %vm1543, -1e+09, %v1278
        %v1592 = vsel %vm1528, -1e+09, %v1357
        %v1593 = vsel %vm1529, -1e+09, %v1359
        %v1594 = vsel %vm1530, -1e+09, %v1362
        %v1595 = vsel %vm1531, -1e+09, %v1364
        %v1596 = vsel %vm1532, -1e+09, %v1367
        %v1597 = vsel %vm1533, -1e+09, %v1369
        %v1598 = vsel %vm1534, -1e+09, %v1372
        %v1599 = vsel %vm1535, -1e+09, %v1374
        %v1600 = vsel %vm1536, -1e+09, %v1377
        %v1601 = vsel %vm1537, -1e+09, %v1379
        %v1602 = vsel %vm1538, -1e+09, %v1382
        %v1603 = vsel %vm1539, -1e+09, %v1384
        %v1604 = vsel %vm1540, -1e+09, %v1387
        %v1605 = vsel %vm1541, -1e+09, %v1389
        %v1606 = vsel %vm1542, -1e+09, %v1392
        %v1607 = vsel %vm1543, -1e+09, %v1394
        %1608 = vmax.xlane.f32.xlu0 %v1544
        %v1609 = vpop.xlane.xlu0 %1608
        %1610 = vmax.xlane.f32.xlu0 %v1545
        %v1611 = vpop.xlane.xlu0 %1610
        %1612 = vmax.xlane.f32.xlu0 %v1546
        %v1613 = vpop.xlane.xlu0 %1612
        %1614 = vmax.xlane.f32.xlu0 %v1547
        %v1615 = vpop.xlane.xlu0 %1614
        %1616 = vmax.xlane.f32.xlu0 %v1548
        %v1617 = vpop.xlane.xlu0 %1616
        %1618 = vmax.xlane.f32.xlu0 %v1549
        %v1619 = vpop.xlane.xlu0 %1618
        %1620 = vmax.xlane.f32.xlu0 %v1550
        %v1621 = vpop.xlane.xlu0 %1620
        %1622 = vmax.xlane.f32.xlu0 %v1551
        %v1623 = vpop.xlane.xlu0 %1622
        %1624 = vmax.xlane.f32.xlu0 %v1552
        %v1625 = vpop.xlane.xlu0 %1624
        %1626 = vmax.xlane.f32.xlu0 %v1553
        %v1627 = vpop.xlane.xlu0 %1626
        %1628 = vmax.xlane.f32.xlu0 %v1554
        %v1629 = vpop.xlane.xlu0 %1628
        %1630 = vmax.xlane.f32.xlu0 %v1555
        %v1631 = vpop.xlane.xlu0 %1630
        %1632 = vmax.xlane.f32.xlu0 %v1556
        %v1633 = vpop.xlane.xlu0 %1632
        %1634 = vmax.xlane.f32.xlu0 %v1557
        %v1635 = vpop.xlane.xlu0 %1634
        %1636 = vmax.xlane.f32.xlu0 %v1558
        %v1637 = vpop.xlane.xlu0 %1636
        %1638 = vmax.xlane.f32.xlu0 %v1559
        %v1639 = vpop.xlane.xlu0 %1638
        %1640 = vmax.xlane.f32.xlu0 %v1560
        %v1641 = vpop.xlane.xlu0 %1640
        %1642 = vmax.xlane.f32.xlu0 %v1561
        %v1643 = vpop.xlane.xlu0 %1642
        %1644 = vmax.xlane.f32.xlu0 %v1562
        %v1645 = vpop.xlane.xlu0 %1644
        %1646 = vmax.xlane.f32.xlu0 %v1563
        %v1647 = vpop.xlane.xlu0 %1646
        %1648 = vmax.xlane.f32.xlu0 %v1564
        %v1649 = vpop.xlane.xlu0 %1648
        %1650 = vmax.xlane.f32.xlu0 %v1565
        %v1651 = vpop.xlane.xlu0 %1650
        %1652 = vmax.xlane.f32.xlu0 %v1566
        %v1653 = vpop.xlane.xlu0 %1652
        %1654 = vmax.xlane.f32.xlu0 %v1567
        %v1655 = vpop.xlane.xlu0 %1654
        %1656 = vmax.xlane.f32.xlu0 %v1568
        %v1657 = vpop.xlane.xlu0 %1656
        %1658 = vmax.xlane.f32.xlu0 %v1569
        %v1659 = vpop.xlane.xlu0 %1658
        %1660 = vmax.xlane.f32.xlu0 %v1570
        %v1661 = vpop.xlane.xlu0 %1660
        %1662 = vmax.xlane.f32.xlu0 %v1571
        %v1663 = vpop.xlane.xlu0 %1662
        %1664 = vmax.xlane.f32.xlu0 %v1572
        %v1665 = vpop.xlane.xlu0 %1664
        %1666 = vmax.xlane.f32.xlu0 %v1573
        %v1667 = vpop.xlane.xlu0 %1666
        %1668 = vmax.xlane.f32.xlu0 %v1574
        %v1669 = vpop.xlane.xlu0 %1668
        %1670 = vmax.xlane.f32.xlu0 %v1575
        %v1671 = vpop.xlane.xlu0 %1670
        %1672 = vmax.xlane.f32.xlu0 %v1576
        %v1673 = vpop.xlane.xlu0 %1672
        %1674 = vmax.xlane.f32.xlu0 %v1577
        %v1675 = vpop.xlane.xlu0 %1674
        %1676 = vmax.xlane.f32.xlu0 %v1578
        %v1677 = vpop.xlane.xlu0 %1676
        %1678 = vmax.xlane.f32.xlu0 %v1579
        %v1679 = vpop.xlane.xlu0 %1678
        %1680 = vmax.xlane.f32.xlu0 %v1580
        %v1681 = vpop.xlane.xlu0 %1680
        %1682 = vmax.xlane.f32.xlu0 %v1581
        %v1683 = vpop.xlane.xlu0 %1682
        %1684 = vmax.xlane.f32.xlu0 %v1582
        %v1685 = vpop.xlane.xlu0 %1684
        %1686 = vmax.xlane.f32.xlu0 %v1583
        %v1687 = vpop.xlane.xlu0 %1686
        %1688 = vmax.xlane.f32.xlu0 %v1584
        %v1689 = vpop.xlane.xlu0 %1688
        %1690 = vmax.xlane.f32.xlu0 %v1585
        %v1691 = vpop.xlane.xlu0 %1690
        %1692 = vmax.xlane.f32.xlu0 %v1586
        %v1693 = vpop.xlane.xlu0 %1692
        %1694 = vmax.xlane.f32.xlu0 %v1587
        %v1695 = vpop.xlane.xlu0 %1694
        %1696 = vmax.xlane.f32.xlu0 %v1588
        %v1697 = vpop.xlane.xlu0 %1696
        %1698 = vmax.xlane.f32.xlu0 %v1589
        %v1699 = vpop.xlane.xlu0 %1698
        %1700 = vmax.xlane.f32.xlu0 %v1590
        %v1701 = vpop.xlane.xlu0 %1700
        %1702 = vmax.xlane.f32.xlu0 %v1591
        %v1703 = vpop.xlane.xlu0 %1702
        %1704 = vmax.xlane.f32.xlu0 %v1592
        %v1705 = vpop.xlane.xlu0 %1704
        %1706 = vmax.xlane.f32.xlu0 %v1593
        %v1707 = vpop.xlane.xlu0 %1706
        %1708 = vmax.xlane.f32.xlu0 %v1594
        %v1709 = vpop.xlane.xlu0 %1708
        %1710 = vmax.xlane.f32.xlu0 %v1595
        %v1711 = vpop.xlane.xlu0 %1710
        %1712 = vmax.xlane.f32.xlu0 %v1596
        %v1713 = vpop.xlane.xlu0 %1712
        %1714 = vmax.xlane.f32.xlu0 %v1597
        %v1715 = vpop.xlane.xlu0 %1714
        %1716 = vmax.xlane.f32.xlu0 %v1598
        %v1717 = vpop.xlane.xlu0 %1716
        %1718 = vmax.xlane.f32.xlu0 %v1599
        %v1719 = vpop.xlane.xlu0 %1718
        %1720 = vmax.xlane.f32.xlu0 %v1600
        %v1721 = vpop.xlane.xlu0 %1720
        %1722 = vmax.xlane.f32.xlu0 %v1601
        %v1723 = vpop.xlane.xlu0 %1722
        %1724 = vmax.xlane.f32.xlu0 %v1602
        %v1725 = vpop.xlane.xlu0 %1724
        %1726 = vmax.xlane.f32.xlu0 %v1603
        %v1727 = vpop.xlane.xlu0 %1726
        %1728 = vmax.xlane.f32.xlu0 %v1604
        %v1729 = vpop.xlane.xlu0 %1728
        %1730 = vmax.xlane.f32.xlu0 %v1605
        %v1731 = vpop.xlane.xlu0 %1730
        %1732 = vmax.xlane.f32.xlu0 %v1606
        %v1733 = vpop.xlane.xlu0 %1732
        %1734 = vmax.xlane.f32.xlu0 %v1607
        %v1735 = vpop.xlane.xlu0 %1734
        %v1736 = vsub.f32 %v1544, %v1609
        %v1737 = vsub.f32 %v1545, %v1611
        %v1738 = vsub.f32 %v1546, %v1613
        %v1739 = vsub.f32 %v1547, %v1615
        %v1740 = vsub.f32 %v1548, %v1617
        %v1741 = vsub.f32 %v1549, %v1619
        %v1742 = vsub.f32 %v1550, %v1621
        %v1743 = vsub.f32 %v1551, %v1623
        %v1744 = vsub.f32 %v1552, %v1625
        %v1745 = vsub.f32 %v1553, %v1627
        %v1746 = vsub.f32 %v1554, %v1629
        %v1747 = vsub.f32 %v1555, %v1631
        %v1748 = vsub.f32 %v1556, %v1633
        %v1749 = vsub.f32 %v1557, %v1635
        %v1750 = vsub.f32 %v1558, %v1637
        %v1751 = vsub.f32 %v1559, %v1639
        %v1752 = vsub.f32 %v1560, %v1641
        %v1753 = vsub.f32 %v1561, %v1643
        %v1754 = vsub.f32 %v1562, %v1645
        %v1755 = vsub.f32 %v1563, %v1647
        %v1756 = vsub.f32 %v1564, %v1649
        %v1757 = vsub.f32 %v1565, %v1651
        %v1758 = vsub.f32 %v1566, %v1653
        %v1759 = vsub.f32 %v1567, %v1655
        %v1760 = vsub.f32 %v1568, %v1657
        %v1761 = vsub.f32 %v1569, %v1659
        %v1762 = vsub.f32 %v1570, %v1661
        %v1763 = vsub.f32 %v1571, %v1663
        %v1764 = vsub.f32 %v1572, %v1665
        %v1765 = vsub.f32 %v1573, %v1667
        %v1766 = vsub.f32 %v1574, %v1669
        %v1767 = vsub.f32 %v1575, %v1671
        %v1768 = vsub.f32 %v1576, %v1673
        %v1769 = vsub.f32 %v1577, %v1675
        %v1770 = vsub.f32 %v1578, %v1677
        %v1771 = vsub.f32 %v1579, %v1679
        %v1772 = vsub.f32 %v1580, %v1681
        %v1773 = vsub.f32 %v1581, %v1683
        %v1774 = vsub.f32 %v1582, %v1685
        %v1775 = vsub.f32 %v1583, %v1687
        %v1776 = vsub.f32 %v1584, %v1689
        %v1777 = vsub.f32 %v1585, %v1691
        %v1778 = vsub.f32 %v1586, %v1693
        %v1779 = vsub.f32 %v1587, %v1695
        %v1780 = vsub.f32 %v1588, %v1697
        %v1781 = vsub.f32 %v1589, %v1699
        %v1782 = vsub.f32 %v1590, %v1701
        %v1783 = vsub.f32 %v1591, %v1703
        %v1784 = vsub.f32 %v1592, %v1705
        %v1785 = vsub.f32 %v1593, %v1707
        %v1786 = vsub.f32 %v1594, %v1709
        %v1787 = vsub.f32 %v1595, %v1711
        %v1788 = vsub.f32 %v1596, %v1713
        %v1789 = vsub.f32 %v1597, %v1715
        %v1790 = vsub.f32 %v1598, %v1717
        %v1791 = vsub.f32 %v1599, %v1719
        %v1792 = vsub.f32 %v1600, %v1721
        %v1793 = vsub.f32 %v1601, %v1723
        %v1794 = vsub.f32 %v1602, %v1725
        %v1795 = vsub.f32 %v1603, %v1727
        %v1796 = vsub.f32 %v1604, %v1729
        %v1797 = vsub.f32 %v1605, %v1731
        %v1798 = vsub.f32 %v1606, %v1733
        %v1799 = vsub.f32 %v1607, %v1735
        %v1800 = vmul.f32 %v1736, 1.442695
        %v1801 = vpow.pop %v1800
        %v1802 = vmul.f32 %v1737, 1.442695
        %v1803 = vpow.pop %v1802
        %v1804 = vmul.f32 %v1738, 1.442695
        %v1805 = vpow.pop %v1804
        %v1806 = vmul.f32 %v1739, 1.442695
        %v1807 = vpow.pop %v1806
        %v1808 = vmul.f32 %v1740, 1.442695
        %v1809 = vpow.pop %v1808
        %v1810 = vmul.f32 %v1741, 1.442695
        %v1811 = vpow.pop %v1810
        %v1812 = vmul.f32 %v1742, 1.442695
        %v1813 = vpow.pop %v1812
        %v1814 = vmul.f32 %v1743, 1.442695
        %v1815 = vpow.pop %v1814
        %v1816 = vmul.f32 %v1744, 1.442695
        %v1817 = vpow.pop %v1816
        %v1818 = vmul.f32 %v1745, 1.442695
        %v1819 = vpow.pop %v1818
        %v1820 = vmul.f32 %v1746, 1.442695
        %v1821 = vpow.pop %v1820
        %v1822 = vmul.f32 %v1747, 1.442695
        %v1823 = vpow.pop %v1822
        %v1824 = vmul.f32 %v1748, 1.442695
        %v1825 = vpow.pop %v1824
        %v1826 = vmul.f32 %v1749, 1.442695
        %v1827 = vpow.pop %v1826
        %v1828 = vmul.f32 %v1750, 1.442695
        %v1829 = vpow.pop %v1828
        %v1830 = vmul.f32 %v1751, 1.442695
        %v1831 = vpow.pop %v1830
        %v1832 = vmul.f32 %v1752, 1.442695
        %v1833 = vpow.pop %v1832
        %v1834 = vmul.f32 %v1753, 1.442695
        %v1835 = vpow.pop %v1834
        %v1836 = vmul.f32 %v1754, 1.442695
        %v1837 = vpow.pop %v1836
        %v1838 = vmul.f32 %v1755, 1.442695
        %v1839 = vpow.pop %v1838
        %v1840 = vmul.f32 %v1756, 1.442695
        %v1841 = vpow.pop %v1840
        %v1842 = vmul.f32 %v1757, 1.442695
        %v1843 = vpow.pop %v1842
        %v1844 = vmul.f32 %v1758, 1.442695
        %v1845 = vpow.pop %v1844
        %v1846 = vmul.f32 %v1759, 1.442695
        %v1847 = vpow.pop %v1846
        %v1848 = vmul.f32 %v1760, 1.442695
        %v1849 = vpow.pop %v1848
        %v1850 = vmul.f32 %v1761, 1.442695
        %v1851 = vpow.pop %v1850
        %v1852 = vmul.f32 %v1762, 1.442695
        %v1853 = vpow.pop %v1852
        %v1854 = vmul.f32 %v1763, 1.442695
        %v1855 = vpow.pop %v1854
        %v1856 = vmul.f32 %v1764, 1.442695
        %v1857 = vpow.pop %v1856
        %v1858 = vmul.f32 %v1765, 1.442695
        %v1859 = vpow.pop %v1858
        %v1860 = vmul.f32 %v1766, 1.442695
        %v1861 = vpow.pop %v1860
        %v1862 = vmul.f32 %v1767, 1.442695
        %v1863 = vpow.pop %v1862
        %v1864 = vmul.f32 %v1768, 1.442695
        %v1865 = vpow.pop %v1864
        %v1866 = vmul.f32 %v1769, 1.442695
        %v1867 = vpow.pop %v1866
        %v1868 = vmul.f32 %v1770, 1.442695
        %v1869 = vpow.pop %v1868
        %v1870 = vmul.f32 %v1771, 1.442695
        %v1871 = vpow.pop %v1870
        %v1872 = vmul.f32 %v1772, 1.442695
        %v1873 = vpow.pop %v1872
        %v1874 = vmul.f32 %v1773, 1.442695
        %v1875 = vpow.pop %v1874
        %v1876 = vmul.f32 %v1774, 1.442695
        %v1877 = vpow.pop %v1876
        %v1878 = vmul.f32 %v1775, 1.442695
        %v1879 = vpow.pop %v1878
        %v1880 = vmul.f32 %v1776, 1.442695
        %v1881 = vpow.pop %v1880
        %v1882 = vmul.f32 %v1777, 1.442695
        %v1883 = vpow.pop %v1882
        %v1884 = vmul.f32 %v1778, 1.442695
        %v1885 = vpow.pop %v1884
        %v1886 = vmul.f32 %v1779, 1.442695
        %v1887 = vpow.pop %v1886
        %v1888 = vmul.f32 %v1780, 1.442695
        %v1889 = vpow.pop %v1888
        %v1890 = vmul.f32 %v1781, 1.442695
        %v1891 = vpow.pop %v1890
        %v1892 = vmul.f32 %v1782, 1.442695
        %v1893 = vpow.pop %v1892
        %v1894 = vmul.f32 %v1783, 1.442695
        %v1895 = vpow.pop %v1894
        %v1896 = vmul.f32 %v1784, 1.442695
        %v1897 = vpow.pop %v1896
        %v1898 = vmul.f32 %v1785, 1.442695
        %v1899 = vpow.pop %v1898
        %v1900 = vmul.f32 %v1786, 1.442695
        %v1901 = vpow.pop %v1900
        %v1902 = vmul.f32 %v1787, 1.442695
        %v1903 = vpow.pop %v1902
        %v1904 = vmul.f32 %v1788, 1.442695
        %v1905 = vpow.pop %v1904
        %v1906 = vmul.f32 %v1789, 1.442695
        %v1907 = vpow.pop %v1906
        %v1908 = vmul.f32 %v1790, 1.442695
        %v1909 = vpow.pop %v1908
        %v1910 = vmul.f32 %v1791, 1.442695
        %v1911 = vpow.pop %v1910
        %v1912 = vmul.f32 %v1792, 1.442695
        %v1913 = vpow.pop %v1912
        %v1914 = vmul.f32 %v1793, 1.442695
        %v1915 = vpow.pop %v1914
        %v1916 = vmul.f32 %v1794, 1.442695
        %v1917 = vpow.pop %v1916
        %v1918 = vmul.f32 %v1795, 1.442695
        %v1919 = vpow.pop %v1918
        %v1920 = vmul.f32 %v1796, 1.442695
        %v1921 = vpow.pop %v1920
        %v1922 = vmul.f32 %v1797, 1.442695
        %v1923 = vpow.pop %v1922
        %v1924 = vmul.f32 %v1798, 1.442695
        %v1925 = vpow.pop %v1924
        %v1926 = vmul.f32 %v1799, 1.442695
        %v1927 = vpow.pop %v1926
        %1928 = vadd.xlane.f32.xlu0 %v1801
        %v1929 = vpop.xlane.xlu0 %1928
        %1930 = vadd.xlane.f32.xlu0 %v1803
        %v1931 = vpop.xlane.xlu0 %1930
        %1932 = vadd.xlane.f32.xlu0 %v1805
        %v1933 = vpop.xlane.xlu0 %1932
        %1934 = vadd.xlane.f32.xlu0 %v1807
        %v1935 = vpop.xlane.xlu0 %1934
        %1936 = vadd.xlane.f32.xlu0 %v1809
        %v1937 = vpop.xlane.xlu0 %1936
        %1938 = vadd.xlane.f32.xlu0 %v1811
        %v1939 = vpop.xlane.xlu0 %1938
        %1940 = vadd.xlane.f32.xlu0 %v1813
        %v1941 = vpop.xlane.xlu0 %1940
        %1942 = vadd.xlane.f32.xlu0 %v1815
        %v1943 = vpop.xlane.xlu0 %1942
        %1944 = vadd.xlane.f32.xlu0 %v1817
        %v1945 = vpop.xlane.xlu0 %1944
        %1946 = vadd.xlane.f32.xlu0 %v1819
        %v1947 = vpop.xlane.xlu0 %1946
        %1948 = vadd.xlane.f32.xlu0 %v1821
        %v1949 = vpop.xlane.xlu0 %1948
        %1950 = vadd.xlane.f32.xlu0 %v1823
        %v1951 = vpop.xlane.xlu0 %1950
        %1952 = vadd.xlane.f32.xlu0 %v1825
        %v1953 = vpop.xlane.xlu0 %1952
        %1954 = vadd.xlane.f32.xlu0 %v1827
        %v1955 = vpop.xlane.xlu0 %1954
        %1956 = vadd.xlane.f32.xlu0 %v1829
        %v1957 = vpop.xlane.xlu0 %1956
        %1958 = vadd.xlane.f32.xlu0 %v1831
        %v1959 = vpop.xlane.xlu0 %1958
        %1960 = vadd.xlane.f32.xlu0 %v1833
        %v1961 = vpop.xlane.xlu0 %1960
        %1962 = vadd.xlane.f32.xlu0 %v1835
        %v1963 = vpop.xlane.xlu0 %1962
        %1964 = vadd.xlane.f32.xlu0 %v1837
        %v1965 = vpop.xlane.xlu0 %1964
        %1966 = vadd.xlane.f32.xlu0 %v1839
        %v1967 = vpop.xlane.xlu0 %1966
        %1968 = vadd.xlane.f32.xlu0 %v1841
        %v1969 = vpop.xlane.xlu0 %1968
        %1970 = vadd.xlane.f32.xlu0 %v1843
        %v1971 = vpop.xlane.xlu0 %1970
        %1972 = vadd.xlane.f32.xlu0 %v1845
        %v1973 = vpop.xlane.xlu0 %1972
        %1974 = vadd.xlane.f32.xlu0 %v1847
        %v1975 = vpop.xlane.xlu0 %1974
        %1976 = vadd.xlane.f32.xlu0 %v1849
        %v1977 = vpop.xlane.xlu0 %1976
        %1978 = vadd.xlane.f32.xlu0 %v1851
        %v1979 = vpop.xlane.xlu0 %1978
        %1980 = vadd.xlane.f32.xlu0 %v1853
        %v1981 = vpop.xlane.xlu0 %1980
        %1982 = vadd.xlane.f32.xlu0 %v1855
        %v1983 = vpop.xlane.xlu0 %1982
        %1984 = vadd.xlane.f32.xlu0 %v1857
        %v1985 = vpop.xlane.xlu0 %1984
        %1986 = vadd.xlane.f32.xlu0 %v1859
        %v1987 = vpop.xlane.xlu0 %1986
        %1988 = vadd.xlane.f32.xlu0 %v1861
        %v1989 = vpop.xlane.xlu0 %1988
        %1990 = vadd.xlane.f32.xlu0 %v1863
        %v1991 = vpop.xlane.xlu0 %1990
        %1992 = vadd.xlane.f32.xlu0 %v1865
        %v1993 = vpop.xlane.xlu0 %1992
        %1994 = vadd.xlane.f32.xlu0 %v1867
        %v1995 = vpop.xlane.xlu0 %1994
        %1996 = vadd.xlane.f32.xlu0 %v1869
        %v1997 = vpop.xlane.xlu0 %1996
        %1998 = vadd.xlane.f32.xlu0 %v1871
        %v1999 = vpop.xlane.xlu0 %1998
        %2000 = vadd.xlane.f32.xlu0 %v1873
        %v2001 = vpop.xlane.xlu0 %2000
        %2002 = vadd.xlane.f32.xlu0 %v1875
        %v2003 = vpop.xlane.xlu0 %2002
        %2004 = vadd.xlane.f32.xlu0 %v1877
        %v2005 = vpop.xlane.xlu0 %2004
        %2006 = vadd.xlane.f32.xlu0 %v1879
        %v2007 = vpop.xlane.xlu0 %2006
        %2008 = vadd.xlane.f32.xlu0 %v1881
        %v2009 = vpop.xlane.xlu0 %2008
        %2010 = vadd.xlane.f32.xlu0 %v1883
        %v2011 = vpop.xlane.xlu0 %2010
        %2012 = vadd.xlane.f32.xlu0 %v1885
        %v2013 = vpop.xlane.xlu0 %2012
        %2014 = vadd.xlane.f32.xlu0 %v1887
        %v2015 = vpop.xlane.xlu0 %2014
        %2016 = vadd.xlane.f32.xlu0 %v1889
        %v2017 = vpop.xlane.xlu0 %2016
        %2018 = vadd.xlane.f32.xlu0 %v1891
        %v2019 = vpop.xlane.xlu0 %2018
        %2020 = vadd.xlane.f32.xlu0 %v1893
        %v2021 = vpop.xlane.xlu0 %2020
        %2022 = vadd.xlane.f32.xlu0 %v1895
        %v2023 = vpop.xlane.xlu0 %2022
        %2024 = vadd.xlane.f32.xlu0 %v1897
        %v2025 = vpop.xlane.xlu0 %2024
        %2026 = vadd.xlane.f32.xlu0 %v1899
        %v2027 = vpop.xlane.xlu0 %2026
        %2028 = vadd.xlane.f32.xlu0 %v1901
        %v2029 = vpop.xlane.xlu0 %2028
        %2030 = vadd.xlane.f32.xlu0 %v1903
        %v2031 = vpop.xlane.xlu0 %2030
        %2032 = vadd.xlane.f32.xlu0 %v1905
        %v2033 = vpop.xlane.xlu0 %2032
        %2034 = vadd.xlane.f32.xlu0 %v1907
        %v2035 = vpop.xlane.xlu0 %2034
        %2036 = vadd.xlane.f32.xlu0 %v1909
        %v2037 = vpop.xlane.xlu0 %2036
        %2038 = vadd.xlane.f32.xlu0 %v1911
        %v2039 = vpop.xlane.xlu0 %2038
        %2040 = vadd.xlane.f32.xlu0 %v1913
        %v2041 = vpop.xlane.xlu0 %2040
        %2042 = vadd.xlane.f32.xlu0 %v1915
        %v2043 = vpop.xlane.xlu0 %2042
        %2044 = vadd.xlane.f32.xlu0 %v1917
        %v2045 = vpop.xlane.xlu0 %2044
        %2046 = vadd.xlane.f32.xlu0 %v1919
        %v2047 = vpop.xlane.xlu0 %2046
        %2048 = vadd.xlane.f32.xlu0 %v1921
        %v2049 = vpop.xlane.xlu0 %2048
        %2050 = vadd.xlane.f32.xlu0 %v1923
        %v2051 = vpop.xlane.xlu0 %2050
        %2052 = vadd.xlane.f32.xlu0 %v1925
        %v2053 = vpop.xlane.xlu0 %2052
        %2054 = vadd.xlane.f32.xlu0 %v1927
        %v2055 = vpop.xlane.xlu0 %2054
        %v2056 = vrcp.pop %v1929
        %v2057 = vrcp.pop %v1931
        %v2058 = vrcp.pop %v1933
        %v2059 = vrcp.pop %v1935
        %v2060 = vrcp.pop %v1937
        %v2061 = vrcp.pop %v1939
        %v2062 = vrcp.pop %v1941
        %v2063 = vrcp.pop %v1943
        %v2064 = vrcp.pop %v1945
        %v2065 = vrcp.pop %v1947
        %v2066 = vrcp.pop %v1949
        %v2067 = vrcp.pop %v1951
        %v2068 = vrcp.pop %v1953
        %v2069 = vrcp.pop %v1955
        %v2070 = vrcp.pop %v1957
        %v2071 = vrcp.pop %v1959
        %v2072 = vrcp.pop %v1961
        %v2073 = vrcp.pop %v1963
        %v2074 = vrcp.pop %v1965
        %v2075 = vrcp.pop %v1967
        %v2076 = vrcp.pop %v1969
        %v2077 = vrcp.pop %v1971
        %v2078 = vrcp.pop %v1973
        %v2079 = vrcp.pop %v1975
        %v2080 = vrcp.pop %v1977
        %v2081 = vrcp.pop %v1979
        %v2082 = vrcp.pop %v1981
        %v2083 = vrcp.pop %v1983
        %v2084 = vrcp.pop %v1985
        %v2085 = vrcp.pop %v1987
        %v2086 = vrcp.pop %v1989
        %v2087 = vrcp.pop %v1991
        %v2088 = vrcp.pop %v1993
        %v2089 = vrcp.pop %v1995
        %v2090 = vrcp.pop %v1997
        %v2091 = vrcp.pop %v1999
        %v2092 = vrcp.pop %v2001
        %v2093 = vrcp.pop %v2003
        %v2094 = vrcp.pop %v2005
        %v2095 = vrcp.pop %v2007
        %v2096 = vrcp.pop %v2009
        %v2097 = vrcp.pop %v2011
        %v2098 = vrcp.pop %v2013
        %v2099 = vrcp.pop %v2015
        %v2100 = vrcp.pop %v2017
        %v2101 = vrcp.pop %v2019
        %v2102 = vrcp.pop %v2021
        %v2103 = vrcp.pop %v2023
        %v2104 = vrcp.pop %v2025
        %v2105 = vrcp.pop %v2027
        %v2106 = vrcp.pop %v2029
        %v2107 = vrcp.pop %v2031
        %v2108 = vrcp.pop %v2033
        %v2109 = vrcp.pop %v2035
        %v2110 = vrcp.pop %v2037
        %v2111 = vrcp.pop %v2039
        %v2112 = vrcp.pop %v2041
        %v2113 = vrcp.pop %v2043
        %v2114 = vrcp.pop %v2045
        %v2115 = vrcp.pop %v2047
        %v2116 = vrcp.pop %v2049
        %v2117 = vrcp.pop %v2051
        %v2118 = vrcp.pop %v2053
        %v2119 = vrcp.pop %v2055
        %v2120 = vmul.f32 %v1801, %v2056
        %v2121 = vmul.f32 %v1803, %v2057
        %v2122 = vmul.f32 %v1805, %v2058
        %v2123 = vmul.f32 %v1807, %v2059
        %v2124 = vmul.f32 %v1809, %v2060
        %v2125 = vmul.f32 %v1811, %v2061
        %v2126 = vmul.f32 %v1813, %v2062
        %v2127 = vmul.f32 %v1815, %v2063
        %v2128 = vmul.f32 %v1817, %v2064
        %v2129 = vmul.f32 %v1819, %v2065
        %v2130 = vmul.f32 %v1821, %v2066
        %v2131 = vmul.f32 %v1823, %v2067
        %v2132 = vmul.f32 %v1825, %v2068
        %v2133 = vmul.f32 %v1827, %v2069
        %v2134 = vmul.f32 %v1829, %v2070
        %v2135 = vmul.f32 %v1831, %v2071
        %v2136 = vmul.f32 %v1833, %v2072
        %v2137 = vmul.f32 %v1835, %v2073
        %v2138 = vmul.f32 %v1837, %v2074
        %v2139 = vmul.f32 %v1839, %v2075
        %v2140 = vmul.f32 %v1841, %v2076
        %v2141 = vmul.f32 %v1843, %v2077
        %v2142 = vmul.f32 %v1845, %v2078
        %v2143 = vmul.f32 %v1847, %v2079
        %v2144 = vmul.f32 %v1849, %v2080
        %v2145 = vmul.f32 %v1851, %v2081
        %v2146 = vmul.f32 %v1853, %v2082
        %v2147 = vmul.f32 %v1855, %v2083
        %v2148 = vmul.f32 %v1857, %v2084
        %v2149 = vmul.f32 %v1859, %v2085
        %v2150 = vmul.f32 %v1861, %v2086
        %v2151 = vmul.f32 %v1863, %v2087
        %v2152 = vmul.f32 %v1865, %v2088
        %v2153 = vmul.f32 %v1867, %v2089
        %v2154 = vmul.f32 %v1869, %v2090
        %v2155 = vmul.f32 %v1871, %v2091
        %v2156 = vmul.f32 %v1873, %v2092
        %v2157 = vmul.f32 %v1875, %v2093
        %v2158 = vmul.f32 %v1877, %v2094
        %v2159 = vmul.f32 %v1879, %v2095
        %v2160 = vmul.f32 %v1881, %v2096
        %v2161 = vmul.f32 %v1883, %v2097
        %v2162 = vmul.f32 %v1885, %v2098
        %v2163 = vmul.f32 %v1887, %v2099
        %v2164 = vmul.f32 %v1889, %v2100
        %v2165 = vmul.f32 %v1891, %v2101
        %v2166 = vmul.f32 %v1893, %v2102
        %v2167 = vmul.f32 %v1895, %v2103
        %v2168 = vmul.f32 %v1897, %v2104
        %v2169 = vmul.f32 %v1899, %v2105
        %v2170 = vmul.f32 %v1901, %v2106
        %v2171 = vmul.f32 %v1903, %v2107
        %v2172 = vmul.f32 %v1905, %v2108
        %v2173 = vmul.f32 %v1907, %v2109
        %v2174 = vmul.f32 %v1909, %v2110
        %v2175 = vmul.f32 %v1911, %v2111
        %v2176 = vmul.f32 %v1913, %v2112
        %v2177 = vmul.f32 %v1915, %v2113
        %v2178 = vmul.f32 %v1917, %v2114
        %v2179 = vmul.f32 %v1919, %v2115
        %v2180 = vmul.f32 %v1921, %v2116
        %v2181 = vmul.f32 %v1923, %v2117
        %v2182 = vmul.f32 %v1925, %v2118
        %v2183 = vmul.f32 %v1927, %v2119
        %2184 = vst [vmem:[%s494] sm:$0xff] %v2120
        %2185 = vst [vmem:[%s494 + $0x8] sm:$0xff] %v2121
        %2186 = vst [vmem:[%s494 + $0x10] sm:$0xff] %v2122
        %2187 = vst [vmem:[%s494 + $0x18] sm:$0xff] %v2123
        %2188 = vst [vmem:[%s494 + $0x20] sm:$0xff] %v2124
        %2189 = vst [vmem:[%s494 + $0x28] sm:$0xff] %v2125
        %2190 = vst [vmem:[%s494 + $0x30] sm:$0xff] %v2126
        %2191 = vst [vmem:[%s494 + $0x38] sm:$0xff] %v2127
        %2192 = vst [vmem:[%s494 + $0x40] sm:$0xff] %v2128
        %2193 = vst [vmem:[%s494 + $0x48] sm:$0xff] %v2129
        %2194 = vst [vmem:[%s494 + $0x50] sm:$0xff] %v2130
        %2195 = vst [vmem:[%s494 + $0x58] sm:$0xff] %v2131
        %2196 = vst [vmem:[%s494 + $0x60] sm:$0xff] %v2132
        %2197 = vst [vmem:[%s494 + $0x68] sm:$0xff] %v2133
        %2198 = vst [vmem:[%s494 + $0x70] sm:$0xff] %v2134
        %2199 = vst [vmem:[%s494 + $0x78] sm:$0xff] %v2135
        %2200 = vst [vmem:[%s494 + $0x80] sm:$0xff] %v2136
        %2201 = vst [vmem:[%s494 + $0x88] sm:$0xff] %v2137
        %2202 = vst [vmem:[%s494 + $0x90] sm:$0xff] %v2138
        %2203 = vst [vmem:[%s494 + $0x98] sm:$0xff] %v2139
        %2204 = vst [vmem:[%s494 + $0xa0] sm:$0xff] %v2140
        %2205 = vst [vmem:[%s494 + $0xa8] sm:$0xff] %v2141
        %2206 = vst [vmem:[%s494 + $0xb0] sm:$0xff] %v2142
        %2207 = vst [vmem:[%s494 + $0xb8] sm:$0xff] %v2143
        %2208 = vst [vmem:[%s494 + $0xc0] sm:$0xff] %v2144
        %2209 = vst [vmem:[%s494 + $0xc8] sm:$0xff] %v2145
        %2210 = vst [vmem:[%s494 + $0xd0] sm:$0xff] %v2146
        %2211 = vst [vmem:[%s494 + $0xd8] sm:$0xff] %v2147
        %2212 = vst [vmem:[%s494 + $0xe0] sm:$0xff] %v2148
        %2213 = vst [vmem:[%s494 + $0xe8] sm:$0xff] %v2149
        %2214 = vst [vmem:[%s494 + $0xf0] sm:$0xff] %v2150
        %2215 = vst [vmem:[%s494 + $0xf8] sm:$0xff] %v2151
        %2216 = vst [vmem:[%s494 + $0x100] sm:$0xff] %v2152
        %2217 = vst [vmem:[%s494 + $0x108] sm:$0xff] %v2153
        %2218 = vst [vmem:[%s494 + $0x110] sm:$0xff] %v2154
        %2219 = vst [vmem:[%s494 + $0x118] sm:$0xff] %v2155
        %2220 = vst [vmem:[%s494 + $0x120] sm:$0xff] %v2156
        %2221 = vst [vmem:[%s494 + $0x128] sm:$0xff] %v2157
        %2222 = vst [vmem:[%s494 + $0x130] sm:$0xff] %v2158
        %2223 = vst [vmem:[%s494 + $0x138] sm:$0xff] %v2159
        %2224 = vst [vmem:[%s494 + $0x140] sm:$0xff] %v2160
        %2225 = vst [vmem:[%s494 + $0x148] sm:$0xff] %v2161
        %2226 = vst [vmem:[%s494 + $0x150] sm:$0xff] %v2162
        %2227 = vst [vmem:[%s494 + $0x158] sm:$0xff] %v2163
        %2228 = vst [vmem:[%s494 + $0x160] sm:$0xff] %v2164
        %2229 = vst [vmem:[%s494 + $0x168] sm:$0xff] %v2165
        %2230 = vst [vmem:[%s494 + $0x170] sm:$0xff] %v2166
        %2231 = vst [vmem:[%s494 + $0x178] sm:$0xff] %v2167
        %2232 = vst [vmem:[%s494 + $0x180] sm:$0xff] %v2168
        %2233 = vst [vmem:[%s494 + $0x188] sm:$0xff] %v2169
        %2234 = vst [vmem:[%s494 + $0x190] sm:$0xff] %v2170
        %2235 = vst [vmem:[%s494 + $0x198] sm:$0xff] %v2171
        %2236 = vst [vmem:[%s494 + $0x1a0] sm:$0xff] %v2172
        %2237 = vst [vmem:[%s494 + $0x1a8] sm:$0xff] %v2173
        %2238 = vst [vmem:[%s494 + $0x1b0] sm:$0xff] %v2174
        %2239 = vst [vmem:[%s494 + $0x1b8] sm:$0xff] %v2175
        %2240 = vst [vmem:[%s494 + $0x1c0] sm:$0xff] %v2176
        %2241 = vst [vmem:[%s494 + $0x1c8] sm:$0xff] %v2177
        %2242 = vst [vmem:[%s494 + $0x1d0] sm:$0xff] %v2178
        %2243 = vst [vmem:[%s494 + $0x1d8] sm:$0xff] %v2179
        %2244 = vst [vmem:[%s494 + $0x1e0] sm:$0xff] %v2180
        %2245 = vst [vmem:[%s494 + $0x1e8] sm:$0xff] %v2181
        %2246 = vst [vmem:[%s494 + $0x1f0] sm:$0xff] %v2182
        %2247 = vst [vmem:[%s494 + $0x1f8] sm:$0xff] %v2183
        %v2248 = vpack.c.bf16 %v2120, %v2120
        %v2249 = vpack.c.bf16 %v2121, %v2121
        %v2250 = vpack.c.bf16 %v2122, %v2122
        %v2251 = vpack.c.bf16 %v2123, %v2123
        %v2252 = vpack.c.bf16 %v2124, %v2124
        %v2253 = vpack.c.bf16 %v2125, %v2125
        %v2254 = vpack.c.bf16 %v2126, %v2126
        %v2255 = vpack.c.bf16 %v2127, %v2127
        %v2256 = vpack.c.bf16 %v2128, %v2128
        %v2257 = vpack.c.bf16 %v2129, %v2129
        %v2258 = vpack.c.bf16 %v2130, %v2130
        %v2259 = vpack.c.bf16 %v2131, %v2131
        %v2260 = vpack.c.bf16 %v2132, %v2132
        %v2261 = vpack.c.bf16 %v2133, %v2133
        %v2262 = vpack.c.bf16 %v2134, %v2134
        %v2263 = vpack.c.bf16 %v2135, %v2135
        %v2264 = vpack.c.bf16 %v2136, %v2136
        %v2265 = vpack.c.bf16 %v2137, %v2137
        %v2266 = vpack.c.bf16 %v2138, %v2138
        %v2267 = vpack.c.bf16 %v2139, %v2139
        %v2268 = vpack.c.bf16 %v2140, %v2140
        %v2269 = vpack.c.bf16 %v2141, %v2141
        %v2270 = vpack.c.bf16 %v2142, %v2142
        %v2271 = vpack.c.bf16 %v2143, %v2143
        %v2272 = vpack.c.bf16 %v2144, %v2144
        %v2273 = vpack.c.bf16 %v2145, %v2145
        %v2274 = vpack.c.bf16 %v2146, %v2146
        %v2275 = vpack.c.bf16 %v2147, %v2147
        %v2276 = vpack.c.bf16 %v2148, %v2148
        %v2277 = vpack.c.bf16 %v2149, %v2149
        %v2278 = vpack.c.bf16 %v2150, %v2150
        %v2279 = vpack.c.bf16 %v2151, %v2151
        %v2280 = vpack.c.bf16 %v2152, %v2152
        %v2281 = vpack.c.bf16 %v2153, %v2153
        %v2282 = vpack.c.bf16 %v2154, %v2154
        %v2283 = vpack.c.bf16 %v2155, %v2155
        %v2284 = vpack.c.bf16 %v2156, %v2156
        %v2285 = vpack.c.bf16 %v2157, %v2157
        %v2286 = vpack.c.bf16 %v2158, %v2158
        %v2287 = vpack.c.bf16 %v2159, %v2159
        %v2288 = vpack.c.bf16 %v2160, %v2160
        %v2289 = vpack.c.bf16 %v2161, %v2161
        %v2290 = vpack.c.bf16 %v2162, %v2162
        %v2291 = vpack.c.bf16 %v2163, %v2163
        %v2292 = vpack.c.bf16 %v2164, %v2164
        %v2293 = vpack.c.bf16 %v2165, %v2165
        %v2294 = vpack.c.bf16 %v2166, %v2166
        %v2295 = vpack.c.bf16 %v2167, %v2167
        %v2296 = vpack.c.bf16 %v2168, %v2168
        %v2297 = vpack.c.bf16 %v2169, %v2169
        %v2298 = vpack.c.bf16 %v2170, %v2170
        %v2299 = vpack.c.bf16 %v2171, %v2171
        %v2300 = vpack.c.bf16 %v2172, %v2172
        %v2301 = vpack.c.bf16 %v2173, %v2173
        %v2302 = vpack.c.bf16 %v2174, %v2174
        %v2303 = vpack.c.bf16 %v2175, %v2175
        %v2304 = vpack.c.bf16 %v2176, %v2176
        %v2305 = vpack.c.bf16 %v2177, %v2177
        %v2306 = vpack.c.bf16 %v2178, %v2178
        %v2307 = vpack.c.bf16 %v2179, %v2179
        %v2308 = vpack.c.bf16 %v2180, %v2180
        %v2309 = vpack.c.bf16 %v2181, %v2181
        %v2310 = vpack.c.bf16 %v2182, %v2182
        %v2311 = vpack.c.bf16 %v2183, %v2183
        %v2328 = vunpack.c.l.b16 %v2248
        %v2329 = vunpack.c.l.b16 %v2249
        %v2330 = vunpack.c.l.b16 %v2250
        %v2331 = vunpack.c.l.b16 %v2251
        %v2332 = vunpack.c.l.b16 %v2252
        %v2333 = vunpack.c.l.b16 %v2253
        %v2334 = vunpack.c.l.b16 %v2254
        %v2335 = vunpack.c.l.b16 %v2255
        %v2336 = vunpack.c.l.b16 %v2256
        %v2337 = vunpack.c.l.b16 %v2257
        %v2338 = vunpack.c.l.b16 %v2258
        %v2339 = vunpack.c.l.b16 %v2259
        %v2340 = vunpack.c.l.b16 %v2260
        %v2341 = vunpack.c.l.b16 %v2261
        %v2342 = vunpack.c.l.b16 %v2262
        %v2343 = vunpack.c.l.b16 %v2263
        %v2344 = vpack.c.b16 %v2329, %v2328
        %v2345 = vpack.c.b16 %v2331, %v2330
        %v2346 = vpack.c.b16 %v2333, %v2332
        %v2347 = vpack.c.b16 %v2335, %v2334
        %v2348 = vpack.c.b16 %v2337, %v2336
        %v2349 = vpack.c.b16 %v2339, %v2338
        %v2350 = vpack.c.b16 %v2341, %v2340
        %v2351 = vpack.c.b16 %v2343, %v2342
        %2360 = vmatpush.bf16.xpose.msra.mxu0 %v2351
        %2361 = vmatpush.bf16.xpose.msra.mxu0 %v2350
        %2362 = vmatpush.bf16.xpose.msra.mxu0 %v2349
        %2363 = vmatpush.bf16.xpose.msra.mxu0 %v2348
        %2364 = vmatpush.bf16.xpose.msra.mxu0 %v2347
        %2365 = vmatpush.bf16.xpose.msra.mxu0 %v2346
        %2366 = vmatpush.bf16.xpose.msra.mxu0 %v2345
        %2367 = vmatpush.bf16.xpose.msra.mxu0 %v2344
        %2368 = vmatmul.bf16.gmra.mxu0 %v926
        %v2369 = vpop.f32.mrf.mxu0
        %v2370 = vadd.f32 0.0, %v2369
        %v2371 = vpop.f32.mrf.mxu0
        %2372 = vdwg.mxu0
        %v2389 = vunpack.c.l.b16 %v2264
        %v2390 = vunpack.c.l.b16 %v2265
        %v2391 = vunpack.c.l.b16 %v2266
        %v2392 = vunpack.c.l.b16 %v2267
        %v2393 = vunpack.c.l.b16 %v2268
        %v2394 = vunpack.c.l.b16 %v2269
        %v2395 = vunpack.c.l.b16 %v2270
        %v2396 = vunpack.c.l.b16 %v2271
        %v2397 = vunpack.c.l.b16 %v2272
        %v2398 = vunpack.c.l.b16 %v2273
        %v2399 = vunpack.c.l.b16 %v2274
        %v2400 = vunpack.c.l.b16 %v2275
        %v2401 = vunpack.c.l.b16 %v2276
        %v2402 = vunpack.c.l.b16 %v2277
        %v2403 = vunpack.c.l.b16 %v2278
        %v2404 = vunpack.c.l.b16 %v2279
        %v2405 = vpack.c.b16 %v2390, %v2389
        %v2406 = vpack.c.b16 %v2392, %v2391
        %v2407 = vpack.c.b16 %v2394, %v2393
        %v2408 = vpack.c.b16 %v2396, %v2395
        %v2409 = vpack.c.b16 %v2398, %v2397
        %v2410 = vpack.c.b16 %v2400, %v2399
        %v2411 = vpack.c.b16 %v2402, %v2401
        %v2412 = vpack.c.b16 %v2404, %v2403
        %2421 = vmatpush.bf16.xpose.msra.mxu0 %v2412
        %2422 = vmatpush.bf16.xpose.msra.mxu0 %v2411
        %2423 = vmatpush.bf16.xpose.msra.mxu0 %v2410
        %2424 = vmatpush.bf16.xpose.msra.mxu0 %v2409
        %2425 = vmatpush.bf16.xpose.msra.mxu0 %v2408
        %2426 = vmatpush.bf16.xpose.msra.mxu0 %v2407
        %2427 = vmatpush.bf16.xpose.msra.mxu0 %v2406
        %2428 = vmatpush.bf16.xpose.msra.mxu0 %v2405
        %2429 = vmatmul.bf16.gmra.mxu0 %v927
        %v2430 = vpop.f32.mrf.mxu0
        %v2431 = vadd.f32 0.0, %v2430
        %v2432 = vpop.f32.mrf.mxu0
        %2433 = vdwg.mxu0
        %v2450 = vunpack.c.l.b16 %v2280
        %v2451 = vunpack.c.l.b16 %v2281
        %v2452 = vunpack.c.l.b16 %v2282
        %v2453 = vunpack.c.l.b16 %v2283
        %v2454 = vunpack.c.l.b16 %v2284
        %v2455 = vunpack.c.l.b16 %v2285
        %v2456 = vunpack.c.l.b16 %v2286
        %v2457 = vunpack.c.l.b16 %v2287
        %v2458 = vunpack.c.l.b16 %v2288
        %v2459 = vunpack.c.l.b16 %v2289
        %v2460 = vunpack.c.l.b16 %v2290
        %v2461 = vunpack.c.l.b16 %v2291
        %v2462 = vunpack.c.l.b16 %v2292
        %v2463 = vunpack.c.l.b16 %v2293
        %v2464 = vunpack.c.l.b16 %v2294
        %v2465 = vunpack.c.l.b16 %v2295
        %v2466 = vpack.c.b16 %v2451, %v2450
        %v2467 = vpack.c.b16 %v2453, %v2452
        %v2468 = vpack.c.b16 %v2455, %v2454
        %v2469 = vpack.c.b16 %v2457, %v2456
        %v2470 = vpack.c.b16 %v2459, %v2458
        %v2471 = vpack.c.b16 %v2461, %v2460
        %v2472 = vpack.c.b16 %v2463, %v2462
        %v2473 = vpack.c.b16 %v2465, %v2464
        %2482 = vmatpush.bf16.xpose.msra.mxu0 %v2473
        %2483 = vmatpush.bf16.xpose.msra.mxu0 %v2472
        %2484 = vmatpush.bf16.xpose.msra.mxu0 %v2471
        %2485 = vmatpush.bf16.xpose.msra.mxu0 %v2470
        %2486 = vmatpush.bf16.xpose.msra.mxu0 %v2469
        %2487 = vmatpush.bf16.xpose.msra.mxu0 %v2468
        %2488 = vmatpush.bf16.xpose.msra.mxu0 %v2467
        %2489 = vmatpush.bf16.xpose.msra.mxu0 %v2466
        %2490 = vmatmul.bf16.gmra.mxu0 %v928
        %v2491 = vpop.f32.mrf.mxu0
        %v2492 = vadd.f32 0.0, %v2491
        %v2493 = vpop.f32.mrf.mxu0
        %2494 = vdwg.mxu0
        %v2511 = vunpack.c.l.b16 %v2296
        %v2512 = vunpack.c.l.b16 %v2297
        %v2513 = vunpack.c.l.b16 %v2298
        %v2514 = vunpack.c.l.b16 %v2299
        %v2515 = vunpack.c.l.b16 %v2300
        %v2516 = vunpack.c.l.b16 %v2301
        %v2517 = vunpack.c.l.b16 %v2302
        %v2518 = vunpack.c.l.b16 %v2303
        %v2519 = vunpack.c.l.b16 %v2304
        %v2520 = vunpack.c.l.b16 %v2305
        %v2521 = vunpack.c.l.b16 %v2306
        %v2522 = vunpack.c.l.b16 %v2307
        %v2523 = vunpack.c.l.b16 %v2308
        %v2524 = vunpack.c.l.b16 %v2309
        %v2525 = vunpack.c.l.b16 %v2310
        %v2526 = vunpack.c.l.b16 %v2311
        %v2527 = vpack.c.b16 %v2512, %v2511
        %v2528 = vpack.c.b16 %v2514, %v2513
        %v2529 = vpack.c.b16 %v2516, %v2515
        %v2530 = vpack.c.b16 %v2518, %v2517
        %v2531 = vpack.c.b16 %v2520, %v2519
        %v2532 = vpack.c.b16 %v2522, %v2521
        %v2533 = vpack.c.b16 %v2524, %v2523
        %v2534 = vpack.c.b16 %v2526, %v2525
        %2543 = vmatpush.bf16.xpose.msra.mxu0 %v2534
        %2544 = vmatpush.bf16.xpose.msra.mxu0 %v2533
        %2545 = vmatpush.bf16.xpose.msra.mxu0 %v2532
        %2546 = vmatpush.bf16.xpose.msra.mxu0 %v2531
        %2547 = vmatpush.bf16.xpose.msra.mxu0 %v2530
        %2548 = vmatpush.bf16.xpose.msra.mxu0 %v2529
        %2549 = vmatpush.bf16.xpose.msra.mxu0 %v2528
        %2550 = vmatpush.bf16.xpose.msra.mxu0 %v2527
        %2551 = vmatmul.bf16.gmra.mxu0 %v929
        %v2552 = vpop.f32.mrf.mxu0
        %v2553 = vadd.f32 0.0, %v2552
        %v2554 = vpop.f32.mrf.mxu0
        %2555 = vdwg.mxu0
        %2556 = vxpose.xlu0.b32.start [1/16] %v2370, 128
        %2557 = vxpose.xlu0.b32.cont [2/16] %v2431, 128
        %2558 = vxpose.xlu0.b32.cont [3/16] %v2492, 128
        %2559 = vxpose.xlu0.b32.cont [4/16] %v2553, 128
        %2560 = vxpose.xlu0.b32.cont [5/16] 0.0, 128
        %2561 = vxpose.xlu0.b32.cont [6/16] 0.0, 128
        %2562 = vxpose.xlu0.b32.cont [7/16] 0.0, 128
        %2563 = vxpose.xlu0.b32.cont [8/16] 0.0, 128
        %2564 = vxpose.xlu0.b32.cont [9/16] 0.0, 128
        %2565 = vxpose.xlu0.b32.cont [10/16] 0.0, 128
        %2566 = vxpose.xlu0.b32.cont [11/16] 0.0, 128
        %2567 = vxpose.xlu0.b32.cont [12/16] 0.0, 128
        %2568 = vxpose.xlu0.b32.cont [13/16] 0.0, 128
        %2569 = vxpose.xlu0.b32.cont [14/16] 0.0, 128
        %2570 = vxpose.xlu0.b32.cont [15/16] 0.0, 128
        %2571 = vxpose.xlu0.b32.end [16/16] 0.0, 128
        %v2572 = vpop.trf.xlu0
        %v2573 = vpop.trf.xlu0
        %v2574 = vpop.trf.xlu0
        %v2575 = vpop.trf.xlu0
        %v2576 = vpop.trf.xlu0
        %v2577 = vpop.trf.xlu0
        %v2578 = vpop.trf.xlu0
        %v2579 = vpop.trf.xlu0
        %v2580 = vpop.trf.xlu0
        %v2581 = vpop.trf.xlu0
        %v2582 = vpop.trf.xlu0
        %v2583 = vpop.trf.xlu0
        %v2584 = vpop.trf.xlu0
        %v2585 = vpop.trf.xlu0
        %v2586 = vpop.trf.xlu0
        %v2587 = vpop.trf.xlu0
        %v2588 = vadd.f32 %v2572, %v518
        %v2589 = vadd.f32 %v2573, %v519
        %v2590 = vadd.f32 %v2574, %v520
        %v2591 = vadd.f32 %v2575, %v521
        %v2592 = vadd.f32 %v2576, %v522
        %v2593 = vadd.f32 %v2577, %v523
        %v2594 = vadd.f32 %v2578, %v524
        %v2595 = vadd.f32 %v2579, %v525
        %v2596 = vadd.f32 %v2580, %v526
        %v2597 = vadd.f32 %v2581, %v527
        %v2598 = vadd.f32 %v2582, %v528
        %v2599 = vadd.f32 %v2583, %v529
        %v2600 = vadd.f32 %v2584, %v530
        %v2601 = vadd.f32 %v2585, %v531
        %v2602 = vadd.f32 %v2586, %v532
        %v2603 = vadd.f32 %v2587, %v533
        %v2604 = vsel %vm672, %v2588, 0.0
        %2605 = vadd.xlane.f32.xlu0 %v2604
        %v2606 = vpop.xlane.xlu0 %2605
        %v2607 = vsel %vm672, %v2589, 0.0
        %2608 = vadd.xlane.f32.xlu0 %v2607
        %v2609 = vpop.xlane.xlu0 %2608
        %v2610 = vsel %vm672, %v2590, 0.0
        %2611 = vadd.xlane.f32.xlu0 %v2610
        %v2612 = vpop.xlane.xlu0 %2611
        %v2613 = vsel %vm672, %v2591, 0.0
        %2614 = vadd.xlane.f32.xlu0 %v2613
        %v2615 = vpop.xlane.xlu0 %2614
        %v2616 = vsel %vm672, %v2592, 0.0
        %2617 = vadd.xlane.f32.xlu0 %v2616
        %v2618 = vpop.xlane.xlu0 %2617
        %v2619 = vsel %vm672, %v2593, 0.0
        %2620 = vadd.xlane.f32.xlu0 %v2619
        %v2621 = vpop.xlane.xlu0 %2620
        %v2622 = vsel %vm672, %v2594, 0.0
        %2623 = vadd.xlane.f32.xlu0 %v2622
        %v2624 = vpop.xlane.xlu0 %2623
        %v2625 = vsel %vm672, %v2595, 0.0
        %2626 = vadd.xlane.f32.xlu0 %v2625
        %v2627 = vpop.xlane.xlu0 %2626
        %v2628 = vsel %vm672, %v2596, 0.0
        %2629 = vadd.xlane.f32.xlu0 %v2628
        %v2630 = vpop.xlane.xlu0 %2629
        %v2631 = vsel %vm672, %v2597, 0.0
        %2632 = vadd.xlane.f32.xlu0 %v2631
        %v2633 = vpop.xlane.xlu0 %2632
        %v2634 = vsel %vm672, %v2598, 0.0
        %2635 = vadd.xlane.f32.xlu0 %v2634
        %v2636 = vpop.xlane.xlu0 %2635
        %v2637 = vsel %vm672, %v2599, 0.0
        %2638 = vadd.xlane.f32.xlu0 %v2637
        %v2639 = vpop.xlane.xlu0 %2638
        %v2640 = vsel %vm672, %v2600, 0.0
        %2641 = vadd.xlane.f32.xlu0 %v2640
        %v2642 = vpop.xlane.xlu0 %2641
        %v2643 = vsel %vm672, %v2601, 0.0
        %2644 = vadd.xlane.f32.xlu0 %v2643
        %v2645 = vpop.xlane.xlu0 %2644
        %v2646 = vsel %vm672, %v2602, 0.0
        %2647 = vadd.xlane.f32.xlu0 %v2646
        %v2648 = vpop.xlane.xlu0 %2647
        %v2649 = vsel %vm672, %v2603, 0.0
        %2650 = vadd.xlane.f32.xlu0 %v2649
        %v2651 = vpop.xlane.xlu0 %2650
        %v2652 = vrcp.pop 32.0
        %v2653 = vmul.f32 32.0, %v2652
        %v2654 = vsub.f32 1.0, %v2653
        %v2655 = vmul.f32 %v2652, %v2654
        %v2656 = vadd.f32 %v2652, %v2655
        %vm2657 = vweird.f32 %v2652
        %v2658 = vsel %vm2657, %v2652, %v2656
        %v2659 = vmul.f32 %v2606, %v2658
        %v2660 = vmul.f32 %v2609, %v2658
        %v2661 = vmul.f32 %v2612, %v2658
        %v2662 = vmul.f32 %v2615, %v2658
        %v2663 = vmul.f32 %v2618, %v2658
        %v2664 = vmul.f32 %v2621, %v2658
        %v2665 = vmul.f32 %v2624, %v2658
        %v2666 = vmul.f32 %v2627, %v2658
        %v2667 = vmul.f32 %v2630, %v2658
        %v2668 = vmul.f32 %v2633, %v2658
        %v2669 = vmul.f32 %v2636, %v2658
        %v2670 = vmul.f32 %v2639, %v2658
        %v2671 = vmul.f32 %v2642, %v2658
        %v2672 = vmul.f32 %v2645, %v2658
        %v2673 = vmul.f32 %v2648, %v2658
        %v2674 = vmul.f32 %v2651, %v2658
        %v2675 = vsub.f32 %v2588, %v2659
        %v2676 = vsub.f32 %v2589, %v2660
        %v2677 = vsub.f32 %v2590, %v2661
        %v2678 = vsub.f32 %v2591, %v2662
        %v2679 = vsub.f32 %v2592, %v2663
        %v2680 = vsub.f32 %v2593, %v2664
        %v2681 = vsub.f32 %v2594, %v2665
        %v2682 = vsub.f32 %v2595, %v2666
        %v2683 = vsub.f32 %v2596, %v2667
        %v2684 = vsub.f32 %v2597, %v2668
        %v2685 = vsub.f32 %v2598, %v2669
        %v2686 = vsub.f32 %v2599, %v2670
        %v2687 = vsub.f32 %v2600, %v2671
        %v2688 = vsub.f32 %v2601, %v2672
        %v2689 = vsub.f32 %v2602, %v2673
        %v2690 = vsub.f32 %v2603, %v2674
        %v2691 = vmul.f32 %v2675, %v2675
        %v2692 = vmul.f32 %v2676, %v2676
        %v2693 = vmul.f32 %v2677, %v2677
        %v2694 = vmul.f32 %v2678, %v2678
        %v2695 = vmul.f32 %v2679, %v2679
        %v2696 = vmul.f32 %v2680, %v2680
        %v2697 = vmul.f32 %v2681, %v2681
        %v2698 = vmul.f32 %v2682, %v2682
        %v2699 = vmul.f32 %v2683, %v2683
        %v2700 = vmul.f32 %v2684, %v2684
        %v2701 = vmul.f32 %v2685, %v2685
        %v2702 = vmul.f32 %v2686, %v2686
        %v2703 = vmul.f32 %v2687, %v2687
        %v2704 = vmul.f32 %v2688, %v2688
        %v2705 = vmul.f32 %v2689, %v2689
        %v2706 = vmul.f32 %v2690, %v2690
        %v2707 = vsel %vm672, %v2691, 0.0
        %2708 = vadd.xlane.f32.xlu0 %v2707
        %v2709 = vpop.xlane.xlu0 %2708
        %v2710 = vsel %vm672, %v2692, 0.0
        %2711 = vadd.xlane.f32.xlu0 %v2710
        %v2712 = vpop.xlane.xlu0 %2711
        %v2713 = vsel %vm672, %v2693, 0.0
        %2714 = vadd.xlane.f32.xlu0 %v2713
        %v2715 = vpop.xlane.xlu0 %2714
        %v2716 = vsel %vm672, %v2694, 0.0
        %2717 = vadd.xlane.f32.xlu0 %v2716
        %v2718 = vpop.xlane.xlu0 %2717
        %v2719 = vsel %vm672, %v2695, 0.0
        %2720 = vadd.xlane.f32.xlu0 %v2719
        %v2721 = vpop.xlane.xlu0 %2720
        %v2722 = vsel %vm672, %v2696, 0.0
        %2723 = vadd.xlane.f32.xlu0 %v2722
        %v2724 = vpop.xlane.xlu0 %2723
        %v2725 = vsel %vm672, %v2697, 0.0
        %2726 = vadd.xlane.f32.xlu0 %v2725
        %v2727 = vpop.xlane.xlu0 %2726
        %v2728 = vsel %vm672, %v2698, 0.0
        %2729 = vadd.xlane.f32.xlu0 %v2728
        %v2730 = vpop.xlane.xlu0 %2729
        %v2731 = vsel %vm672, %v2699, 0.0
        %2732 = vadd.xlane.f32.xlu0 %v2731
        %v2733 = vpop.xlane.xlu0 %2732
        %v2734 = vsel %vm672, %v2700, 0.0
        %2735 = vadd.xlane.f32.xlu0 %v2734
        %v2736 = vpop.xlane.xlu0 %2735
        %v2737 = vsel %vm672, %v2701, 0.0
        %2738 = vadd.xlane.f32.xlu0 %v2737
        %v2739 = vpop.xlane.xlu0 %2738
        %v2740 = vsel %vm672, %v2702, 0.0
        %2741 = vadd.xlane.f32.xlu0 %v2740
        %v2742 = vpop.xlane.xlu0 %2741
        %v2743 = vsel %vm672, %v2703, 0.0
        %2744 = vadd.xlane.f32.xlu0 %v2743
        %v2745 = vpop.xlane.xlu0 %2744
        %v2746 = vsel %vm672, %v2704, 0.0
        %2747 = vadd.xlane.f32.xlu0 %v2746
        %v2748 = vpop.xlane.xlu0 %2747
        %v2749 = vsel %vm672, %v2705, 0.0
        %2750 = vadd.xlane.f32.xlu0 %v2749
        %v2751 = vpop.xlane.xlu0 %2750
        %v2752 = vsel %vm672, %v2706, 0.0
        %2753 = vadd.xlane.f32.xlu0 %v2752
        %v2754 = vpop.xlane.xlu0 %2753
        %v2755 = vmul.f32 %v2709, %v2658
        %v2756 = vmul.f32 %v2712, %v2658
        %v2757 = vmul.f32 %v2715, %v2658
        %v2758 = vmul.f32 %v2718, %v2658
        %v2759 = vmul.f32 %v2721, %v2658
        %v2760 = vmul.f32 %v2724, %v2658
        %v2761 = vmul.f32 %v2727, %v2658
        %v2762 = vmul.f32 %v2730, %v2658
        %v2763 = vmul.f32 %v2733, %v2658
        %v2764 = vmul.f32 %v2736, %v2658
        %v2765 = vmul.f32 %v2739, %v2658
        %v2766 = vmul.f32 %v2742, %v2658
        %v2767 = vmul.f32 %v2745, %v2658
        %v2768 = vmul.f32 %v2748, %v2658
        %v2769 = vmul.f32 %v2751, %v2658
        %v2770 = vmul.f32 %v2754, %v2658
        %v2771 = vadd.f32 %v2755, 1e-05
        %v2772 = vadd.f32 %v2756, 1e-05
        %v2773 = vadd.f32 %v2757, 1e-05
        %v2774 = vadd.f32 %v2758, 1e-05
        %v2775 = vadd.f32 %v2759, 1e-05
        %v2776 = vadd.f32 %v2760, 1e-05
        %v2777 = vadd.f32 %v2761, 1e-05
        %v2778 = vadd.f32 %v2762, 1e-05
        %v2779 = vadd.f32 %v2763, 1e-05
        %v2780 = vadd.f32 %v2764, 1e-05
        %v2781 = vadd.f32 %v2765, 1e-05
        %v2782 = vadd.f32 %v2766, 1e-05
        %v2783 = vadd.f32 %v2767, 1e-05
        %v2784 = vadd.f32 %v2768, 1e-05
        %v2785 = vadd.f32 %v2769, 1e-05
        %v2786 = vadd.f32 %v2770, 1e-05
        %v2787 = vrsqrt.pop %v2771
        %v2788 = vmul.f32 %v2787, %v2771
        %v2789 = vmul.f32 %v2788, %v2787
        %v2790 = vmul.f32 0.5, %v2789
        %v2791 = vsub.f32 1.5, %v2790
        %v2792 = vmul.f32 %v2787, %v2791
        %vm2793 = vweird.f32 %v2771
        %vm2794 = vweird.f32 %v2787
        %vm2795 = vmor %vm2793, %vm2794
        %v2796 = vsel %vm2795, %v2787, %v2792
        %v2797 = vrsqrt.pop %v2772
        %v2798 = vmul.f32 %v2797, %v2772
        %v2799 = vmul.f32 %v2798, %v2797
        %v2800 = vmul.f32 0.5, %v2799
        %v2801 = vsub.f32 1.5, %v2800
        %v2802 = vmul.f32 %v2797, %v2801
        %vm2803 = vweird.f32 %v2772
        %vm2804 = vweird.f32 %v2797
        %vm2805 = vmor %vm2803, %vm2804
        %v2806 = vsel %vm2805, %v2797, %v2802
        %v2807 = vrsqrt.pop %v2773
        %v2808 = vmul.f32 %v2807, %v2773
        %v2809 = vmul.f32 %v2808, %v2807
        %v2810 = vmul.f32 0.5, %v2809
        %v2811 = vsub.f32 1.5, %v2810
        %v2812 = vmul.f32 %v2807, %v2811
        %vm2813 = vweird.f32 %v2773
        %vm2814 = vweird.f32 %v2807
        %vm2815 = vmor %vm2813, %vm2814
        %v2816 = vsel %vm2815, %v2807, %v2812
        %v2817 = vrsqrt.pop %v2774
        %v2818 = vmul.f32 %v2817, %v2774
        %v2819 = vmul.f32 %v2818, %v2817
        %v2820 = vmul.f32 0.5, %v2819
        %v2821 = vsub.f32 1.5, %v2820
        %v2822 = vmul.f32 %v2817, %v2821
        %vm2823 = vweird.f32 %v2774
        %vm2824 = vweird.f32 %v2817
        %vm2825 = vmor %vm2823, %vm2824
        %v2826 = vsel %vm2825, %v2817, %v2822
        %v2827 = vrsqrt.pop %v2775
        %v2828 = vmul.f32 %v2827, %v2775
        %v2829 = vmul.f32 %v2828, %v2827
        %v2830 = vmul.f32 0.5, %v2829
        %v2831 = vsub.f32 1.5, %v2830
        %v2832 = vmul.f32 %v2827, %v2831
        %vm2833 = vweird.f32 %v2775
        %vm2834 = vweird.f32 %v2827
        %vm2835 = vmor %vm2833, %vm2834
        %v2836 = vsel %vm2835, %v2827, %v2832
        %v2837 = vrsqrt.pop %v2776
        %v2838 = vmul.f32 %v2837, %v2776
        %v2839 = vmul.f32 %v2838, %v2837
        %v2840 = vmul.f32 0.5, %v2839
        %v2841 = vsub.f32 1.5, %v2840
        %v2842 = vmul.f32 %v2837, %v2841
        %vm2843 = vweird.f32 %v2776
        %vm2844 = vweird.f32 %v2837
        %vm2845 = vmor %vm2843, %vm2844
        %v2846 = vsel %vm2845, %v2837, %v2842
        %v2847 = vrsqrt.pop %v2777
        %v2848 = vmul.f32 %v2847, %v2777
        %v2849 = vmul.f32 %v2848, %v2847
        %v2850 = vmul.f32 0.5, %v2849
        %v2851 = vsub.f32 1.5, %v2850
        %v2852 = vmul.f32 %v2847, %v2851
        %vm2853 = vweird.f32 %v2777
        %vm2854 = vweird.f32 %v2847
        %vm2855 = vmor %vm2853, %vm2854
        %v2856 = vsel %vm2855, %v2847, %v2852
        %v2857 = vrsqrt.pop %v2778
        %v2858 = vmul.f32 %v2857, %v2778
        %v2859 = vmul.f32 %v2858, %v2857
        %v2860 = vmul.f32 0.5, %v2859
        %v2861 = vsub.f32 1.5, %v2860
        %v2862 = vmul.f32 %v2857, %v2861
        %vm2863 = vweird.f32 %v2778
        %vm2864 = vweird.f32 %v2857
        %vm2865 = vmor %vm2863, %vm2864
        %v2866 = vsel %vm2865, %v2857, %v2862
        %v2867 = vrsqrt.pop %v2779
        %v2868 = vmul.f32 %v2867, %v2779
        %v2869 = vmul.f32 %v2868, %v2867
        %v2870 = vmul.f32 0.5, %v2869
        %v2871 = vsub.f32 1.5, %v2870
        %v2872 = vmul.f32 %v2867, %v2871
        %vm2873 = vweird.f32 %v2779
        %vm2874 = vweird.f32 %v2867
        %vm2875 = vmor %vm2873, %vm2874
        %v2876 = vsel %vm2875, %v2867, %v2872
        %v2877 = vrsqrt.pop %v2780
        %v2878 = vmul.f32 %v2877, %v2780
        %v2879 = vmul.f32 %v2878, %v2877
        %v2880 = vmul.f32 0.5, %v2879
        %v2881 = vsub.f32 1.5, %v2880
        %v2882 = vmul.f32 %v2877, %v2881
        %vm2883 = vweird.f32 %v2780
        %vm2884 = vweird.f32 %v2877
        %vm2885 = vmor %vm2883, %vm2884
        %v2886 = vsel %vm2885, %v2877, %v2882
        %v2887 = vrsqrt.pop %v2781
        %v2888 = vmul.f32 %v2887, %v2781
        %v2889 = vmul.f32 %v2888, %v2887
        %v2890 = vmul.f32 0.5, %v2889
        %v2891 = vsub.f32 1.5, %v2890
        %v2892 = vmul.f32 %v2887, %v2891
        %vm2893 = vweird.f32 %v2781
        %vm2894 = vweird.f32 %v2887
        %vm2895 = vmor %vm2893, %vm2894
        %v2896 = vsel %vm2895, %v2887, %v2892
        %v2897 = vrsqrt.pop %v2782
        %v2898 = vmul.f32 %v2897, %v2782
        %v2899 = vmul.f32 %v2898, %v2897
        %v2900 = vmul.f32 0.5, %v2899
        %v2901 = vsub.f32 1.5, %v2900
        %v2902 = vmul.f32 %v2897, %v2901
        %vm2903 = vweird.f32 %v2782
        %vm2904 = vweird.f32 %v2897
        %vm2905 = vmor %vm2903, %vm2904
        %v2906 = vsel %vm2905, %v2897, %v2902
        %v2907 = vrsqrt.pop %v2783
        %v2908 = vmul.f32 %v2907, %v2783
        %v2909 = vmul.f32 %v2908, %v2907
        %v2910 = vmul.f32 0.5, %v2909
        %v2911 = vsub.f32 1.5, %v2910
        %v2912 = vmul.f32 %v2907, %v2911
        %vm2913 = vweird.f32 %v2783
        %vm2914 = vweird.f32 %v2907
        %vm2915 = vmor %vm2913, %vm2914
        %v2916 = vsel %vm2915, %v2907, %v2912
        %v2917 = vrsqrt.pop %v2784
        %v2918 = vmul.f32 %v2917, %v2784
        %v2919 = vmul.f32 %v2918, %v2917
        %v2920 = vmul.f32 0.5, %v2919
        %v2921 = vsub.f32 1.5, %v2920
        %v2922 = vmul.f32 %v2917, %v2921
        %vm2923 = vweird.f32 %v2784
        %vm2924 = vweird.f32 %v2917
        %vm2925 = vmor %vm2923, %vm2924
        %v2926 = vsel %vm2925, %v2917, %v2922
        %v2927 = vrsqrt.pop %v2785
        %v2928 = vmul.f32 %v2927, %v2785
        %v2929 = vmul.f32 %v2928, %v2927
        %v2930 = vmul.f32 0.5, %v2929
        %v2931 = vsub.f32 1.5, %v2930
        %v2932 = vmul.f32 %v2927, %v2931
        %vm2933 = vweird.f32 %v2785
        %vm2934 = vweird.f32 %v2927
        %vm2935 = vmor %vm2933, %vm2934
        %v2936 = vsel %vm2935, %v2927, %v2932
        %v2937 = vrsqrt.pop %v2786
        %v2938 = vmul.f32 %v2937, %v2786
        %v2939 = vmul.f32 %v2938, %v2937
        %v2940 = vmul.f32 0.5, %v2939
        %v2941 = vsub.f32 1.5, %v2940
        %v2942 = vmul.f32 %v2937, %v2941
        %vm2943 = vweird.f32 %v2786
        %vm2944 = vweird.f32 %v2937
        %vm2945 = vmor %vm2943, %vm2944
        %v2946 = vsel %vm2945, %v2937, %v2942
        %v2947 = vmul.f32 %v2675, %v2796
        %v2948 = vmul.f32 %v2676, %v2806
        %v2949 = vmul.f32 %v2677, %v2816
        %v2950 = vmul.f32 %v2678, %v2826
        %v2951 = vmul.f32 %v2679, %v2836
        %v2952 = vmul.f32 %v2680, %v2846
        %v2953 = vmul.f32 %v2681, %v2856
        %v2954 = vmul.f32 %v2682, %v2866
        %v2955 = vmul.f32 %v2683, %v2876
        %v2956 = vmul.f32 %v2684, %v2886
        %v2957 = vmul.f32 %v2685, %v2896
        %v2958 = vmul.f32 %v2686, %v2906
        %v2959 = vmul.f32 %v2687, %v2916
        %v2960 = vmul.f32 %v2688, %v2926
        %v2961 = vmul.f32 %v2689, %v2936
        %v2962 = vmul.f32 %v2690, %v2946
        %v2963 = vld [vmem:[%s5] sm:$0x1]
        %v2965 = vperm.slane %v2963, 0
        %v2967 = vmul.f32 %v2947, %v2965
        %v2968 = vmul.f32 %v2948, %v2965
        %v2969 = vmul.f32 %v2949, %v2965
        %v2970 = vmul.f32 %v2950, %v2965
        %v2971 = vmul.f32 %v2951, %v2965
        %v2972 = vmul.f32 %v2952, %v2965
        %v2973 = vmul.f32 %v2953, %v2965
        %v2974 = vmul.f32 %v2954, %v2965
        %v2975 = vmul.f32 %v2955, %v2965
        %v2976 = vmul.f32 %v2956, %v2965
        %v2977 = vmul.f32 %v2957, %v2965
        %v2978 = vmul.f32 %v2958, %v2965
        %v2979 = vmul.f32 %v2959, %v2965
        %v2980 = vmul.f32 %v2960, %v2965
        %v2981 = vmul.f32 %v2961, %v2965
        %v2982 = vmul.f32 %v2962, %v2965
        %v2983 = vld [vmem:[%s6] sm:$0x1]
        %v2985 = vperm.slane %v2983, 0
        %v2987 = vadd.f32 %v2967, %v2985
        %v2988 = vadd.f32 %v2968, %v2985
        %v2989 = vadd.f32 %v2969, %v2985
        %v2990 = vadd.f32 %v2970, %v2985
        %v2991 = vadd.f32 %v2971, %v2985
        %v2992 = vadd.f32 %v2972, %v2985
        %v2993 = vadd.f32 %v2973, %v2985
        %v2994 = vadd.f32 %v2974, %v2985
        %v2995 = vadd.f32 %v2975, %v2985
        %v2996 = vadd.f32 %v2976, %v2985
        %v2997 = vadd.f32 %v2977, %v2985
        %v2998 = vadd.f32 %v2978, %v2985
        %v2999 = vadd.f32 %v2979, %v2985
        %v3000 = vadd.f32 %v2980, %v2985
        %v3001 = vadd.f32 %v2981, %v2985
        %v3002 = vadd.f32 %v2982, %v2985
        %v3003 = vpack.c.bf16 %v2988, %v2987
        %v3004 = vpack.c.bf16 %v2990, %v2989
        %v3005 = vpack.c.bf16 %v2992, %v2991
        %v3006 = vpack.c.bf16 %v2994, %v2993
        %v3007 = vpack.c.bf16 %v2996, %v2995
        %v3008 = vpack.c.bf16 %v2998, %v2997
        %v3009 = vpack.c.bf16 %v3000, %v2999
        %v3010 = vpack.c.bf16 %v3002, %v3001
        %v3011 = vld [vmem:[%s7] sm:$0xf]
        %v3012 = vld [vmem:[%s7 + $0x4] sm:$0xf]
        %v3013 = vld [vmem:[%s7 + $0x8] sm:$0xf]
        %v3014 = vld [vmem:[%s7 + $0xc] sm:$0xf]
        %v3015 = vld [vmem:[%s8] sm:$0x1]
        %v3017 = vperm.slane %v3015, 0
        %v3023 = vunpack.c.l.b16 %v3011
        %v3024 = vunpack.c.l.b16 %v3012
        %v3025 = vunpack.c.l.b16 %v3013
        %v3026 = vunpack.c.l.b16 %v3014
        %v3027 = vpack.c.b16 %v3024, %v3023
        %v3028 = vpack.c.b16 %v3026, %v3025
        %v3032 = vsel %vm672, %v3003, 0
        %v3035 = vsel %vm672, %v3004, 0
        %v3038 = vsel %vm672, %v3005, 0
        %v3041 = vsel %vm672, %v3006, 0
        %v3044 = vsel %vm672, %v3007, 0
        %v3047 = vsel %vm672, %v3008, 0
        %v3050 = vsel %vm672, %v3009, 0
        %v3053 = vsel %vm672, %v3010, 0
        %3055 = vmatpush.bf16.msra.mxu0 0
        %3056 = vmatpush.bf16.msra.mxu0 0
        %3057 = vmatpush.bf16.msra.mxu0 0
        %3058 = vmatpush.bf16.msra.mxu0 0
        %3059 = vmatpush.bf16.msra.mxu0 0
        %3060 = vmatpush.bf16.msra.mxu0 0
        %3061 = vmatpush.bf16.msra.mxu0 %v3028
        %3062 = vmatpush.bf16.msra.mxu0 %v3027
        %3063 = vmatmul.bf16.gmra.mxu0 %v3032
        %v3064 = vpop.f32.mrf.mxu0
        %v3065 = vadd.f32 %v3017, %v3064
        %v3066 = vpop.f32.mrf.mxu0
        %v3067 = vadd.f32 %v3017, %v3066
        %3068 = vmatmul.bf16.gmra.mxu0 %v3035
        %v3069 = vpop.f32.mrf.mxu0
        %v3070 = vadd.f32 %v3017, %v3069
        %v3071 = vpop.f32.mrf.mxu0
        %v3072 = vadd.f32 %v3017, %v3071
        %3073 = vmatmul.bf16.gmra.mxu0 %v3038
        %v3074 = vpop.f32.mrf.mxu0
        %v3075 = vadd.f32 %v3017, %v3074
        %v3076 = vpop.f32.mrf.mxu0
        %v3077 = vadd.f32 %v3017, %v3076
        %3078 = vmatmul.bf16.gmra.mxu0 %v3041
        %v3079 = vpop.f32.mrf.mxu0
        %v3080 = vadd.f32 %v3017, %v3079
        %v3081 = vpop.f32.mrf.mxu0
        %v3082 = vadd.f32 %v3017, %v3081
        %3083 = vmatmul.bf16.gmra.mxu0 %v3044
        %v3084 = vpop.f32.mrf.mxu0
        %v3085 = vadd.f32 %v3017, %v3084
        %v3086 = vpop.f32.mrf.mxu0
        %v3087 = vadd.f32 %v3017, %v3086
        %3088 = vmatmul.bf16.gmra.mxu0 %v3047
        %v3089 = vpop.f32.mrf.mxu0
        %v3090 = vadd.f32 %v3017, %v3089
        %v3091 = vpop.f32.mrf.mxu0
        %v3092 = vadd.f32 %v3017, %v3091
        %3093 = vmatmul.bf16.gmra.mxu0 %v3050
        %v3094 = vpop.f32.mrf.mxu0
        %v3095 = vadd.f32 %v3017, %v3094
        %v3096 = vpop.f32.mrf.mxu0
        %v3097 = vadd.f32 %v3017, %v3096
        %3098 = vmatmul.bf16.gmra.mxu0 %v3053
        %v3099 = vpop.f32.mrf.mxu0
        %v3100 = vadd.f32 %v3017, %v3099
        %v3101 = vpop.f32.mrf.mxu0
        %v3102 = vadd.f32 %v3017, %v3101
        %3103 = vdwg.mxu0
        %v3104 = vmax.f32 %v3065, 0.0
        %v3105 = vmax.f32 %v3067, 0.0
        %v3106 = vmax.f32 %v3070, 0.0
        %v3107 = vmax.f32 %v3072, 0.0
        %v3108 = vmax.f32 %v3075, 0.0
        %v3109 = vmax.f32 %v3077, 0.0
        %v3110 = vmax.f32 %v3080, 0.0
        %v3111 = vmax.f32 %v3082, 0.0
        %v3112 = vmax.f32 %v3085, 0.0
        %v3113 = vmax.f32 %v3087, 0.0
        %v3114 = vmax.f32 %v3090, 0.0
        %v3115 = vmax.f32 %v3092, 0.0
        %v3116 = vmax.f32 %v3095, 0.0
        %v3117 = vmax.f32 %v3097, 0.0
        %v3118 = vmax.f32 %v3100, 0.0
        %v3119 = vmax.f32 %v3102, 0.0
        %v3120 = vpack.c.bf16 %v3105, %v3104
        %v3121 = vpack.c.bf16 %v3107, %v3106
        %v3122 = vpack.c.bf16 %v3109, %v3108
        %v3123 = vpack.c.bf16 %v3111, %v3110
        %v3124 = vpack.c.bf16 %v3113, %v3112
        %v3125 = vpack.c.bf16 %v3115, %v3114
        %v3126 = vpack.c.bf16 %v3117, %v3116
        %v3127 = vpack.c.bf16 %v3119, %v3118
        %v3128 = vld [vmem:[%s9] sm:$0xf]
        %v3129 = vld [vmem:[%s9 + $0x4] sm:$0xf]
        %v3130 = vld [vmem:[%s9 + $0x8] sm:$0xf]
        %v3131 = vld [vmem:[%s9 + $0xc] sm:$0xf]
        %v3132 = vld [vmem:[%s9 + $0x10] sm:$0xf]
        %v3133 = vld [vmem:[%s9 + $0x14] sm:$0xf]
        %v3134 = vld [vmem:[%s9 + $0x18] sm:$0xf]
        %v3135 = vld [vmem:[%s9 + $0x1c] sm:$0xf]
        %v3136 = vld [vmem:[%s9 + $0x20] sm:$0xf]
        %v3137 = vld [vmem:[%s9 + $0x24] sm:$0xf]
        %v3138 = vld [vmem:[%s9 + $0x28] sm:$0xf]
        %v3139 = vld [vmem:[%s9 + $0x2c] sm:$0xf]
        %v3140 = vld [vmem:[%s9 + $0x30] sm:$0xf]
        %v3141 = vld [vmem:[%s9 + $0x34] sm:$0xf]
        %v3142 = vld [vmem:[%s9 + $0x38] sm:$0xf]
        %v3143 = vld [vmem:[%s9 + $0x3c] sm:$0xf]
        %v3144 = vld [vmem:[%s10] sm:$0x1]
        %v3146 = vperm.slane %v3144, 0
        %v3164 = vunpack.c.l.b16 %v3128
        %v3165 = vunpack.c.l.b16 %v3129
        %v3166 = vunpack.c.l.b16 %v3130
        %v3167 = vunpack.c.l.b16 %v3131
        %v3168 = vunpack.c.l.b16 %v3132
        %v3169 = vunpack.c.l.b16 %v3133
        %v3170 = vunpack.c.l.b16 %v3134
        %v3171 = vunpack.c.l.b16 %v3135
        %v3172 = vunpack.c.l.b16 %v3136
        %v3173 = vunpack.c.l.b16 %v3137
        %v3174 = vunpack.c.l.b16 %v3138
        %v3175 = vunpack.c.l.b16 %v3139
        %v3176 = vunpack.c.l.b16 %v3140
        %v3177 = vunpack.c.l.b16 %v3141
        %v3178 = vunpack.c.l.b16 %v3142
        %v3179 = vunpack.c.l.b16 %v3143
        %v3180 = vpack.c.b16 %v3165, %v3164
        %v3181 = vpack.c.b16 %v3167, %v3166
        %v3182 = vpack.c.b16 %v3169, %v3168
        %v3183 = vpack.c.b16 %v3171, %v3170
        %v3184 = vpack.c.b16 %v3173, %v3172
        %v3185 = vpack.c.b16 %v3175, %v3174
        %v3186 = vpack.c.b16 %v3177, %v3176
        %v3187 = vpack.c.b16 %v3179, %v3178
        %3196 = vmatpush.bf16.msra.mxu0 %v3187
        %3197 = vmatpush.bf16.msra.mxu0 %v3186
        %3198 = vmatpush.bf16.msra.mxu0 %v3185
        %3199 = vmatpush.bf16.msra.mxu0 %v3184
        %3200 = vmatpush.bf16.msra.mxu0 %v3183
        %3201 = vmatpush.bf16.msra.mxu0 %v3182
        %3202 = vmatpush.bf16.msra.mxu0 %v3181
        %3203 = vmatpush.bf16.msra.mxu0 %v3180
        %3204 = vmatmul.bf16.gmra.mxu0 %v3120
        %v3205 = vpop.f32.mrf.mxu0
        %v3206 = vadd.f32 %v3146, %v3205
        %v3207 = vpop.f32.mrf.mxu0
        %v3208 = vadd.f32 %v3146, %v3207
        %3209 = vmatmul.bf16.gmra.mxu0 %v3121
        %v3210 = vpop.f32.mrf.mxu0
        %v3211 = vadd.f32 %v3146, %v3210
        %v3212 = vpop.f32.mrf.mxu0
        %v3213 = vadd.f32 %v3146, %v3212
        %3214 = vmatmul.bf16.gmra.mxu0 %v3122
        %v3215 = vpop.f32.mrf.mxu0
        %v3216 = vadd.f32 %v3146, %v3215
        %v3217 = vpop.f32.mrf.mxu0
        %v3218 = vadd.f32 %v3146, %v3217
        %3219 = vmatmul.bf16.gmra.mxu0 %v3123
        %v3220 = vpop.f32.mrf.mxu0
        %v3221 = vadd.f32 %v3146, %v3220
        %v3222 = vpop.f32.mrf.mxu0
        %v3223 = vadd.f32 %v3146, %v3222
        %3224 = vmatmul.bf16.gmra.mxu0 %v3124
        %v3225 = vpop.f32.mrf.mxu0
        %v3226 = vadd.f32 %v3146, %v3225
        %v3227 = vpop.f32.mrf.mxu0
        %v3228 = vadd.f32 %v3146, %v3227
        %3229 = vmatmul.bf16.gmra.mxu0 %v3125
        %v3230 = vpop.f32.mrf.mxu0
        %v3231 = vadd.f32 %v3146, %v3230
        %v3232 = vpop.f32.mrf.mxu0
        %v3233 = vadd.f32 %v3146, %v3232
        %3234 = vmatmul.bf16.gmra.mxu0 %v3126
        %v3235 = vpop.f32.mrf.mxu0
        %v3236 = vadd.f32 %v3146, %v3235
        %v3237 = vpop.f32.mrf.mxu0
        %v3238 = vadd.f32 %v3146, %v3237
        %3239 = vmatmul.bf16.gmra.mxu0 %v3127
        %v3240 = vpop.f32.mrf.mxu0
        %v3241 = vadd.f32 %v3146, %v3240
        %v3242 = vpop.f32.mrf.mxu0
        %v3243 = vadd.f32 %v3146, %v3242
        %3244 = vdwg.mxu0
        %v3245 = vadd.f32 %v3206, %v2987
        %v3246 = vadd.f32 %v3208, %v2988
        %v3247 = vadd.f32 %v3211, %v2989
        %v3248 = vadd.f32 %v3213, %v2990
        %v3249 = vadd.f32 %v3216, %v2991
        %v3250 = vadd.f32 %v3218, %v2992
        %v3251 = vadd.f32 %v3221, %v2993
        %v3252 = vadd.f32 %v3223, %v2994
        %v3253 = vadd.f32 %v3226, %v2995
        %v3254 = vadd.f32 %v3228, %v2996
        %v3255 = vadd.f32 %v3231, %v2997
        %v3256 = vadd.f32 %v3233, %v2998
        %v3257 = vadd.f32 %v3236, %v2999
        %v3258 = vadd.f32 %v3238, %v3000
        %v3259 = vadd.f32 %v3241, %v3001
        %v3260 = vadd.f32 %v3243, %v3002
        %v3261 = vsel %vm672, %v3245, 0.0
        %3262 = vadd.xlane.f32.xlu0 %v3261
        %v3263 = vpop.xlane.xlu0 %3262
        %v3264 = vsel %vm672, %v3246, 0.0
        %3265 = vadd.xlane.f32.xlu0 %v3264
        %v3266 = vpop.xlane.xlu0 %3265
        %v3267 = vsel %vm672, %v3247, 0.0
        %3268 = vadd.xlane.f32.xlu0 %v3267
        %v3269 = vpop.xlane.xlu0 %3268
        %v3270 = vsel %vm672, %v3248, 0.0
        %3271 = vadd.xlane.f32.xlu0 %v3270
        %v3272 = vpop.xlane.xlu0 %3271
        %v3273 = vsel %vm672, %v3249, 0.0
        %3274 = vadd.xlane.f32.xlu0 %v3273
        %v3275 = vpop.xlane.xlu0 %3274
        %v3276 = vsel %vm672, %v3250, 0.0
        %3277 = vadd.xlane.f32.xlu0 %v3276
        %v3278 = vpop.xlane.xlu0 %3277
        %v3279 = vsel %vm672, %v3251, 0.0
        %3280 = vadd.xlane.f32.xlu0 %v3279
        %v3281 = vpop.xlane.xlu0 %3280
        %v3282 = vsel %vm672, %v3252, 0.0
        %3283 = vadd.xlane.f32.xlu0 %v3282
        %v3284 = vpop.xlane.xlu0 %3283
        %v3285 = vsel %vm672, %v3253, 0.0
        %3286 = vadd.xlane.f32.xlu0 %v3285
        %v3287 = vpop.xlane.xlu0 %3286
        %v3288 = vsel %vm672, %v3254, 0.0
        %3289 = vadd.xlane.f32.xlu0 %v3288
        %v3290 = vpop.xlane.xlu0 %3289
        %v3291 = vsel %vm672, %v3255, 0.0
        %3292 = vadd.xlane.f32.xlu0 %v3291
        %v3293 = vpop.xlane.xlu0 %3292
        %v3294 = vsel %vm672, %v3256, 0.0
        %3295 = vadd.xlane.f32.xlu0 %v3294
        %v3296 = vpop.xlane.xlu0 %3295
        %v3297 = vsel %vm672, %v3257, 0.0
        %3298 = vadd.xlane.f32.xlu0 %v3297
        %v3299 = vpop.xlane.xlu0 %3298
        %v3300 = vsel %vm672, %v3258, 0.0
        %3301 = vadd.xlane.f32.xlu0 %v3300
        %v3302 = vpop.xlane.xlu0 %3301
        %v3303 = vsel %vm672, %v3259, 0.0
        %3304 = vadd.xlane.f32.xlu0 %v3303
        %v3305 = vpop.xlane.xlu0 %3304
        %v3306 = vsel %vm672, %v3260, 0.0
        %3307 = vadd.xlane.f32.xlu0 %v3306
        %v3308 = vpop.xlane.xlu0 %3307
        %v3309 = vmul.f32 %v3263, %v2658
        %v3310 = vmul.f32 %v3266, %v2658
        %v3311 = vmul.f32 %v3269, %v2658
        %v3312 = vmul.f32 %v3272, %v2658
        %v3313 = vmul.f32 %v3275, %v2658
        %v3314 = vmul.f32 %v3278, %v2658
        %v3315 = vmul.f32 %v3281, %v2658
        %v3316 = vmul.f32 %v3284, %v2658
        %v3317 = vmul.f32 %v3287, %v2658
        %v3318 = vmul.f32 %v3290, %v2658
        %v3319 = vmul.f32 %v3293, %v2658
        %v3320 = vmul.f32 %v3296, %v2658
        %v3321 = vmul.f32 %v3299, %v2658
        %v3322 = vmul.f32 %v3302, %v2658
        %v3323 = vmul.f32 %v3305, %v2658
        %v3324 = vmul.f32 %v3308, %v2658
        %v3325 = vsub.f32 %v3245, %v3309
        %v3326 = vsub.f32 %v3246, %v3310
        %v3327 = vsub.f32 %v3247, %v3311
        %v3328 = vsub.f32 %v3248, %v3312
        %v3329 = vsub.f32 %v3249, %v3313
        %v3330 = vsub.f32 %v3250, %v3314
        %v3331 = vsub.f32 %v3251, %v3315
        %v3332 = vsub.f32 %v3252, %v3316
        %v3333 = vsub.f32 %v3253, %v3317
        %v3334 = vsub.f32 %v3254, %v3318
        %v3335 = vsub.f32 %v3255, %v3319
        %v3336 = vsub.f32 %v3256, %v3320
        %v3337 = vsub.f32 %v3257, %v3321
        %v3338 = vsub.f32 %v3258, %v3322
        %v3339 = vsub.f32 %v3259, %v3323
        %v3340 = vsub.f32 %v3260, %v3324
        %v3341 = vmul.f32 %v3325, %v3325
        %v3342 = vmul.f32 %v3326, %v3326
        %v3343 = vmul.f32 %v3327, %v3327
        %v3344 = vmul.f32 %v3328, %v3328
        %v3345 = vmul.f32 %v3329, %v3329
        %v3346 = vmul.f32 %v3330, %v3330
        %v3347 = vmul.f32 %v3331, %v3331
        %v3348 = vmul.f32 %v3332, %v3332
        %v3349 = vmul.f32 %v3333, %v3333
        %v3350 = vmul.f32 %v3334, %v3334
        %v3351 = vmul.f32 %v3335, %v3335
        %v3352 = vmul.f32 %v3336, %v3336
        %v3353 = vmul.f32 %v3337, %v3337
        %v3354 = vmul.f32 %v3338, %v3338
        %v3355 = vmul.f32 %v3339, %v3339
        %v3356 = vmul.f32 %v3340, %v3340
        %v3357 = vsel %vm672, %v3341, 0.0
        %3358 = vadd.xlane.f32.xlu0 %v3357
        %v3359 = vpop.xlane.xlu0 %3358
        %v3360 = vsel %vm672, %v3342, 0.0
        %3361 = vadd.xlane.f32.xlu0 %v3360
        %v3362 = vpop.xlane.xlu0 %3361
        %v3363 = vsel %vm672, %v3343, 0.0
        %3364 = vadd.xlane.f32.xlu0 %v3363
        %v3365 = vpop.xlane.xlu0 %3364
        %v3366 = vsel %vm672, %v3344, 0.0
        %3367 = vadd.xlane.f32.xlu0 %v3366
        %v3368 = vpop.xlane.xlu0 %3367
        %v3369 = vsel %vm672, %v3345, 0.0
        %3370 = vadd.xlane.f32.xlu0 %v3369
        %v3371 = vpop.xlane.xlu0 %3370
        %v3372 = vsel %vm672, %v3346, 0.0
        %3373 = vadd.xlane.f32.xlu0 %v3372
        %v3374 = vpop.xlane.xlu0 %3373
        %v3375 = vsel %vm672, %v3347, 0.0
        %3376 = vadd.xlane.f32.xlu0 %v3375
        %v3377 = vpop.xlane.xlu0 %3376
        %v3378 = vsel %vm672, %v3348, 0.0
        %3379 = vadd.xlane.f32.xlu0 %v3378
        %v3380 = vpop.xlane.xlu0 %3379
        %v3381 = vsel %vm672, %v3349, 0.0
        %3382 = vadd.xlane.f32.xlu0 %v3381
        %v3383 = vpop.xlane.xlu0 %3382
        %v3384 = vsel %vm672, %v3350, 0.0
        %3385 = vadd.xlane.f32.xlu0 %v3384
        %v3386 = vpop.xlane.xlu0 %3385
        %v3387 = vsel %vm672, %v3351, 0.0
        %3388 = vadd.xlane.f32.xlu0 %v3387
        %v3389 = vpop.xlane.xlu0 %3388
        %v3390 = vsel %vm672, %v3352, 0.0
        %3391 = vadd.xlane.f32.xlu0 %v3390
        %v3392 = vpop.xlane.xlu0 %3391
        %v3393 = vsel %vm672, %v3353, 0.0
        %3394 = vadd.xlane.f32.xlu0 %v3393
        %v3395 = vpop.xlane.xlu0 %3394
        %v3396 = vsel %vm672, %v3354, 0.0
        %3397 = vadd.xlane.f32.xlu0 %v3396
        %v3398 = vpop.xlane.xlu0 %3397
        %v3399 = vsel %vm672, %v3355, 0.0
        %3400 = vadd.xlane.f32.xlu0 %v3399
        %v3401 = vpop.xlane.xlu0 %3400
        %v3402 = vsel %vm672, %v3356, 0.0
        %3403 = vadd.xlane.f32.xlu0 %v3402
        %v3404 = vpop.xlane.xlu0 %3403
        %v3405 = vmul.f32 %v3359, %v2658
        %v3406 = vmul.f32 %v3362, %v2658
        %v3407 = vmul.f32 %v3365, %v2658
        %v3408 = vmul.f32 %v3368, %v2658
        %v3409 = vmul.f32 %v3371, %v2658
        %v3410 = vmul.f32 %v3374, %v2658
        %v3411 = vmul.f32 %v3377, %v2658
        %v3412 = vmul.f32 %v3380, %v2658
        %v3413 = vmul.f32 %v3383, %v2658
        %v3414 = vmul.f32 %v3386, %v2658
        %v3415 = vmul.f32 %v3389, %v2658
        %v3416 = vmul.f32 %v3392, %v2658
        %v3417 = vmul.f32 %v3395, %v2658
        %v3418 = vmul.f32 %v3398, %v2658
        %v3419 = vmul.f32 %v3401, %v2658
        %v3420 = vmul.f32 %v3404, %v2658
        %v3421 = vadd.f32 %v3405, 1e-05
        %v3422 = vadd.f32 %v3406, 1e-05
        %v3423 = vadd.f32 %v3407, 1e-05
        %v3424 = vadd.f32 %v3408, 1e-05
        %v3425 = vadd.f32 %v3409, 1e-05
        %v3426 = vadd.f32 %v3410, 1e-05
        %v3427 = vadd.f32 %v3411, 1e-05
        %v3428 = vadd.f32 %v3412, 1e-05
        %v3429 = vadd.f32 %v3413, 1e-05
        %v3430 = vadd.f32 %v3414, 1e-05
        %v3431 = vadd.f32 %v3415, 1e-05
        %v3432 = vadd.f32 %v3416, 1e-05
        %v3433 = vadd.f32 %v3417, 1e-05
        %v3434 = vadd.f32 %v3418, 1e-05
        %v3435 = vadd.f32 %v3419, 1e-05
        %v3436 = vadd.f32 %v3420, 1e-05
        %v3437 = vrsqrt.pop %v3421
        %v3438 = vmul.f32 %v3437, %v3421
        %v3439 = vmul.f32 %v3438, %v3437
        %v3440 = vmul.f32 0.5, %v3439
        %v3441 = vsub.f32 1.5, %v3440
        %v3442 = vmul.f32 %v3437, %v3441
        %vm3443 = vweird.f32 %v3421
        %vm3444 = vweird.f32 %v3437
        %vm3445 = vmor %vm3443, %vm3444
        %v3446 = vsel %vm3445, %v3437, %v3442
        %v3447 = vrsqrt.pop %v3422
        %v3448 = vmul.f32 %v3447, %v3422
        %v3449 = vmul.f32 %v3448, %v3447
        %v3450 = vmul.f32 0.5, %v3449
        %v3451 = vsub.f32 1.5, %v3450
        %v3452 = vmul.f32 %v3447, %v3451
        %vm3453 = vweird.f32 %v3422
        %vm3454 = vweird.f32 %v3447
        %vm3455 = vmor %vm3453, %vm3454
        %v3456 = vsel %vm3455, %v3447, %v3452
        %v3457 = vrsqrt.pop %v3423
        %v3458 = vmul.f32 %v3457, %v3423
        %v3459 = vmul.f32 %v3458, %v3457
        %v3460 = vmul.f32 0.5, %v3459
        %v3461 = vsub.f32 1.5, %v3460
        %v3462 = vmul.f32 %v3457, %v3461
        %vm3463 = vweird.f32 %v3423
        %vm3464 = vweird.f32 %v3457
        %vm3465 = vmor %vm3463, %vm3464
        %v3466 = vsel %vm3465, %v3457, %v3462
        %v3467 = vrsqrt.pop %v3424
        %v3468 = vmul.f32 %v3467, %v3424
        %v3469 = vmul.f32 %v3468, %v3467
        %v3470 = vmul.f32 0.5, %v3469
        %v3471 = vsub.f32 1.5, %v3470
        %v3472 = vmul.f32 %v3467, %v3471
        %vm3473 = vweird.f32 %v3424
        %vm3474 = vweird.f32 %v3467
        %vm3475 = vmor %vm3473, %vm3474
        %v3476 = vsel %vm3475, %v3467, %v3472
        %v3477 = vrsqrt.pop %v3425
        %v3478 = vmul.f32 %v3477, %v3425
        %v3479 = vmul.f32 %v3478, %v3477
        %v3480 = vmul.f32 0.5, %v3479
        %v3481 = vsub.f32 1.5, %v3480
        %v3482 = vmul.f32 %v3477, %v3481
        %vm3483 = vweird.f32 %v3425
        %vm3484 = vweird.f32 %v3477
        %vm3485 = vmor %vm3483, %vm3484
        %v3486 = vsel %vm3485, %v3477, %v3482
        %v3487 = vrsqrt.pop %v3426
        %v3488 = vmul.f32 %v3487, %v3426
        %v3489 = vmul.f32 %v3488, %v3487
        %v3490 = vmul.f32 0.5, %v3489
        %v3491 = vsub.f32 1.5, %v3490
        %v3492 = vmul.f32 %v3487, %v3491
        %vm3493 = vweird.f32 %v3426
        %vm3494 = vweird.f32 %v3487
        %vm3495 = vmor %vm3493, %vm3494
        %v3496 = vsel %vm3495, %v3487, %v3492
        %v3497 = vrsqrt.pop %v3427
        %v3498 = vmul.f32 %v3497, %v3427
        %v3499 = vmul.f32 %v3498, %v3497
        %v3500 = vmul.f32 0.5, %v3499
        %v3501 = vsub.f32 1.5, %v3500
        %v3502 = vmul.f32 %v3497, %v3501
        %vm3503 = vweird.f32 %v3427
        %vm3504 = vweird.f32 %v3497
        %vm3505 = vmor %vm3503, %vm3504
        %v3506 = vsel %vm3505, %v3497, %v3502
        %v3507 = vrsqrt.pop %v3428
        %v3508 = vmul.f32 %v3507, %v3428
        %v3509 = vmul.f32 %v3508, %v3507
        %v3510 = vmul.f32 0.5, %v3509
        %v3511 = vsub.f32 1.5, %v3510
        %v3512 = vmul.f32 %v3507, %v3511
        %vm3513 = vweird.f32 %v3428
        %vm3514 = vweird.f32 %v3507
        %vm3515 = vmor %vm3513, %vm3514
        %v3516 = vsel %vm3515, %v3507, %v3512
        %v3517 = vrsqrt.pop %v3429
        %v3518 = vmul.f32 %v3517, %v3429
        %v3519 = vmul.f32 %v3518, %v3517
        %v3520 = vmul.f32 0.5, %v3519
        %v3521 = vsub.f32 1.5, %v3520
        %v3522 = vmul.f32 %v3517, %v3521
        %vm3523 = vweird.f32 %v3429
        %vm3524 = vweird.f32 %v3517
        %vm3525 = vmor %vm3523, %vm3524
        %v3526 = vsel %vm3525, %v3517, %v3522
        %v3527 = vrsqrt.pop %v3430
        %v3528 = vmul.f32 %v3527, %v3430
        %v3529 = vmul.f32 %v3528, %v3527
        %v3530 = vmul.f32 0.5, %v3529
        %v3531 = vsub.f32 1.5, %v3530
        %v3532 = vmul.f32 %v3527, %v3531
        %vm3533 = vweird.f32 %v3430
        %vm3534 = vweird.f32 %v3527
        %vm3535 = vmor %vm3533, %vm3534
        %v3536 = vsel %vm3535, %v3527, %v3532
        %v3537 = vrsqrt.pop %v3431
        %v3538 = vmul.f32 %v3537, %v3431
        %v3539 = vmul.f32 %v3538, %v3537
        %v3540 = vmul.f32 0.5, %v3539
        %v3541 = vsub.f32 1.5, %v3540
        %v3542 = vmul.f32 %v3537, %v3541
        %vm3543 = vweird.f32 %v3431
        %vm3544 = vweird.f32 %v3537
        %vm3545 = vmor %vm3543, %vm3544
        %v3546 = vsel %vm3545, %v3537, %v3542
        %v3547 = vrsqrt.pop %v3432
        %v3548 = vmul.f32 %v3547, %v3432
        %v3549 = vmul.f32 %v3548, %v3547
        %v3550 = vmul.f32 0.5, %v3549
        %v3551 = vsub.f32 1.5, %v3550
        %v3552 = vmul.f32 %v3547, %v3551
        %vm3553 = vweird.f32 %v3432
        %vm3554 = vweird.f32 %v3547
        %vm3555 = vmor %vm3553, %vm3554
        %v3556 = vsel %vm3555, %v3547, %v3552
        %v3557 = vrsqrt.pop %v3433
        %v3558 = vmul.f32 %v3557, %v3433
        %v3559 = vmul.f32 %v3558, %v3557
        %v3560 = vmul.f32 0.5, %v3559
        %v3561 = vsub.f32 1.5, %v3560
        %v3562 = vmul.f32 %v3557, %v3561
        %vm3563 = vweird.f32 %v3433
        %vm3564 = vweird.f32 %v3557
        %vm3565 = vmor %vm3563, %vm3564
        %v3566 = vsel %vm3565, %v3557, %v3562
        %v3567 = vrsqrt.pop %v3434
        %v3568 = vmul.f32 %v3567, %v3434
        %v3569 = vmul.f32 %v3568, %v3567
        %v3570 = vmul.f32 0.5, %v3569
        %v3571 = vsub.f32 1.5, %v3570
        %v3572 = vmul.f32 %v3567, %v3571
        %vm3573 = vweird.f32 %v3434
        %vm3574 = vweird.f32 %v3567
        %vm3575 = vmor %vm3573, %vm3574
        %v3576 = vsel %vm3575, %v3567, %v3572
        %v3577 = vrsqrt.pop %v3435
        %v3578 = vmul.f32 %v3577, %v3435
        %v3579 = vmul.f32 %v3578, %v3577
        %v3580 = vmul.f32 0.5, %v3579
        %v3581 = vsub.f32 1.5, %v3580
        %v3582 = vmul.f32 %v3577, %v3581
        %vm3583 = vweird.f32 %v3435
        %vm3584 = vweird.f32 %v3577
        %vm3585 = vmor %vm3583, %vm3584
        %v3586 = vsel %vm3585, %v3577, %v3582
        %v3587 = vrsqrt.pop %v3436
        %v3588 = vmul.f32 %v3587, %v3436
        %v3589 = vmul.f32 %v3588, %v3587
        %v3590 = vmul.f32 0.5, %v3589
        %v3591 = vsub.f32 1.5, %v3590
        %v3592 = vmul.f32 %v3587, %v3591
        %vm3593 = vweird.f32 %v3436
        %vm3594 = vweird.f32 %v3587
        %vm3595 = vmor %vm3593, %vm3594
        %v3596 = vsel %vm3595, %v3587, %v3592
        %v3597 = vmul.f32 %v3325, %v3446
        %v3598 = vmul.f32 %v3326, %v3456
        %v3599 = vmul.f32 %v3327, %v3466
        %v3600 = vmul.f32 %v3328, %v3476
        %v3601 = vmul.f32 %v3329, %v3486
        %v3602 = vmul.f32 %v3330, %v3496
        %v3603 = vmul.f32 %v3331, %v3506
        %v3604 = vmul.f32 %v3332, %v3516
        %v3605 = vmul.f32 %v3333, %v3526
        %v3606 = vmul.f32 %v3334, %v3536
        %v3607 = vmul.f32 %v3335, %v3546
        %v3608 = vmul.f32 %v3336, %v3556
        %v3609 = vmul.f32 %v3337, %v3566
        %v3610 = vmul.f32 %v3338, %v3576
        %v3611 = vmul.f32 %v3339, %v3586
        %v3612 = vmul.f32 %v3340, %v3596
        %v3613 = vld [vmem:[%s11] sm:$0x1]
        %v3615 = vperm.slane %v3613, 0
        %v3617 = vmul.f32 %v3597, %v3615
        %v3618 = vmul.f32 %v3598, %v3615
        %v3619 = vmul.f32 %v3599, %v3615
        %v3620 = vmul.f32 %v3600, %v3615
        %v3621 = vmul.f32 %v3601, %v3615
        %v3622 = vmul.f32 %v3602, %v3615
        %v3623 = vmul.f32 %v3603, %v3615
        %v3624 = vmul.f32 %v3604, %v3615
        %v3625 = vmul.f32 %v3605, %v3615
        %v3626 = vmul.f32 %v3606, %v3615
        %v3627 = vmul.f32 %v3607, %v3615
        %v3628 = vmul.f32 %v3608, %v3615
        %v3629 = vmul.f32 %v3609, %v3615
        %v3630 = vmul.f32 %v3610, %v3615
        %v3631 = vmul.f32 %v3611, %v3615
        %v3632 = vmul.f32 %v3612, %v3615
        %v3633 = vld [vmem:[%s12] sm:$0x1]
        %v3635 = vperm.slane %v3633, 0
        %v3637 = vadd.f32 %v3617, %v3635
        %v3638 = vadd.f32 %v3618, %v3635
        %v3639 = vadd.f32 %v3619, %v3635
        %v3640 = vadd.f32 %v3620, %v3635
        %v3641 = vadd.f32 %v3621, %v3635
        %v3642 = vadd.f32 %v3622, %v3635
        %v3643 = vadd.f32 %v3623, %v3635
        %v3644 = vadd.f32 %v3624, %v3635
        %v3645 = vadd.f32 %v3625, %v3635
        %v3646 = vadd.f32 %v3626, %v3635
        %v3647 = vadd.f32 %v3627, %v3635
        %v3648 = vadd.f32 %v3628, %v3635
        %v3649 = vadd.f32 %v3629, %v3635
        %v3650 = vadd.f32 %v3630, %v3635
        %v3651 = vadd.f32 %v3631, %v3635
        %v3652 = vadd.f32 %v3632, %v3635
        %3653 = vst.msk [vmem:[%s514] sm:$0xff] %vm672, %v3637
        %3654 = vst.msk [vmem:[%s514 + $0x8] sm:$0xff] %vm672, %v3638
        %3655 = vst.msk [vmem:[%s514 + $0x10] sm:$0xff] %vm672, %v3639
        %3656 = vst.msk [vmem:[%s514 + $0x18] sm:$0xff] %vm672, %v3640
        %3657 = vst.msk [vmem:[%s514 + $0x20] sm:$0xff] %vm672, %v3641
        %3658 = vst.msk [vmem:[%s514 + $0x28] sm:$0xff] %vm672, %v3642
        %3659 = vst.msk [vmem:[%s514 + $0x30] sm:$0xff] %vm672, %v3643
        %3660 = vst.msk [vmem:[%s514 + $0x38] sm:$0xff] %vm672, %v3644
        %3661 = vst.msk [vmem:[%s514 + $0x40] sm:$0xff] %vm672, %v3645
        %3662 = vst.msk [vmem:[%s514 + $0x48] sm:$0xff] %vm672, %v3646
        %3663 = vst.msk [vmem:[%s514 + $0x50] sm:$0xff] %vm672, %v3647
        %3664 = vst.msk [vmem:[%s514 + $0x58] sm:$0xff] %vm672, %v3648
        %3665 = vst.msk [vmem:[%s514 + $0x60] sm:$0xff] %vm672, %v3649
        %3666 = vst.msk [vmem:[%s514 + $0x68] sm:$0xff] %vm672, %v3650
        %3667 = vst.msk [vmem:[%s514 + $0x70] sm:$0xff] %vm672, %v3651
        %3668 = vst.msk [vmem:[%s514 + $0x78] sm:$0xff] %vm672, %v3652
        %p3669 = scmp.lt.s32.totalorder %s26, 1
        %s3670 = scalar_select %p3669, %s26, 1
        %s3671 = smul.addr %s3670, 16
        %s3672 = smul.addr %s3671, 8
        %s3673 = scalar_lea.vmem %s13, %s3672
        %s3674 = sand.u32 %s348, 1
        %s3675 = sand.u32 %s348, 1
        %s3676 = smul.addr %s3675, 512
        %s3677 = scalar_lea.vmem [#allocation2], %s3676
        // Predicated region
        $region73: #{speech_transformer_encoder_layer.1} parent=71 // pred_check
          %p3678 = pneg %p332
        $region74: #{speech_transformer_encoder_layer.1} parent=71 // pred_check_branch
          %3680 = sbr.rel (%p3678) target = $region76
        $region75: #{speech_transformer_encoder_layer.1} parent=71 // pred_region
          _
        $region76: #{speech_transformer_encoder_layer.1} parent=71 // pred_fallthru
          _
        // Predicated region
        $region77: #{speech_transformer_encoder_layer.1} parent=71 // pred_check
          %p3681 = pneg %p358
        $region78: #{speech_transformer_encoder_layer.1} parent=71 // pred_check_branch
          %3683 = sbr.rel (%p3681) target = $region80
        $region79: #{speech_transformer_encoder_layer.1} parent=71 // pred_region
          %s3684 = smul.addr %s26, 16
          %s3685 = smul.addr %s3684, 8
          %s3686 = scalar_lea.vmem %s14, %s3685
          // Predicated region
          $region81: #{speech_transformer_encoder_layer.1} parent=79 // pred_check
            _
          $region82: #{speech_transformer_encoder_layer.1} parent=79 // pred_check_branch
            %3688 = sbr.rel (0) target = $region84
          $region83: #{speech_transformer_encoder_layer.1} parent=79 // pred_region
            // Predicated region
            $region85: #{speech_transformer_encoder_layer.1} parent=83 // pred_check
              _
            $region86: #{speech_transformer_encoder_layer.1} parent=83 // pred_check_branch
              %3690 = sbr.rel (0) target = $region88
            $region87: #{speech_transformer_encoder_layer.1} parent=83 // pred_region
              // Predicated region
              $region100: #{speech_transformer_encoder_layer.1} parent=87 // pred_check
                _
              $region101: #{speech_transformer_encoder_layer.1} parent=87 // pred_check_branch
                %3832 = sbr.rel (0) target = $region103
              $region102: #{speech_transformer_encoder_layer.1} parent=87 // pred_region
                loop: start=0, step=1, limit=1
                $region104: #{speech_transformer_encoder_layer.1} parent=102 // loop_pre_header
                  _
                $region105: #{speech_transformer_encoder_layer.1} parent=102 // loop_header
                  %s3834 = sphi 0, %s3838
                  %p3835 = scmp.ge.s32.totalorder %s3834, 1
                  %s3839 = sphi %s3677, %s3677
                  %s3840 = sphi %s3686, %s3686
                $region106: #{speech_transformer_encoder_layer.1} parent=102 // loop_header_branch
                  %3837 = sbr.rel (%p3835) target = $region110
                $region107: #{speech_transformer_encoder_layer.1} parent=102 // loop_body
                  %v3841 = vld [vmem:[%s3839] sm:$0xff]
                  %3842 = vst [vmem:[%s3840] sm:$0xff] %v3841
                  %v3843 = vld [vmem:[%s3839 + $0x8] sm:$0xff]
                  %3844 = vst [vmem:[%s3840 + $0x8] sm:$0xff] %v3843
                  %v3845 = vld [vmem:[%s3839 + $0x10] sm:$0xff]
                  %3846 = vst [vmem:[%s3840 + $0x10] sm:$0xff] %v3845
                  %v3847 = vld [vmem:[%s3839 + $0x18] sm:$0xff]
                  %3848 = vst [vmem:[%s3840 + $0x18] sm:$0xff] %v3847
                  %v3849 = vld [vmem:[%s3839 + $0x20] sm:$0xff]
                  %3850 = vst [vmem:[%s3840 + $0x20] sm:$0xff] %v3849
                  %v3851 = vld [vmem:[%s3839 + $0x28] sm:$0xff]
                  %3852 = vst [vmem:[%s3840 + $0x28] sm:$0xff] %v3851
                  %v3853 = vld [vmem:[%s3839 + $0x30] sm:$0xff]
                  %3854 = vst [vmem:[%s3840 + $0x30] sm:$0xff] %v3853
                  %v3855 = vld [vmem:[%s3839 + $0x38] sm:$0xff]
                  %3856 = vst [vmem:[%s3840 + $0x38] sm:$0xff] %v3855
                  %v3857 = vld [vmem:[%s3839 + $0x40] sm:$0xff]
                  %3858 = vst [vmem:[%s3840 + $0x40] sm:$0xff] %v3857
                  %v3859 = vld [vmem:[%s3839 + $0x48] sm:$0xff]
                  %3860 = vst [vmem:[%s3840 + $0x48] sm:$0xff] %v3859
                  %v3861 = vld [vmem:[%s3839 + $0x50] sm:$0xff]
                  %3862 = vst [vmem:[%s3840 + $0x50] sm:$0xff] %v3861
                  %v3863 = vld [vmem:[%s3839 + $0x58] sm:$0xff]
                  %3864 = vst [vmem:[%s3840 + $0x58] sm:$0xff] %v3863
                  %v3865 = vld [vmem:[%s3839 + $0x60] sm:$0xff]
                  %3866 = vst [vmem:[%s3840 + $0x60] sm:$0xff] %v3865
                  %v3867 = vld [vmem:[%s3839 + $0x68] sm:$0xff]
                  %3868 = vst [vmem:[%s3840 + $0x68] sm:$0xff] %v3867
                  %v3869 = vld [vmem:[%s3839 + $0x70] sm:$0xff]
                  %3870 = vst [vmem:[%s3840 + $0x70] sm:$0xff] %v3869
                  %v3871 = vld [vmem:[%s3839 + $0x78] sm:$0xff]
                  %3872 = vst [vmem:[%s3840 + $0x78] sm:$0xff] %v3871
                  %v3873 = vld [vmem:[%s3839 + $0x80] sm:$0xff]
                  %3874 = vst [vmem:[%s3840 + $0x100] sm:$0xff] %v3873
                  %v3875 = vld [vmem:[%s3839 + $0x88] sm:$0xff]
                  %3876 = vst [vmem:[%s3840 + $0x108] sm:$0xff] %v3875
                  %v3877 = vld [vmem:[%s3839 + $0x90] sm:$0xff]
                  %3878 = vst [vmem:[%s3840 + $0x110] sm:$0xff] %v3877
                  %v3879 = vld [vmem:[%s3839 + $0x98] sm:$0xff]
                  %3880 = vst [vmem:[%s3840 + $0x118] sm:$0xff] %v3879
                  %v3881 = vld [vmem:[%s3839 + $0xa0] sm:$0xff]
                  %3882 = vst [vmem:[%s3840 + $0x120] sm:$0xff] %v3881
                  %v3883 = vld [vmem:[%s3839 + $0xa8] sm:$0xff]
                  %3884 = vst [vmem:[%s3840 + $0x128] sm:$0xff] %v3883
                  %v3885 = vld [vmem:[%s3839 + $0xb0] sm:$0xff]
                  %3886 = vst [vmem:[%s3840 + $0x130] sm:$0xff] %v3885
                  %v3887 = vld [vmem:[%s3839 + $0xb8] sm:$0xff]
                  %3888 = vst [vmem:[%s3840 + $0x138] sm:$0xff] %v3887
                  %v3889 = vld [vmem:[%s3839 + $0xc0] sm:$0xff]
                  %3890 = vst [vmem:[%s3840 + $0x140] sm:$0xff] %v3889
                  %v3891 = vld [vmem:[%s3839 + $0xc8] sm:$0xff]
                  %3892 = vst [vmem:[%s3840 + $0x148] sm:$0xff] %v3891
                  %v3893 = vld [vmem:[%s3839 + $0xd0] sm:$0xff]
                  %3894 = vst [vmem:[%s3840 + $0x150] sm:$0xff] %v3893
                  %v3895 = vld [vmem:[%s3839 + $0xd8] sm:$0xff]
                  %3896 = vst [vmem:[%s3840 + $0x158] sm:$0xff] %v3895
                  %v3897 = vld [vmem:[%s3839 + $0xe0] sm:$0xff]
                  %3898 = vst [vmem:[%s3840 + $0x160] sm:$0xff] %v3897
                  %v3899 = vld [vmem:[%s3839 + $0xe8] sm:$0xff]
                  %3900 = vst [vmem:[%s3840 + $0x168] sm:$0xff] %v3899
                  %v3901 = vld [vmem:[%s3839 + $0xf0] sm:$0xff]
                  %3902 = vst [vmem:[%s3840 + $0x170] sm:$0xff] %v3901
                  %v3903 = vld [vmem:[%s3839 + $0xf8] sm:$0xff]
                  %3904 = vst [vmem:[%s3840 + $0x178] sm:$0xff] %v3903
                  %v3905 = vld [vmem:[%s3839 + $0x100] sm:$0xff]
                  %3906 = vst [vmem:[%s3840 + $0x200] sm:$0xff] %v3905
                  %v3907 = vld [vmem:[%s3839 + $0x108] sm:$0xff]
                  %3908 = vst [vmem:[%s3840 + $0x208] sm:$0xff] %v3907
                  %v3909 = vld [vmem:[%s3839 + $0x110] sm:$0xff]
                  %3910 = vst [vmem:[%s3840 + $0x210] sm:$0xff] %v3909
                  %v3911 = vld [vmem:[%s3839 + $0x118] sm:$0xff]
                  %3912 = vst [vmem:[%s3840 + $0x218] sm:$0xff] %v3911
                  %v3913 = vld [vmem:[%s3839 + $0x120] sm:$0xff]
                  %3914 = vst [vmem:[%s3840 + $0x220] sm:$0xff] %v3913
                  %v3915 = vld [vmem:[%s3839 + $0x128] sm:$0xff]
                  %3916 = vst [vmem:[%s3840 + $0x228] sm:$0xff] %v3915
                  %v3917 = vld [vmem:[%s3839 + $0x130] sm:$0xff]
                  %3918 = vst [vmem:[%s3840 + $0x230] sm:$0xff] %v3917
                  %v3919 = vld [vmem:[%s3839 + $0x138] sm:$0xff]
                  %3920 = vst [vmem:[%s3840 + $0x238] sm:$0xff] %v3919
                  %v3921 = vld [vmem:[%s3839 + $0x140] sm:$0xff]
                  %3922 = vst [vmem:[%s3840 + $0x240] sm:$0xff] %v3921
                  %v3923 = vld [vmem:[%s3839 + $0x148] sm:$0xff]
                  %3924 = vst [vmem:[%s3840 + $0x248] sm:$0xff] %v3923
                  %v3925 = vld [vmem:[%s3839 + $0x150] sm:$0xff]
                  %3926 = vst [vmem:[%s3840 + $0x250] sm:$0xff] %v3925
                  %v3927 = vld [vmem:[%s3839 + $0x158] sm:$0xff]
                  %3928 = vst [vmem:[%s3840 + $0x258] sm:$0xff] %v3927
                  %v3929 = vld [vmem:[%s3839 + $0x160] sm:$0xff]
                  %3930 = vst [vmem:[%s3840 + $0x260] sm:$0xff] %v3929
                  %v3931 = vld [vmem:[%s3839 + $0x168] sm:$0xff]
                  %3932 = vst [vmem:[%s3840 + $0x268] sm:$0xff] %v3931
                  %v3933 = vld [vmem:[%s3839 + $0x170] sm:$0xff]
                  %3934 = vst [vmem:[%s3840 + $0x270] sm:$0xff] %v3933
                  %v3935 = vld [vmem:[%s3839 + $0x178] sm:$0xff]
                  %3936 = vst [vmem:[%s3840 + $0x278] sm:$0xff] %v3935
                  %v3937 = vld [vmem:[%s3839 + $0x180] sm:$0xff]
                  %3938 = vst [vmem:[%s3840 + $0x300] sm:$0xff] %v3937
                  %v3939 = vld [vmem:[%s3839 + $0x188] sm:$0xff]
                  %3940 = vst [vmem:[%s3840 + $0x308] sm:$0xff] %v3939
                  %v3941 = vld [vmem:[%s3839 + $0x190] sm:$0xff]
                  %3942 = vst [vmem:[%s3840 + $0x310] sm:$0xff] %v3941
                  %v3943 = vld [vmem:[%s3839 + $0x198] sm:$0xff]
                  %3944 = vst [vmem:[%s3840 + $0x318] sm:$0xff] %v3943
                  %v3945 = vld [vmem:[%s3839 + $0x1a0] sm:$0xff]
                  %3946 = vst [vmem:[%s3840 + $0x320] sm:$0xff] %v3945
                  %v3947 = vld [vmem:[%s3839 + $0x1a8] sm:$0xff]
                  %3948 = vst [vmem:[%s3840 + $0x328] sm:$0xff] %v3947
                  %v3949 = vld [vmem:[%s3839 + $0x1b0] sm:$0xff]
                  %3950 = vst [vmem:[%s3840 + $0x330] sm:$0xff] %v3949
                  %v3951 = vld [vmem:[%s3839 + $0x1b8] sm:$0xff]
                  %3952 = vst [vmem:[%s3840 + $0x338] sm:$0xff] %v3951
                  %v3953 = vld [vmem:[%s3839 + $0x1c0] sm:$0xff]
                  %3954 = vst [vmem:[%s3840 + $0x340] sm:$0xff] %v3953
                  %v3955 = vld [vmem:[%s3839 + $0x1c8] sm:$0xff]
                  %3956 = vst [vmem:[%s3840 + $0x348] sm:$0xff] %v3955
                  %v3957 = vld [vmem:[%s3839 + $0x1d0] sm:$0xff]
                  %3958 = vst [vmem:[%s3840 + $0x350] sm:$0xff] %v3957
                  %v3959 = vld [vmem:[%s3839 + $0x1d8] sm:$0xff]
                  %3960 = vst [vmem:[%s3840 + $0x358] sm:$0xff] %v3959
                  %v3961 = vld [vmem:[%s3839 + $0x1e0] sm:$0xff]
                  %3962 = vst [vmem:[%s3840 + $0x360] sm:$0xff] %v3961
                  %v3963 = vld [vmem:[%s3839 + $0x1e8] sm:$0xff]
                  %3964 = vst [vmem:[%s3840 + $0x368] sm:$0xff] %v3963
                  %v3965 = vld [vmem:[%s3839 + $0x1f0] sm:$0xff]
                  %3966 = vst [vmem:[%s3840 + $0x370] sm:$0xff] %v3965
                  %v3967 = vld [vmem:[%s3839 + $0x1f8] sm:$0xff]
                  %3968 = vst [vmem:[%s3840 + $0x378] sm:$0xff] %v3967
                $region108: #{speech_transformer_encoder_layer.1} parent=102 // loop_footer
                  %s3838 = sadd.s32 1, %s3834
                $region109: #{speech_transformer_encoder_layer.1} parent=102 // loop_footer_branch
                  %3833 = sbr.rel target = $region105
                $region110: #{speech_transformer_encoder_layer.1} parent=102 // loop_exit
                  _
              $region103: #{speech_transformer_encoder_layer.1} parent=87 // pred_fallthru
                _
              // Predicated region
              $region111: #{speech_transformer_encoder_layer.1} parent=87 // pred_check
                _
              $region112: #{speech_transformer_encoder_layer.1} parent=87 // pred_check_branch
                %3970 = sbr.rel target = $region114
              $region113: #{speech_transformer_encoder_layer.1} parent=87 // pred_region
                _
              $region114: #{speech_transformer_encoder_layer.1} parent=87 // pred_fallthru
                _
            $region88: #{speech_transformer_encoder_layer.1} parent=83 // pred_fallthru
              _
            // Predicated region
            $region89: #{speech_transformer_encoder_layer.1} parent=83 // pred_check
              _
            $region90: #{speech_transformer_encoder_layer.1} parent=83 // pred_check_branch
              %3692 = sbr.rel target = $region92
            $region91: #{speech_transformer_encoder_layer.1} parent=83 // pred_region
              %s3694 = ssub.s32 256, 1
              loop: start=0, step=1, limit=1
              $region93: #{speech_transformer_encoder_layer.1} parent=91 // loop_pre_header
                _
              $region94: #{speech_transformer_encoder_layer.1} parent=91 // loop_header
                %s3696 = sphi 0, %s3700
                %p3697 = scmp.ge.s32.totalorder %s3696, 1
                %s3701 = sphi %s3677, %s3677
                %s3702 = sphi %s3686, %s3686
              $region95: #{speech_transformer_encoder_layer.1} parent=91 // loop_header_branch
                %3699 = sbr.rel (%p3697) target = $region99
              $region96: #{speech_transformer_encoder_layer.1} parent=91 // loop_body
                %v3703 = vld [vmem:[%s3701] sm:%s3694]
                %3704 = vst [vmem:[%s3702] sm:%s3694] %v3703
                %v3705 = vld [vmem:[%s3701 + $0x8] sm:%s3694]
                %3706 = vst [vmem:[%s3702 + $0x8] sm:%s3694] %v3705
                %v3707 = vld [vmem:[%s3701 + $0x10] sm:%s3694]
                %3708 = vst [vmem:[%s3702 + $0x10] sm:%s3694] %v3707
                %v3709 = vld [vmem:[%s3701 + $0x18] sm:%s3694]
                %3710 = vst [vmem:[%s3702 + $0x18] sm:%s3694] %v3709
                %v3711 = vld [vmem:[%s3701 + $0x20] sm:%s3694]
                %3712 = vst [vmem:[%s3702 + $0x20] sm:%s3694] %v3711
                %v3713 = vld [vmem:[%s3701 + $0x28] sm:%s3694]
                %3714 = vst [vmem:[%s3702 + $0x28] sm:%s3694] %v3713
                %v3715 = vld [vmem:[%s3701 + $0x30] sm:%s3694]
                %3716 = vst [vmem:[%s3702 + $0x30] sm:%s3694] %v3715
                %v3717 = vld [vmem:[%s3701 + $0x38] sm:%s3694]
                %3718 = vst [vmem:[%s3702 + $0x38] sm:%s3694] %v3717
                %v3719 = vld [vmem:[%s3701 + $0x40] sm:%s3694]
                %3720 = vst [vmem:[%s3702 + $0x40] sm:%s3694] %v3719
                %v3721 = vld [vmem:[%s3701 + $0x48] sm:%s3694]
                %3722 = vst [vmem:[%s3702 + $0x48] sm:%s3694] %v3721
                %v3723 = vld [vmem:[%s3701 + $0x50] sm:%s3694]
                %3724 = vst [vmem:[%s3702 + $0x50] sm:%s3694] %v3723
                %v3725 = vld [vmem:[%s3701 + $0x58] sm:%s3694]
                %3726 = vst [vmem:[%s3702 + $0x58] sm:%s3694] %v3725
                %v3727 = vld [vmem:[%s3701 + $0x60] sm:%s3694]
                %3728 = vst [vmem:[%s3702 + $0x60] sm:%s3694] %v3727
                %v3729 = vld [vmem:[%s3701 + $0x68] sm:%s3694]
                %3730 = vst [vmem:[%s3702 + $0x68] sm:%s3694] %v3729
                %v3731 = vld [vmem:[%s3701 + $0x70] sm:%s3694]
                %3732 = vst [vmem:[%s3702 + $0x70] sm:%s3694] %v3731
                %v3733 = vld [vmem:[%s3701 + $0x78] sm:%s3694]
                %3734 = vst [vmem:[%s3702 + $0x78] sm:%s3694] %v3733
                %v3735 = vld [vmem:[%s3701 + $0x80] sm:%s3694]
                %3736 = vst [vmem:[%s3702 + $0x100] sm:%s3694] %v3735
                %v3737 = vld [vmem:[%s3701 + $0x88] sm:%s3694]
                %3738 = vst [vmem:[%s3702 + $0x108] sm:%s3694] %v3737
                %v3739 = vld [vmem:[%s3701 + $0x90] sm:%s3694]
                %3740 = vst [vmem:[%s3702 + $0x110] sm:%s3694] %v3739
                %v3741 = vld [vmem:[%s3701 + $0x98] sm:%s3694]
                %3742 = vst [vmem:[%s3702 + $0x118] sm:%s3694] %v3741
                %v3743 = vld [vmem:[%s3701 + $0xa0] sm:%s3694]
                %3744 = vst [vmem:[%s3702 + $0x120] sm:%s3694] %v3743
                %v3745 = vld [vmem:[%s3701 + $0xa8] sm:%s3694]
                %3746 = vst [vmem:[%s3702 + $0x128] sm:%s3694] %v3745
                %v3747 = vld [vmem:[%s3701 + $0xb0] sm:%s3694]
                %3748 = vst [vmem:[%s3702 + $0x130] sm:%s3694] %v3747
                %v3749 = vld [vmem:[%s3701 + $0xb8] sm:%s3694]
                %3750 = vst [vmem:[%s3702 + $0x138] sm:%s3694] %v3749
                %v3751 = vld [vmem:[%s3701 + $0xc0] sm:%s3694]
                %3752 = vst [vmem:[%s3702 + $0x140] sm:%s3694] %v3751
                %v3753 = vld [vmem:[%s3701 + $0xc8] sm:%s3694]
                %3754 = vst [vmem:[%s3702 + $0x148] sm:%s3694] %v3753
                %v3755 = vld [vmem:[%s3701 + $0xd0] sm:%s3694]
                %3756 = vst [vmem:[%s3702 + $0x150] sm:%s3694] %v3755
                %v3757 = vld [vmem:[%s3701 + $0xd8] sm:%s3694]
                %3758 = vst [vmem:[%s3702 + $0x158] sm:%s3694] %v3757
                %v3759 = vld [vmem:[%s3701 + $0xe0] sm:%s3694]
                %3760 = vst [vmem:[%s3702 + $0x160] sm:%s3694] %v3759
                %v3761 = vld [vmem:[%s3701 + $0xe8] sm:%s3694]
                %3762 = vst [vmem:[%s3702 + $0x168] sm:%s3694] %v3761
                %v3763 = vld [vmem:[%s3701 + $0xf0] sm:%s3694]
                %3764 = vst [vmem:[%s3702 + $0x170] sm:%s3694] %v3763
                %v3765 = vld [vmem:[%s3701 + $0xf8] sm:%s3694]
                %3766 = vst [vmem:[%s3702 + $0x178] sm:%s3694] %v3765
                %v3767 = vld [vmem:[%s3701 + $0x100] sm:%s3694]
                %3768 = vst [vmem:[%s3702 + $0x200] sm:%s3694] %v3767
                %v3769 = vld [vmem:[%s3701 + $0x108] sm:%s3694]
                %3770 = vst [vmem:[%s3702 + $0x208] sm:%s3694] %v3769
                %v3771 = vld [vmem:[%s3701 + $0x110] sm:%s3694]
                %3772 = vst [vmem:[%s3702 + $0x210] sm:%s3694] %v3771
                %v3773 = vld [vmem:[%s3701 + $0x118] sm:%s3694]
                %3774 = vst [vmem:[%s3702 + $0x218] sm:%s3694] %v3773
                %v3775 = vld [vmem:[%s3701 + $0x120] sm:%s3694]
                %3776 = vst [vmem:[%s3702 + $0x220] sm:%s3694] %v3775
                %v3777 = vld [vmem:[%s3701 + $0x128] sm:%s3694]
                %3778 = vst [vmem:[%s3702 + $0x228] sm:%s3694] %v3777
                %v3779 = vld [vmem:[%s3701 + $0x130] sm:%s3694]
                %3780 = vst [vmem:[%s3702 + $0x230] sm:%s3694] %v3779
                %v3781 = vld [vmem:[%s3701 + $0x138] sm:%s3694]
                %3782 = vst [vmem:[%s3702 + $0x238] sm:%s3694] %v3781
                %v3783 = vld [vmem:[%s3701 + $0x140] sm:%s3694]
                %3784 = vst [vmem:[%s3702 + $0x240] sm:%s3694] %v3783
                %v3785 = vld [vmem:[%s3701 + $0x148] sm:%s3694]
                %3786 = vst [vmem:[%s3702 + $0x248] sm:%s3694] %v3785
                %v3787 = vld [vmem:[%s3701 + $0x150] sm:%s3694]
                %3788 = vst [vmem:[%s3702 + $0x250] sm:%s3694] %v3787
                %v3789 = vld [vmem:[%s3701 + $0x158] sm:%s3694]
                %3790 = vst [vmem:[%s3702 + $0x258] sm:%s3694] %v3789
                %v3791 = vld [vmem:[%s3701 + $0x160] sm:%s3694]
                %3792 = vst [vmem:[%s3702 + $0x260] sm:%s3694] %v3791
                %v3793 = vld [vmem:[%s3701 + $0x168] sm:%s3694]
                %3794 = vst [vmem:[%s3702 + $0x268] sm:%s3694] %v3793
                %v3795 = vld [vmem:[%s3701 + $0x170] sm:%s3694]
                %3796 = vst [vmem:[%s3702 + $0x270] sm:%s3694] %v3795
                %v3797 = vld [vmem:[%s3701 + $0x178] sm:%s3694]
                %3798 = vst [vmem:[%s3702 + $0x278] sm:%s3694] %v3797
                %v3799 = vld [vmem:[%s3701 + $0x180] sm:%s3694]
                %3800 = vst [vmem:[%s3702 + $0x300] sm:%s3694] %v3799
                %v3801 = vld [vmem:[%s3701 + $0x188] sm:%s3694]
                %3802 = vst [vmem:[%s3702 + $0x308] sm:%s3694] %v3801
                %v3803 = vld [vmem:[%s3701 + $0x190] sm:%s3694]
                %3804 = vst [vmem:[%s3702 + $0x310] sm:%s3694] %v3803
                %v3805 = vld [vmem:[%s3701 + $0x198] sm:%s3694]
                %3806 = vst [vmem:[%s3702 + $0x318] sm:%s3694] %v3805
                %v3807 = vld [vmem:[%s3701 + $0x1a0] sm:%s3694]
                %3808 = vst [vmem:[%s3702 + $0x320] sm:%s3694] %v3807
                %v3809 = vld [vmem:[%s3701 + $0x1a8] sm:%s3694]
                %3810 = vst [vmem:[%s3702 + $0x328] sm:%s3694] %v3809
                %v3811 = vld [vmem:[%s3701 + $0x1b0] sm:%s3694]
                %3812 = vst [vmem:[%s3702 + $0x330] sm:%s3694] %v3811
                %v3813 = vld [vmem:[%s3701 + $0x1b8] sm:%s3694]
                %3814 = vst [vmem:[%s3702 + $0x338] sm:%s3694] %v3813
                %v3815 = vld [vmem:[%s3701 + $0x1c0] sm:%s3694]
                %3816 = vst [vmem:[%s3702 + $0x340] sm:%s3694] %v3815
                %v3817 = vld [vmem:[%s3701 + $0x1c8] sm:%s3694]
                %3818 = vst [vmem:[%s3702 + $0x348] sm:%s3694] %v3817
                %v3819 = vld [vmem:[%s3701 + $0x1d0] sm:%s3694]
                %3820 = vst [vmem:[%s3702 + $0x350] sm:%s3694] %v3819
                %v3821 = vld [vmem:[%s3701 + $0x1d8] sm:%s3694]
                %3822 = vst [vmem:[%s3702 + $0x358] sm:%s3694] %v3821
                %v3823 = vld [vmem:[%s3701 + $0x1e0] sm:%s3694]
                %3824 = vst [vmem:[%s3702 + $0x360] sm:%s3694] %v3823
                %v3825 = vld [vmem:[%s3701 + $0x1e8] sm:%s3694]
                %3826 = vst [vmem:[%s3702 + $0x368] sm:%s3694] %v3825
                %v3827 = vld [vmem:[%s3701 + $0x1f0] sm:%s3694]
                %3828 = vst [vmem:[%s3702 + $0x370] sm:%s3694] %v3827
                %v3829 = vld [vmem:[%s3701 + $0x1f8] sm:%s3694]
                %3830 = vst [vmem:[%s3702 + $0x378] sm:%s3694] %v3829
              $region97: #{speech_transformer_encoder_layer.1} parent=91 // loop_footer
                %s3700 = sadd.s32 1, %s3696
              $region98: #{speech_transformer_encoder_layer.1} parent=91 // loop_footer_branch
                %3695 = sbr.rel target = $region94
              $region99: #{speech_transformer_encoder_layer.1} parent=91 // loop_exit
                _
            $region92: #{speech_transformer_encoder_layer.1} parent=83 // pred_fallthru
              _
          $region84: #{speech_transformer_encoder_layer.1} parent=79 // pred_fallthru
            _
          %3971 = vnop
        $region80: #{speech_transformer_encoder_layer.1} parent=71 // pred_fallthru
          _
      $region72: #{speech_transformer_encoder_layer.1} parent=5 // pred_fallthru
        _
      %p3972 = scmp.le.s32.totalorder 2, %s21
      // Predicated region
      $region115: #{speech_transformer_encoder_layer.1} parent=5 // pred_check
        %p3973 = pneg %p3972
      $region116: #{speech_transformer_encoder_layer.1} parent=5 // pred_check_branch
        %3975 = sbr.rel (%p3973) target = $region118
      $region117: #{speech_transformer_encoder_layer.1} parent=5 // pred_region
        %s3976 = ssub.s32 %s21, 2
        // Predicated region
        $region119: #{speech_transformer_encoder_layer.1} parent=117 // pred_check
          %p3977 = pneg %p338
        $region120: #{speech_transformer_encoder_layer.1} parent=117 // pred_check_branch
          %3979 = sbr.rel (%p3977) target = $region122
        $region121: #{speech_transformer_encoder_layer.1} parent=117 // pred_region
          %p3980 = scmp.lt.s32.totalorder %s27, 1
          %s3981 = scalar_select %p3980, %s27, 1
          %s3982 = smul.addr %s3981, 16
          %s3983 = smul.addr %s3982, 8
          %s3984 = scalar_lea.vmem %s13, %s3983
        $region122: #{speech_transformer_encoder_layer.1} parent=117 // pred_fallthru
          _
        // Predicated region
        $region123: #{speech_transformer_encoder_layer.1} parent=117 // pred_check
          %p3985 = pneg %p364
        $region124: #{speech_transformer_encoder_layer.1} parent=117 // pred_check_branch
          %3987 = sbr.rel (%p3985) target = $region126
        $region125: #{speech_transformer_encoder_layer.1} parent=117 // pred_region
          %s3988 = sand.u32 %s349, 1
          %s3989 = sand.u32 %s349, 1
          %s3990 = smul.addr %s3989, 512
          %s3991 = scalar_lea.vmem [#allocation2], %s3990
        $region126: #{speech_transformer_encoder_layer.1} parent=117 // pred_fallthru
          _
      $region118: #{speech_transformer_encoder_layer.1} parent=5 // pred_fallthru
        _
    $region6: #{speech_transformer_encoder_layer.1} parent=1 // loop_footer
      %s25 = sadd.s32 1, %s21
    $region7: #{speech_transformer_encoder_layer.1} parent=1 // loop_footer_branch
      %20 = sbr.rel target = $region3
    $region8: #{speech_transformer_encoder_layer.1} parent=1 // loop_exit
      _

</llo_original>
